<compile_context>
chip_gen: v6e
topology: v6e:2x2x1
jax: 0.10.0
libtpu: 0.0.40
codegen_flags: <defaults>
</compile_context>

<pallas_src>
import math
from functools import partial

import jax
import jax.numpy as jnp
from jax.experimental import pallas as pl
from jax.experimental.pallas import tpu as pltpu


# ---------------------- fully fused decoder-LM kernel -----------------------

def _decoder_lm_kernel(x0_ref, tgt_ref, wv_ref, bv_ref,
                       wqkv_ref, bqkv_ref, wo_ref, bo_ref,
                       g1_ref, be1_ref, w1_ref, b1_ref,
                       w2_ref, b2_ref, g2_ref, be2_ref,
                       loss_ref, x_scr, attn_scr,
                       *, B, S, n_h, d_k, eps):
    """One grid step == one decoder layer; last step also does LM-head + CE."""
    l = pl.program_id(0)
    D = n_h * d_k
    scale = 1.0 / math.sqrt(d_k)

    # Load the embedded input into the persistent activation scratch.
    @pl.when(l == 0)
    def _():
        x_scr[...] = x0_ref[...]

    x = x_scr[...]                               # (M, h_s) f32 residual stream
    xb = x.astype(jnp.bfloat16)

    # ---- fused QKV projection (one matmul, N = 3*D) -------------------------
    qkv = jnp.dot(xb, wqkv_ref[...], preferred_element_type=jnp.float32)
    qkv = qkv + bqkv_ref[...]                    # (M, 3D) f32
    qkv_b = qkv.astype(jnp.bfloat16)

    # causal mask, shared by every (batch, head)
    row = jax.lax.broadcasted_iota(jnp.int32, (S, S), 0)
    col = jax.lax.broadcasted_iota(jnp.int32, (S, S), 1)
    causal = col <= row

    # ---- causal MHA fused with the wo projection ----------------------------
    # attention output never materialized: each head contributes
    # (S, d_k) @ wo[h*d_k:(h+1)*d_k, :] directly into the (S, h_s) accumulator.
    for b in range(B):
        r0 = b * S
        acc_b = None
        for h in range(n_h):
            c = h * d_k
            qh = qkv_b[r0:r0 + S, c:c + d_k]                     # (S, d_k) bf16
            kh = qkv_b[r0:r0 + S, D + c:D + c + d_k]
            vh = qkv_b[r0:r0 + S, 2 * D + c:2 * D + c + d_k]
            # q @ k^T without an explicit transpose
            s = jax.lax.dot_general(
                qh, kh, (((1,), (1,)), ((), ())),
                preferred_element_type=jnp.float32) * scale      # (S, S) f32
            s = jnp.where(causal, s, -1e30)
            m = jnp.max(s, axis=-1, keepdims=True)
            p = jnp.exp(s - m)
            p = p / jnp.sum(p, axis=-1, keepdims=True)
            o = jnp.dot(p.astype(jnp.bfloat16), vh,
                        preferred_element_type=jnp.float32)      # (S, d_k) f32
            contrib = jnp.dot(o.astype(jnp.bfloat16),
                              wo_ref[c:c + d_k, :],
                              preferred_element_type=jnp.float32)  # (S, h_s)
            acc_b = contrib if acc_b is None else acc_b + contrib
        attn_scr[r0:r0 + S, :] = acc_b
    attn_proj = attn_scr[...]                                    # (M, h_s) f32

    # ---- residual + LayerNorm 1 ---------------------------------------------
    y = attn_proj + bo_ref[...] + x
    mu = jnp.mean(y, axis=-1, keepdims=True)
    var = jnp.mean((y - mu) * (y - mu), axis=-1, keepdims=True)
    x1 = (y - mu) * jax.lax.rsqrt(var + eps) * g1_ref[...] + be1_ref[...]

    # ---- FFN + residual + LayerNorm 2 ---------------------------------------
    h1 = jnp.dot(x1.astype(jnp.bfloat16), w1_ref[...],
                 preferred_element_type=jnp.float32) + b1_ref[...]
    h1 = jnp.maximum(h1, 0.0)
    y2 = jnp.dot(h1.astype(jnp.bfloat16), w2_ref[...],
                 preferred_element_type=jnp.float32) + b2_ref[...] + x1
    mu2 = jnp.mean(y2, axis=-1, keepdims=True)
    var2 = jnp.mean((y2 - mu2) * (y2 - mu2), axis=-1, keepdims=True)
    x_out = (y2 - mu2) * jax.lax.rsqrt(var2 + eps) * g2_ref[...] + be2_ref[...]

    x_scr[...] = x_out

    # ---- last layer: vocab projection + CrossEntropyLoss(ignore_index=0) ----
    @pl.when(l == pl.num_programs(0) - 1)
    def _():
        z = jnp.dot(x_out.astype(jnp.bfloat16), wv_ref[...],
                    preferred_element_type=jnp.float32) + bv_ref[...]   # (M, V)
        mz = jnp.max(z, axis=-1, keepdims=True)
        lse = mz + jnp.log(jnp.sum(jnp.exp(z - mz), axis=-1, keepdims=True))
        tgt = tgt_ref[...]                                              # (M, 1)
        vcol = jax.lax.broadcasted_iota(jnp.int32, z.shape, 1)
        tgt_logit = jnp.sum(jnp.where(vcol == tgt, z, 0.0),
                            axis=-1, keepdims=True)                     # (M, 1)
        valid = (tgt != 0).astype(jnp.float32)                          # (M, 1)
        nll = (lse - tgt_logit) * valid
        # mean over non-ignored rows (NaN if all targets == ignore_index,
        # matching torch's degenerate behaviour).
        loss_ref[...] = (jnp.sum(nll, axis=0, keepdims=True)
                         / jnp.sum(valid, axis=0, keepdims=True))


# --------------------------- parameters & forward ---------------------------

def init_params(key, vocab, h_s, n_h, d_k, n_l, max_len):
    D = n_h * d_k  # = 2 * h_s, matching int(2 * h_s / n_h) per head
    keys = jax.random.split(key, 3)

    def rnd(k, shape):
        return 0.02 * jax.random.normal(k, shape, jnp.float32)

    params = {}
    params["tok_emb"] = rnd(keys[0], (vocab, h_s))

    # sinusoidal positional encoding (deterministic)
    pos = jnp.arange(max_len, dtype=jnp.float32)[:, None]
    idx = jnp.arange(0, h_s, 2, dtype=jnp.float32)
    div = jnp.exp(-math.log(10000.0) * idx / h_s)
    pe = jnp.zeros((max_len, h_s), jnp.float32)
    pe = pe.at[:, 0::2].set(jnp.sin(pos * div))
    pe = pe.at[:, 1::2].set(jnp.cos(pos * div))
    params["pos_emb"] = pe

    lk = jax.random.split(keys[1], 4)
    # stacked per-layer weights; MXU operands pre-cast to bf16 once at init
    params["w_qkv"] = rnd(lk[0], (n_l, h_s, 3 * D)).astype(jnp.bfloat16)
    params["b_qkv"] = jnp.zeros((n_l, 1, 3 * D), jnp.float32)
    params["wo"] = rnd(lk[1], (n_l, D, h_s)).astype(jnp.bfloat16)
    params["bo"] = jnp.zeros((n_l, 1, h_s), jnp.float32)
    params["ln1_g"] = jnp.ones((n_l, 1, h_s), jnp.float32)
    params["ln1_b"] = jnp.zeros((n_l, 1, h_s), jnp.float32)
    params["w1"] = rnd(lk[2], (n_l, h_s, 4 * h_s)).astype(jnp.bfloat16)
    params["b1"] = jnp.zeros((n_l, 1, 4 * h_s), jnp.float32)
    params["w2"] = rnd(lk[3], (n_l, 4 * h_s, h_s)).astype(jnp.bfloat16)
    params["b2"] = jnp.zeros((n_l, 1, h_s), jnp.float32)
    params["ln2_g"] = jnp.ones((n_l, 1, h_s), jnp.float32)
    params["ln2_b"] = jnp.zeros((n_l, 1, h_s), jnp.float32)

    params["w_vocab"] = rnd(keys[2], (h_s, vocab)).astype(jnp.bfloat16)
    params["b_vocab"] = jnp.zeros((1, vocab), jnp.float32)
    return params


def model_forward(params, input_ids, target_ids, *, n_h, d_k, n_l):
    B, S = input_ids.shape
    h_s = params["tok_emb"].shape[1]
    V = params["w_vocab"].shape[1]
    D = n_h * d_k
    M = B * S

    # embedding gather + positional add (tiny glue, not hot path)
    x0 = (params["tok_emb"][input_ids] * math.sqrt(h_s)
          + params["pos_emb"][:S][None, :, :]).reshape(M, h_s).astype(jnp.float32)
    tgt = target_ids.reshape(M, 1).astype(jnp.int32)

    kernel = partial(_decoder_lm_kernel, B=B, S=S, n_h=n_h, d_k=d_k, eps=1e-5)

    loss = pl.pallas_call(
        kernel,
        out_shape=jax.ShapeDtypeStruct((1, 1), jnp.float32),
        grid=(n_l,),
        in_specs=[
            pl.BlockSpec((M, h_s), lambda l: (0, 0)),                 # x0
            pl.BlockSpec((M, 1), lambda l: (0, 0)),                   # targets
            pl.BlockSpec((h_s, V), lambda l: (0, 0)),                 # w_vocab
            pl.BlockSpec((1, V), lambda l: (0, 0)),                   # b_vocab
            pl.BlockSpec((None, h_s, 3 * D), lambda l: (l, 0, 0)),    # w_qkv
            pl.BlockSpec((None, 1, 3 * D), lambda l: (l, 0, 0)),      # b_qkv
            pl.BlockSpec((None, D, h_s), lambda l: (l, 0, 0)),        # wo
            pl.BlockSpec((None, 1, h_s), lambda l: (l, 0, 0)),        # bo
            pl.BlockSpec((None, 1, h_s), lambda l: (l, 0, 0)),        # ln1_g
            pl.BlockSpec((None, 1, h_s), lambda l: (l, 0, 0)),        # ln1_b
            pl.BlockSpec((None, h_s, 4 * h_s), lambda l: (l, 0, 0)),  # w1
            pl.BlockSpec((None, 1, 4 * h_s), lambda l: (l, 0, 0)),    # b1
            pl.BlockSpec((None, 4 * h_s, h_s), lambda l: (l, 0, 0)),  # w2
            pl.BlockSpec((None, 1, h_s), lambda l: (l, 0, 0)),        # b2
            pl.BlockSpec((None, 1, h_s), lambda l: (l, 0, 0)),        # ln2_g
            pl.BlockSpec((None, 1, h_s), lambda l: (l, 0, 0)),        # ln2_b
        ],
        out_specs=pl.BlockSpec((1, 1), lambda l: (0, 0)),
        scratch_shapes=[pltpu.VMEM((M, h_s), jnp.float32),   # residual stream
                        pltpu.VMEM((M, h_s), jnp.float32)],  # attn@wo staging
        compiler_params=pltpu.CompilerParams(
            dimension_semantics=("arbitrary",)),
    )(x0, tgt, params["w_vocab"], params["b_vocab"],
      params["w_qkv"], params["b_qkv"], params["wo"], params["bo"],
      params["ln1_g"], params["ln1_b"], params["w1"], params["b1"],
      params["w2"], params["b2"], params["ln2_g"], params["ln2_b"])

    return loss[0, 0]


# ---------------------------------- main ------------------------------------

if __name__ == "__main__":
    V, H, N_H, N_L = 64, 32, 8, 6
    D_K = int(2 * H / N_H)      # = 8, matches int(2 * h_s / n_h) in the module
    B, S, MAX_LEN = 2, 8, 16

    key = jax.random.PRNGKey(0)
    pkey, ikey, tkey = jax.random.split(key, 3)
    params = init_params(pkey, V, H, N_H, D_K, N_L, MAX_LEN)
    input_ids = jax.random.randint(ikey, (B, S), 0, V, dtype=jnp.int32)
    target_ids = jax.random.randint(tkey, (B, S), 0, V, dtype=jnp.int32)

    loss_fn = jax.jit(partial(model_forward, n_h=N_H, d_k=D_K, n_l=N_L))
    loss = loss_fn(params, input_ids, target_ids)
    jax.block_until_ready(loss)
    assert loss.shape == () and bool(jnp.isfinite(loss))
    print("KERNEL_OK")
</pallas_src>

<mosaic_0001>
module attributes {stable_mosaic.version = 11 : i64} {
  func.func @_decoder_lm_kernel(%arg0: i32, %arg1: memref<16x32xf32, #tpu.memory_space<vmem>>, %arg2: memref<16x1xi32, #tpu.memory_space<vmem>>, %arg3: memref<32x64xbf16, #tpu.memory_space<vmem>>, %arg4: memref<1x64xf32, #tpu.memory_space<vmem>>, %arg5: memref<1x32x192xbf16, #tpu.memory_space<vmem>>, %arg6: memref<1x1x192xf32, #tpu.memory_space<vmem>>, %arg7: memref<1x64x32xbf16, #tpu.memory_space<vmem>>, %arg8: memref<1x1x32xf32, #tpu.memory_space<vmem>>, %arg9: memref<1x1x32xf32, #tpu.memory_space<vmem>>, %arg10: memref<1x1x32xf32, #tpu.memory_space<vmem>>, %arg11: memref<1x32x128xbf16, #tpu.memory_space<vmem>>, %arg12: memref<1x1x128xf32, #tpu.memory_space<vmem>>, %arg13: memref<1x128x32xbf16, #tpu.memory_space<vmem>>, %arg14: memref<1x1x32xf32, #tpu.memory_space<vmem>>, %arg15: memref<1x1x32xf32, #tpu.memory_space<vmem>>, %arg16: memref<1x1x32xf32, #tpu.memory_space<vmem>>, %arg17: memref<1x1xf32, #tpu.memory_space<vmem>>, %arg18: memref<16x32xf32, #tpu.memory_space<vmem>>, %arg19: memref<16x32xf32, #tpu.memory_space<vmem>>) attributes {dimension_semantics = [#tpu.dimension_semantics<arbitrary>], iteration_bounds = array<i64: 6>, scalar_prefetch = 0 : i64, scratch_operands = 2 : i64, tpu.core_type = #tpu.core_type<tc>, window_params = [{pipeline_mode = #tpu.pipeline_mode<synchronous>, transform_indices = @transform_0, window_bounds = array<i64: 16, 32>}, {pipeline_mode = #tpu.pipeline_mode<synchronous>, transform_indices = @transform_1, window_bounds = array<i64: 16, 1>}, {pipeline_mode = #tpu.pipeline_mode<synchronous>, transform_indices = @transform_2, window_bounds = array<i64: 32, 64>}, {pipeline_mode = #tpu.pipeline_mode<synchronous>, transform_indices = @transform_3, window_bounds = array<i64: 1, 64>}, {transform_indices = @transform_4, window_bounds = array<i64: 1, 32, 192>}, {transform_indices = @transform_5, window_bounds = array<i64: 1, 1, 192>}, {transform_indices = @transform_6, window_bounds = array<i64: 1, 64, 32>}, {transform_indices = @transform_7, window_bounds = array<i64: 1, 1, 32>}, {transform_indices = @transform_8, window_bounds = array<i64: 1, 1, 32>}, {transform_indices = @transform_9, window_bounds = array<i64: 1, 1, 32>}, {transform_indices = @transform_10, window_bounds = array<i64: 1, 32, 128>}, {transform_indices = @transform_11, window_bounds = array<i64: 1, 1, 128>}, {transform_indices = @transform_12, window_bounds = array<i64: 1, 128, 32>}, {transform_indices = @transform_13, window_bounds = array<i64: 1, 1, 32>}, {transform_indices = @transform_14, window_bounds = array<i64: 1, 1, 32>}, {transform_indices = @transform_15, window_bounds = array<i64: 1, 1, 32>}, {pipeline_mode = #tpu.pipeline_mode<synchronous>, transform_indices = @transform_16, window_bounds = array<i64: 1, 1>}]} {
    %c0_i32 = arith.constant 0 : i32
    %0 = arith.cmpi eq, %arg0, %c0_i32 : i32
    %1 = arith.extui %0 : i1 to i32
    %c0_i32_0 = arith.constant 0 : i32
    %2 = arith.cmpi ne, %1, %c0_i32_0 : i32
    scf.if %2 {
      %c0_210 = arith.constant 0 : index
      %c0_211 = arith.constant 0 : index
      %485 = vector.load %arg1[%c0_210, %c0_211] : memref<16x32xf32, #tpu.memory_space<vmem>>, vector<16x32xf32>
      %c0_212 = arith.constant 0 : index
      %c0_213 = arith.constant 0 : index
      %486 = vector.load %arg18[%c0_212, %c0_213] : memref<16x32xf32, #tpu.memory_space<vmem>>, vector<16x32xf32>
      tpu.vector_store %arg18[%c0_212, %c0_213], %485 {strides = array<i32>} : memref<16x32xf32, #tpu.memory_space<vmem>>, vector<16x32xf32>,
    } else {
    }
    %c0 = arith.constant 0 : index
    %c0_1 = arith.constant 0 : index
    %3 = vector.load %arg18[%c0, %c0_1] : memref<16x32xf32, #tpu.memory_space<vmem>>, vector<16x32xf32>
    %4 = arith.truncf %3 : vector<16x32xf32> to vector<16x32xbf16>
    %c0_2 = arith.constant 0 : index
    %c0_3 = arith.constant 0 : index
    %c0_4 = arith.constant 0 : index
    %5 = vector.load %arg5[%c0_2, %c0_3, %c0_4] : memref<1x32x192xbf16, #tpu.memory_space<vmem>>, vector<1x32x192xbf16>
    %6 = vector.shape_cast %5 : vector<1x32x192xbf16> to vector<32x192xbf16>
    %cst = arith.constant dense<0.000000e+00> : vector<16x192xf32>
    %7 = tpu.matmul %4, %6, %cst {dimension_numbers = #tpu.dot_dimension_numbers<[1], [0], [0], [1], [0, 0, 1, 1], [], []>} : vector<16x32xbf16>, vector<32x192xbf16>, vector<16x192xf32> -> vector<16x192xf32>
    %c0_5 = arith.constant 0 : index
    %c0_6 = arith.constant 0 : index
    %c0_7 = arith.constant 0 : index
    %8 = vector.load %arg6[%c0_5, %c0_6, %c0_7] : memref<1x1x192xf32, #tpu.memory_space<vmem>>, vector<1x1x192xf32>
    %9 = vector.shape_cast %8 : vector<1x1x192xf32> to vector<1x192xf32>
    %10 = vector.broadcast %9 : vector<1x192xf32> to vector<16x192xf32>
    %11 = arith.addf %7, %10 : vector<16x192xf32>
    %12 = arith.truncf %11 : vector<16x192xf32> to vector<16x192xbf16>
    %13 = tpu.iota {dimensions = array<i32: 0>} : vector<8x8xi32>
    %14 = tpu.iota {dimensions = array<i32: 1>} : vector<8x8xi32>
    %15 = arith.cmpi sle, %14, %13 : vector<8x8xi32>
    %16 = vector.extract_strided_slice %12 {offsets = [0, 0], sizes = [8, 8], strides = [1, 1]} : vector<16x192xbf16> to vector<8x8xbf16>
    %17 = vector.extract_strided_slice %12 {offsets = [0, 64], sizes = [8, 8], strides = [1, 1]} : vector<16x192xbf16> to vector<8x8xbf16>
    %18 = vector.extract_strided_slice %12 {offsets = [0, 128], sizes = [8, 8], strides = [1, 1]} : vector<16x192xbf16> to vector<8x8xbf16>
    %cst_8 = arith.constant dense<0.000000e+00> : vector<8x8xf32>
    %19 = tpu.matmul %16, %17, %cst_8 {dimension_numbers = #tpu.dot_dimension_numbers<[1], [1], [0], [0], [0, 0, 1, 0], [], []>} : vector<8x8xbf16>, vector<8x8xbf16>, vector<8x8xf32> -> vector<8x8xf32>
    %cst_9 = arith.constant 0.353553385 : f32
    %20 = vector.broadcast %cst_9 : f32 to vector<8x8xf32>
    %21 = arith.mulf %19, %20 : vector<8x8xf32>
    %cst_10 = arith.constant -1.000000e+30 : f32
    %22 = vector.broadcast %cst_10 : f32 to vector<8x8xf32>
    %23 = arith.select %15, %21, %22 : vector<8x8xi1>, vector<8x8xf32>
    %cst_11 = arith.constant dense<0xFF800000> : vector<8xf32>
    %24 = vector.multi_reduction <maximumf>, %23, %cst_11 [1] : vector<8x8xf32> to vector<8xf32>
    %25 = vector.shape_cast %24 : vector<8xf32> to vector<8x1xf32>
    %26 = vector.broadcast %25 : vector<8x1xf32> to vector<8x8xf32>
    %27 = arith.subf %23, %26 : vector<8x8xf32>
    %28 = math.exp %27 : vector<8x8xf32>
    %cst_12 = arith.constant dense<0.000000e+00> : vector<8xf32>
    %29 = vector.multi_reduction <add>, %28, %cst_12 [1] : vector<8x8xf32> to vector<8xf32>
    %30 = vector.shape_cast %29 : vector<8xf32> to vector<8x1xf32>
    %31 = vector.broadcast %30 : vector<8x1xf32> to vector<8x8xf32>
    %32 = arith.divf %28, %31 : vector<8x8xf32>
    %33 = arith.truncf %32 : vector<8x8xf32> to vector<8x8xbf16>
    %cst_13 = arith.constant dense<0.000000e+00> : vector<8x8xf32>
    %34 = tpu.matmul %33, %18, %cst_13 {dimension_numbers = #tpu.dot_dimension_numbers<[1], [0], [0], [1], [0, 0, 1, 1], [], []>} : vector<8x8xbf16>, vector<8x8xbf16>, vector<8x8xf32> -> vector<8x8xf32>
    %35 = arith.truncf %34 : vector<8x8xf32> to vector<8x8xbf16>
    %c0_14 = arith.constant 0 : index
    %c0_15 = arith.constant 0 : index
    %c0_16 = arith.constant 0 : index
    %36 = vector.load %arg7[%c0_14, %c0_15, %c0_16] : memref<1x64x32xbf16, #tpu.memory_space<vmem>>, vector<1x8x32xbf16>
    %37 = vector.shape_cast %36 : vector<1x8x32xbf16> to vector<8x32xbf16>
    %cst_17 = arith.constant dense<0.000000e+00> : vector<8x32xf32>
    %38 = tpu.matmul %35, %37, %cst_17 {dimension_numbers = #tpu.dot_dimension_numbers<[1], [0], [0], [1], [0, 0, 1, 1], [], []>} : vector<8x8xbf16>, vector<8x32xbf16>, vector<8x32xf32> -> vector<8x32xf32>
    %39 = vector.extract_strided_slice %12 {offsets = [0, 8], sizes = [8, 8], strides = [1, 1]} : vector<16x192xbf16> to vector<8x8xbf16>
    %40 = vector.extract_strided_slice %12 {offsets = [0, 72], sizes = [8, 8], strides = [1, 1]} : vector<16x192xbf16> to vector<8x8xbf16>
    %41 = vector.extract_strided_slice %12 {offsets = [0, 136], sizes = [8, 8], strides = [1, 1]} : vector<16x192xbf16> to vector<8x8xbf16>
    %cst_18 = arith.constant dense<0.000000e+00> : vector<8x8xf32>
    %42 = tpu.matmul %39, %40, %cst_18 {dimension_numbers = #tpu.dot_dimension_numbers<[1], [1], [0], [0], [0, 0, 1, 0], [], []>} : vector<8x8xbf16>, vector<8x8xbf16>, vector<8x8xf32> -> vector<8x8xf32>
    %cst_19 = arith.constant 0.353553385 : f32
    %43 = vector.broadcast %cst_19 : f32 to vector<8x8xf32>
    %44 = arith.mulf %42, %43 : vector<8x8xf32>
    %cst_20 = arith.constant -1.000000e+30 : f32
    %45 = vector.broadcast %cst_20 : f32 to vector<8x8xf32>
    %46 = arith.select %15, %44, %45 : vector<8x8xi1>, vector<8x8xf32>
    %cst_21 = arith.constant dense<0xFF800000> : vector<8xf32>
    %47 = vector.multi_reduction <maximumf>, %46, %cst_21 [1] : vector<8x8xf32> to vector<8xf32>
    %48 = vector.shape_cast %47 : vector<8xf32> to vector<8x1xf32>
    %49 = vector.broadcast %48 : vector<8x1xf32> to vector<8x8xf32>
    %50 = arith.subf %46, %49 : vector<8x8xf32>
    %51 = math.exp %50 : vector<8x8xf32>
    %cst_22 = arith.constant dense<0.000000e+00> : vector<8xf32>
    %52 = vector.multi_reduction <add>, %51, %cst_22 [1] : vector<8x8xf32> to vector<8xf32>
    %53 = vector.shape_cast %52 : vector<8xf32> to vector<8x1xf32>
    %54 = vector.broadcast %53 : vector<8x1xf32> to vector<8x8xf32>
    %55 = arith.divf %51, %54 : vector<8x8xf32>
    %56 = arith.truncf %55 : vector<8x8xf32> to vector<8x8xbf16>
    %cst_23 = arith.constant dense<0.000000e+00> : vector<8x8xf32>
    %57 = tpu.matmul %56, %41, %cst_23 {dimension_numbers = #tpu.dot_dimension_numbers<[1], [0], [0], [1], [0, 0, 1, 1], [], []>} : vector<8x8xbf16>, vector<8x8xbf16>, vector<8x8xf32> -> vector<8x8xf32>
    %58 = arith.truncf %57 : vector<8x8xf32> to vector<8x8xbf16>
    %c0_24 = arith.constant 0 : index
    %c8 = arith.constant 8 : index
    %c0_25 = arith.constant 0 : index
    %59 = vector.load %arg7[%c0_24, %c8, %c0_25] : memref<1x64x32xbf16, #tpu.memory_space<vmem>>, vector<1x8x32xbf16>
    %60 = vector.shape_cast %59 : vector<1x8x32xbf16> to vector<8x32xbf16>
    %cst_26 = arith.constant dense<0.000000e+00> : vector<8x32xf32>
    %61 = tpu.matmul %58, %60, %cst_26 {dimension_numbers = #tpu.dot_dimension_numbers<[1], [0], [0], [1], [0, 0, 1, 1], [], []>} : vector<8x8xbf16>, vector<8x32xbf16>, vector<8x32xf32> -> vector<8x32xf32>
    %62 = arith.addf %38, %61 : vector<8x32xf32>
    %63 = vector.extract_strided_slice %12 {offsets = [0, 16], sizes = [8, 8], strides = [1, 1]} : vector<16x192xbf16> to vector<8x8xbf16>
    %64 = vector.extract_strided_slice %12 {offsets = [0, 80], sizes = [8, 8], strides = [1, 1]} : vector<16x192xbf16> to vector<8x8xbf16>
    %65 = vector.extract_strided_slice %12 {offsets = [0, 144], sizes = [8, 8], strides = [1, 1]} : vector<16x192xbf16> to vector<8x8xbf16>
    %cst_27 = arith.constant dense<0.000000e+00> : vector<8x8xf32>
    %66 = tpu.matmul %63, %64, %cst_27 {dimension_numbers = #tpu.dot_dimension_numbers<[1], [1], [0], [0], [0, 0, 1, 0], [], []>} : vector<8x8xbf16>, vector<8x8xbf16>, vector<8x8xf32> -> vector<8x8xf32>
    %cst_28 = arith.constant 0.353553385 : f32
    %67 = vector.broadcast %cst_28 : f32 to vector<8x8xf32>
    %68 = arith.mulf %66, %67 : vector<8x8xf32>
    %cst_29 = arith.constant -1.000000e+30 : f32
    %69 = vector.broadcast %cst_29 : f32 to vector<8x8xf32>
    %70 = arith.select %15, %68, %69 : vector<8x8xi1>, vector<8x8xf32>
    %cst_30 = arith.constant dense<0xFF800000> : vector<8xf32>
    %71 = vector.multi_reduction <maximumf>, %70, %cst_30 [1] : vector<8x8xf32> to vector<8xf32>
    %72 = vector.shape_cast %71 : vector<8xf32> to vector<8x1xf32>
    %73 = vector.broadcast %72 : vector<8x1xf32> to vector<8x8xf32>
    %74 = arith.subf %70, %73 : vector<8x8xf32>
    %75 = math.exp %74 : vector<8x8xf32>
    %cst_31 = arith.constant dense<0.000000e+00> : vector<8xf32>
    %76 = vector.multi_reduction <add>, %75, %cst_31 [1] : vector<8x8xf32> to vector<8xf32>
    %77 = vector.shape_cast %76 : vector<8xf32> to vector<8x1xf32>
    %78 = vector.broadcast %77 : vector<8x1xf32> to vector<8x8xf32>
    %79 = arith.divf %75, %78 : vector<8x8xf32>
    %80 = arith.truncf %79 : vector<8x8xf32> to vector<8x8xbf16>
    %cst_32 = arith.constant dense<0.000000e+00> : vector<8x8xf32>
    %81 = tpu.matmul %80, %65, %cst_32 {dimension_numbers = #tpu.dot_dimension_numbers<[1], [0], [0], [1], [0, 0, 1, 1], [], []>} : vector<8x8xbf16>, vector<8x8xbf16>, vector<8x8xf32> -> vector<8x8xf32>
    %82 = arith.truncf %81 : vector<8x8xf32> to vector<8x8xbf16>
    %c0_33 = arith.constant 0 : index
    %c16 = arith.constant 16 : index
    %c0_34 = arith.constant 0 : index
    %83 = vector.load %arg7[%c0_33, %c16, %c0_34] : memref<1x64x32xbf16, #tpu.memory_space<vmem>>, vector<1x8x32xbf16>
    %84 = vector.shape_cast %83 : vector<1x8x32xbf16> to vector<8x32xbf16>
    %cst_35 = arith.constant dense<0.000000e+00> : vector<8x32xf32>
    %85 = tpu.matmul %82, %84, %cst_35 {dimension_numbers = #tpu.dot_dimension_numbers<[1], [0], [0], [1], [0, 0, 1, 1], [], []>} : vector<8x8xbf16>, vector<8x32xbf16>, vector<8x32xf32> -> vector<8x32xf32>
    %86 = arith.addf %62, %85 : vector<8x32xf32>
    %87 = vector.extract_strided_slice %12 {offsets = [0, 24], sizes = [8, 8], strides = [1, 1]} : vector<16x192xbf16> to vector<8x8xbf16>
    %88 = vector.extract_strided_slice %12 {offsets = [0, 88], sizes = [8, 8], strides = [1, 1]} : vector<16x192xbf16> to vector<8x8xbf16>
    %89 = vector.extract_strided_slice %12 {offsets = [0, 152], sizes = [8, 8], strides = [1, 1]} : vector<16x192xbf16> to vector<8x8xbf16>
    %cst_36 = arith.constant dense<0.000000e+00> : vector<8x8xf32>
    %90 = tpu.matmul %87, %88, %cst_36 {dimension_numbers = #tpu.dot_dimension_numbers<[1], [1], [0], [0], [0, 0, 1, 0], [], []>} : vector<8x8xbf16>, vector<8x8xbf16>, vector<8x8xf32> -> vector<8x8xf32>
    %cst_37 = arith.constant 0.353553385 : f32
    %91 = vector.broadcast %cst_37 : f32 to vector<8x8xf32>
    %92 = arith.mulf %90, %91 : vector<8x8xf32>
    %cst_38 = arith.constant -1.000000e+30 : f32
    %93 = vector.broadcast %cst_38 : f32 to vector<8x8xf32>
    %94 = arith.select %15, %92, %93 : vector<8x8xi1>, vector<8x8xf32>
    %cst_39 = arith.constant dense<0xFF800000> : vector<8xf32>
    %95 = vector.multi_reduction <maximumf>, %94, %cst_39 [1] : vector<8x8xf32> to vector<8xf32>
    %96 = vector.shape_cast %95 : vector<8xf32> to vector<8x1xf32>
    %97 = vector.broadcast %96 : vector<8x1xf32> to vector<8x8xf32>
    %98 = arith.subf %94, %97 : vector<8x8xf32>
    %99 = math.exp %98 : vector<8x8xf32>
    %cst_40 = arith.constant dense<0.000000e+00> : vector<8xf32>
    %100 = vector.multi_reduction <add>, %99, %cst_40 [1] : vector<8x8xf32> to vector<8xf32>
    %101 = vector.shape_cast %100 : vector<8xf32> to vector<8x1xf32>
    %102 = vector.broadcast %101 : vector<8x1xf32> to vector<8x8xf32>
    %103 = arith.divf %99, %102 : vector<8x8xf32>
    %104 = arith.truncf %103 : vector<8x8xf32> to vector<8x8xbf16>
    %cst_41 = arith.constant dense<0.000000e+00> : vector<8x8xf32>
    %105 = tpu.matmul %104, %89, %cst_41 {dimension_numbers = #tpu.dot_dimension_numbers<[1], [0], [0], [1], [0, 0, 1, 1], [], []>} : vector<8x8xbf16>, vector<8x8xbf16>, vector<8x8xf32> -> vector<8x8xf32>
    %106 = arith.truncf %105 : vector<8x8xf32> to vector<8x8xbf16>
    %c0_42 = arith.constant 0 : index
    %c24 = arith.constant 24 : index
    %c0_43 = arith.constant 0 : index
    %107 = vector.load %arg7[%c0_42, %c24, %c0_43] : memref<1x64x32xbf16, #tpu.memory_space<vmem>>, vector<1x8x32xbf16>
    %108 = vector.shape_cast %107 : vector<1x8x32xbf16> to vector<8x32xbf16>
    %cst_44 = arith.constant dense<0.000000e+00> : vector<8x32xf32>
    %109 = tpu.matmul %106, %108, %cst_44 {dimension_numbers = #tpu.dot_dimension_numbers<[1], [0], [0], [1], [0, 0, 1, 1], [], []>} : vector<8x8xbf16>, vector<8x32xbf16>, vector<8x32xf32> -> vector<8x32xf32>
    %110 = arith.addf %86, %109 : vector<8x32xf32>
    %111 = vector.extract_strided_slice %12 {offsets = [0, 32], sizes = [8, 8], strides = [1, 1]} : vector<16x192xbf16> to vector<8x8xbf16>
    %112 = vector.extract_strided_slice %12 {offsets = [0, 96], sizes = [8, 8], strides = [1, 1]} : vector<16x192xbf16> to vector<8x8xbf16>
    %113 = vector.extract_strided_slice %12 {offsets = [0, 160], sizes = [8, 8], strides = [1, 1]} : vector<16x192xbf16> to vector<8x8xbf16>
    %cst_45 = arith.constant dense<0.000000e+00> : vector<8x8xf32>
    %114 = tpu.matmul %111, %112, %cst_45 {dimension_numbers = #tpu.dot_dimension_numbers<[1], [1], [0], [0], [0, 0, 1, 0], [], []>} : vector<8x8xbf16>, vector<8x8xbf16>, vector<8x8xf32> -> vector<8x8xf32>
    %cst_46 = arith.constant 0.353553385 : f32
    %115 = vector.broadcast %cst_46 : f32 to vector<8x8xf32>
    %116 = arith.mulf %114, %115 : vector<8x8xf32>
    %cst_47 = arith.constant -1.000000e+30 : f32
    %117 = vector.broadcast %cst_47 : f32 to vector<8x8xf32>
    %118 = arith.select %15, %116, %117 : vector<8x8xi1>, vector<8x8xf32>
    %cst_48 = arith.constant dense<0xFF800000> : vector<8xf32>
    %119 = vector.multi_reduction <maximumf>, %118, %cst_48 [1] : vector<8x8xf32> to vector<8xf32>
    %120 = vector.shape_cast %119 : vector<8xf32> to vector<8x1xf32>
    %121 = vector.broadcast %120 : vector<8x1xf32> to vector<8x8xf32>
    %122 = arith.subf %118, %121 : vector<8x8xf32>
    %123 = math.exp %122 : vector<8x8xf32>
    %cst_49 = arith.constant dense<0.000000e+00> : vector<8xf32>
    %124 = vector.multi_reduction <add>, %123, %cst_49 [1] : vector<8x8xf32> to vector<8xf32>
    %125 = vector.shape_cast %124 : vector<8xf32> to vector<8x1xf32>
    %126 = vector.broadcast %125 : vector<8x1xf32> to vector<8x8xf32>
    %127 = arith.divf %123, %126 : vector<8x8xf32>
    %128 = arith.truncf %127 : vector<8x8xf32> to vector<8x8xbf16>
    %cst_50 = arith.constant dense<0.000000e+00> : vector<8x8xf32>
    %129 = tpu.matmul %128, %113, %cst_50 {dimension_numbers = #tpu.dot_dimension_numbers<[1], [0], [0], [1], [0, 0, 1, 1], [], []>} : vector<8x8xbf16>, vector<8x8xbf16>, vector<8x8xf32> -> vector<8x8xf32>
    %130 = arith.truncf %129 : vector<8x8xf32> to vector<8x8xbf16>
    %c0_51 = arith.constant 0 : index
    %c32 = arith.constant 32 : index
    %c0_52 = arith.constant 0 : index
    %131 = vector.load %arg7[%c0_51, %c32, %c0_52] : memref<1x64x32xbf16, #tpu.memory_space<vmem>>, vector<1x8x32xbf16>
    %132 = vector.shape_cast %131 : vector<1x8x32xbf16> to vector<8x32xbf16>
    %cst_53 = arith.constant dense<0.000000e+00> : vector<8x32xf32>
    %133 = tpu.matmul %130, %132, %cst_53 {dimension_numbers = #tpu.dot_dimension_numbers<[1], [0], [0], [1], [0, 0, 1, 1], [], []>} : vector<8x8xbf16>, vector<8x32xbf16>, vector<8x32xf32> -> vector<8x32xf32>
    %134 = arith.addf %110, %133 : vector<8x32xf32>
    %135 = vector.extract_strided_slice %12 {offsets = [0, 40], sizes = [8, 8], strides = [1, 1]} : vector<16x192xbf16> to vector<8x8xbf16>
    %136 = vector.extract_strided_slice %12 {offsets = [0, 104], sizes = [8, 8], strides = [1, 1]} : vector<16x192xbf16> to vector<8x8xbf16>
    %137 = vector.extract_strided_slice %12 {offsets = [0, 168], sizes = [8, 8], strides = [1, 1]} : vector<16x192xbf16> to vector<8x8xbf16>
    %cst_54 = arith.constant dense<0.000000e+00> : vector<8x8xf32>
    %138 = tpu.matmul %135, %136, %cst_54 {dimension_numbers = #tpu.dot_dimension_numbers<[1], [1], [0], [0], [0, 0, 1, 0], [], []>} : vector<8x8xbf16>, vector<8x8xbf16>, vector<8x8xf32> -> vector<8x8xf32>
    %cst_55 = arith.constant 0.353553385 : f32
    %139 = vector.broadcast %cst_55 : f32 to vector<8x8xf32>
    %140 = arith.mulf %138, %139 : vector<8x8xf32>
    %cst_56 = arith.constant -1.000000e+30 : f32
    %141 = vector.broadcast %cst_56 : f32 to vector<8x8xf32>
    %142 = arith.select %15, %140, %141 : vector<8x8xi1>, vector<8x8xf32>
    %cst_57 = arith.constant dense<0xFF800000> : vector<8xf32>
    %143 = vector.multi_reduction <maximumf>, %142, %cst_57 [1] : vector<8x8xf32> to vector<8xf32>
    %144 = vector.shape_cast %143 : vector<8xf32> to vector<8x1xf32>
    %145 = vector.broadcast %144 : vector<8x1xf32> to vector<8x8xf32>
    %146 = arith.subf %142, %145 : vector<8x8xf32>
    %147 = math.exp %146 : vector<8x8xf32>
    %cst_58 = arith.constant dense<0.000000e+00> : vector<8xf32>
    %148 = vector.multi_reduction <add>, %147, %cst_58 [1] : vector<8x8xf32> to vector<8xf32>
    %149 = vector.shape_cast %148 : vector<8xf32> to vector<8x1xf32>
    %150 = vector.broadcast %149 : vector<8x1xf32> to vector<8x8xf32>
    %151 = arith.divf %147, %150 : vector<8x8xf32>
    %152 = arith.truncf %151 : vector<8x8xf32> to vector<8x8xbf16>
    %cst_59 = arith.constant dense<0.000000e+00> : vector<8x8xf32>
    %153 = tpu.matmul %152, %137, %cst_59 {dimension_numbers = #tpu.dot_dimension_numbers<[1], [0], [0], [1], [0, 0, 1, 1], [], []>} : vector<8x8xbf16>, vector<8x8xbf16>, vector<8x8xf32> -> vector<8x8xf32>
    %154 = arith.truncf %153 : vector<8x8xf32> to vector<8x8xbf16>
    %c0_60 = arith.constant 0 : index
    %c40 = arith.constant 40 : index
    %c0_61 = arith.constant 0 : index
    %155 = vector.load %arg7[%c0_60, %c40, %c0_61] : memref<1x64x32xbf16, #tpu.memory_space<vmem>>, vector<1x8x32xbf16>
    %156 = vector.shape_cast %155 : vector<1x8x32xbf16> to vector<8x32xbf16>
    %cst_62 = arith.constant dense<0.000000e+00> : vector<8x32xf32>
    %157 = tpu.matmul %154, %156, %cst_62 {dimension_numbers = #tpu.dot_dimension_numbers<[1], [0], [0], [1], [0, 0, 1, 1], [], []>} : vector<8x8xbf16>, vector<8x32xbf16>, vector<8x32xf32> -> vector<8x32xf32>
    %158 = arith.addf %134, %157 : vector<8x32xf32>
    %159 = vector.extract_strided_slice %12 {offsets = [0, 48], sizes = [8, 8], strides = [1, 1]} : vector<16x192xbf16> to vector<8x8xbf16>
    %160 = vector.extract_strided_slice %12 {offsets = [0, 112], sizes = [8, 8], strides = [1, 1]} : vector<16x192xbf16> to vector<8x8xbf16>
    %161 = vector.extract_strided_slice %12 {offsets = [0, 176], sizes = [8, 8], strides = [1, 1]} : vector<16x192xbf16> to vector<8x8xbf16>
    %cst_63 = arith.constant dense<0.000000e+00> : vector<8x8xf32>
    %162 = tpu.matmul %159, %160, %cst_63 {dimension_numbers = #tpu.dot_dimension_numbers<[1], [1], [0], [0], [0, 0, 1, 0], [], []>} : vector<8x8xbf16>, vector<8x8xbf16>, vector<8x8xf32> -> vector<8x8xf32>
    %cst_64 = arith.constant 0.353553385 : f32
    %163 = vector.broadcast %cst_64 : f32 to vector<8x8xf32>
    %164 = arith.mulf %162, %163 : vector<8x8xf32>
    %cst_65 = arith.constant -1.000000e+30 : f32
    %165 = vector.broadcast %cst_65 : f32 to vector<8x8xf32>
    %166 = arith.select %15, %164, %165 : vector<8x8xi1>, vector<8x8xf32>
    %cst_66 = arith.constant dense<0xFF800000> : vector<8xf32>
    %167 = vector.multi_reduction <maximumf>, %166, %cst_66 [1] : vector<8x8xf32> to vector<8xf32>
    %168 = vector.shape_cast %167 : vector<8xf32> to vector<8x1xf32>
    %169 = vector.broadcast %168 : vector<8x1xf32> to vector<8x8xf32>
    %170 = arith.subf %166, %169 : vector<8x8xf32>
    %171 = math.exp %170 : vector<8x8xf32>
    %cst_67 = arith.constant dense<0.000000e+00> : vector<8xf32>
    %172 = vector.multi_reduction <add>, %171, %cst_67 [1] : vector<8x8xf32> to vector<8xf32>
    %173 = vector.shape_cast %172 : vector<8xf32> to vector<8x1xf32>
    %174 = vector.broadcast %173 : vector<8x1xf32> to vector<8x8xf32>
    %175 = arith.divf %171, %174 : vector<8x8xf32>
    %176 = arith.truncf %175 : vector<8x8xf32> to vector<8x8xbf16>
    %cst_68 = arith.constant dense<0.000000e+00> : vector<8x8xf32>
    %177 = tpu.matmul %176, %161, %cst_68 {dimension_numbers = #tpu.dot_dimension_numbers<[1], [0], [0], [1], [0, 0, 1, 1], [], []>} : vector<8x8xbf16>, vector<8x8xbf16>, vector<8x8xf32> -> vector<8x8xf32>
    %178 = arith.truncf %177 : vector<8x8xf32> to vector<8x8xbf16>
    %c0_69 = arith.constant 0 : index
    %c48 = arith.constant 48 : index
    %c0_70 = arith.constant 0 : index
    %179 = vector.load %arg7[%c0_69, %c48, %c0_70] : memref<1x64x32xbf16, #tpu.memory_space<vmem>>, vector<1x8x32xbf16>
    %180 = vector.shape_cast %179 : vector<1x8x32xbf16> to vector<8x32xbf16>
    %cst_71 = arith.constant dense<0.000000e+00> : vector<8x32xf32>
    %181 = tpu.matmul %178, %180, %cst_71 {dimension_numbers = #tpu.dot_dimension_numbers<[1], [0], [0], [1], [0, 0, 1, 1], [], []>} : vector<8x8xbf16>, vector<8x32xbf16>, vector<8x32xf32> -> vector<8x32xf32>
    %182 = arith.addf %158, %181 : vector<8x32xf32>
    %183 = vector.extract_strided_slice %12 {offsets = [0, 56], sizes = [8, 8], strides = [1, 1]} : vector<16x192xbf16> to vector<8x8xbf16>
    %184 = vector.extract_strided_slice %12 {offsets = [0, 120], sizes = [8, 8], strides = [1, 1]} : vector<16x192xbf16> to vector<8x8xbf16>
    %185 = vector.extract_strided_slice %12 {offsets = [0, 184], sizes = [8, 8], strides = [1, 1]} : vector<16x192xbf16> to vector<8x8xbf16>
    %cst_72 = arith.constant dense<0.000000e+00> : vector<8x8xf32>
    %186 = tpu.matmul %183, %184, %cst_72 {dimension_numbers = #tpu.dot_dimension_numbers<[1], [1], [0], [0], [0, 0, 1, 0], [], []>} : vector<8x8xbf16>, vector<8x8xbf16>, vector<8x8xf32> -> vector<8x8xf32>
    %cst_73 = arith.constant 0.353553385 : f32
    %187 = vector.broadcast %cst_73 : f32 to vector<8x8xf32>
    %188 = arith.mulf %186, %187 : vector<8x8xf32>
    %cst_74 = arith.constant -1.000000e+30 : f32
    %189 = vector.broadcast %cst_74 : f32 to vector<8x8xf32>
    %190 = arith.select %15, %188, %189 : vector<8x8xi1>, vector<8x8xf32>
    %cst_75 = arith.constant dense<0xFF800000> : vector<8xf32>
    %191 = vector.multi_reduction <maximumf>, %190, %cst_75 [1] : vector<8x8xf32> to vector<8xf32>
    %192 = vector.shape_cast %191 : vector<8xf32> to vector<8x1xf32>
    %193 = vector.broadcast %192 : vector<8x1xf32> to vector<8x8xf32>
    %194 = arith.subf %190, %193 : vector<8x8xf32>
    %195 = math.exp %194 : vector<8x8xf32>
    %cst_76 = arith.constant dense<0.000000e+00> : vector<8xf32>
    %196 = vector.multi_reduction <add>, %195, %cst_76 [1] : vector<8x8xf32> to vector<8xf32>
    %197 = vector.shape_cast %196 : vector<8xf32> to vector<8x1xf32>
    %198 = vector.broadcast %197 : vector<8x1xf32> to vector<8x8xf32>
    %199 = arith.divf %195, %198 : vector<8x8xf32>
    %200 = arith.truncf %199 : vector<8x8xf32> to vector<8x8xbf16>
    %cst_77 = arith.constant dense<0.000000e+00> : vector<8x8xf32>
    %201 = tpu.matmul %200, %185, %cst_77 {dimension_numbers = #tpu.dot_dimension_numbers<[1], [0], [0], [1], [0, 0, 1, 1], [], []>} : vector<8x8xbf16>, vector<8x8xbf16>, vector<8x8xf32> -> vector<8x8xf32>
    %202 = arith.truncf %201 : vector<8x8xf32> to vector<8x8xbf16>
    %c0_78 = arith.constant 0 : index
    %c56 = arith.constant 56 : index
    %c0_79 = arith.constant 0 : index
    %203 = vector.load %arg7[%c0_78, %c56, %c0_79] : memref<1x64x32xbf16, #tpu.memory_space<vmem>>, vector<1x8x32xbf16>
    %204 = vector.shape_cast %203 : vector<1x8x32xbf16> to vector<8x32xbf16>
    %cst_80 = arith.constant dense<0.000000e+00> : vector<8x32xf32>
    %205 = tpu.matmul %202, %204, %cst_80 {dimension_numbers = #tpu.dot_dimension_numbers<[1], [0], [0], [1], [0, 0, 1, 1], [], []>} : vector<8x8xbf16>, vector<8x32xbf16>, vector<8x32xf32> -> vector<8x32xf32>
    %206 = arith.addf %182, %205 : vector<8x32xf32>
    %c0_81 = arith.constant 0 : index
    %c0_82 = arith.constant 0 : index
    %207 = vector.load %arg19[%c0_81, %c0_82] : memref<16x32xf32, #tpu.memory_space<vmem>>, vector<8x32xf32>
    tpu.vector_store %arg19[%c0_81, %c0_82], %206 {strides = array<i32>} : memref<16x32xf32, #tpu.memory_space<vmem>>, vector<8x32xf32>,
    %208 = vector.extract_strided_slice %12 {offsets = [8, 0], sizes = [8, 8], strides = [1, 1]} : vector<16x192xbf16> to vector<8x8xbf16>
    %209 = vector.extract_strided_slice %12 {offsets = [8, 64], sizes = [8, 8], strides = [1, 1]} : vector<16x192xbf16> to vector<8x8xbf16>
    %210 = vector.extract_strided_slice %12 {offsets = [8, 128], sizes = [8, 8], strides = [1, 1]} : vector<16x192xbf16> to vector<8x8xbf16>
    %cst_83 = arith.constant dense<0.000000e+00> : vector<8x8xf32>
    %211 = tpu.matmul %208, %209, %cst_83 {dimension_numbers = #tpu.dot_dimension_numbers<[1], [1], [0], [0], [0, 0, 1, 0], [], []>} : vector<8x8xbf16>, vector<8x8xbf16>, vector<8x8xf32> -> vector<8x8xf32>
    %cst_84 = arith.constant 0.353553385 : f32
    %212 = vector.broadcast %cst_84 : f32 to vector<8x8xf32>
    %213 = arith.mulf %211, %212 : vector<8x8xf32>
    %cst_85 = arith.constant -1.000000e+30 : f32
    %214 = vector.broadcast %cst_85 : f32 to vector<8x8xf32>
    %215 = arith.select %15, %213, %214 : vector<8x8xi1>, vector<8x8xf32>
    %cst_86 = arith.constant dense<0xFF800000> : vector<8xf32>
    %216 = vector.multi_reduction <maximumf>, %215, %cst_86 [1] : vector<8x8xf32> to vector<8xf32>
    %217 = vector.shape_cast %216 : vector<8xf32> to vector<8x1xf32>
    %218 = vector.broadcast %217 : vector<8x1xf32> to vector<8x8xf32>
    %219 = arith.subf %215, %218 : vector<8x8xf32>
    %220 = math.exp %219 : vector<8x8xf32>
    %cst_87 = arith.constant dense<0.000000e+00> : vector<8xf32>
    %221 = vector.multi_reduction <add>, %220, %cst_87 [1] : vector<8x8xf32> to vector<8xf32>
    %222 = vector.shape_cast %221 : vector<8xf32> to vector<8x1xf32>
    %223 = vector.broadcast %222 : vector<8x1xf32> to vector<8x8xf32>
    %224 = arith.divf %220, %223 : vector<8x8xf32>
    %225 = arith.truncf %224 : vector<8x8xf32> to vector<8x8xbf16>
    %cst_88 = arith.constant dense<0.000000e+00> : vector<8x8xf32>
    %226 = tpu.matmul %225, %210, %cst_88 {dimension_numbers = #tpu.dot_dimension_numbers<[1], [0], [0], [1], [0, 0, 1, 1], [], []>} : vector<8x8xbf16>, vector<8x8xbf16>, vector<8x8xf32> -> vector<8x8xf32>
    %227 = arith.truncf %226 : vector<8x8xf32> to vector<8x8xbf16>
    %c0_89 = arith.constant 0 : index
    %c0_90 = arith.constant 0 : index
    %c0_91 = arith.constant 0 : index
    %228 = vector.load %arg7[%c0_89, %c0_90, %c0_91] : memref<1x64x32xbf16, #tpu.memory_space<vmem>>, vector<1x8x32xbf16>
    %229 = vector.shape_cast %228 : vector<1x8x32xbf16> to vector<8x32xbf16>
    %cst_92 = arith.constant dense<0.000000e+00> : vector<8x32xf32>
    %230 = tpu.matmul %227, %229, %cst_92 {dimension_numbers = #tpu.dot_dimension_numbers<[1], [0], [0], [1], [0, 0, 1, 1], [], []>} : vector<8x8xbf16>, vector<8x32xbf16>, vector<8x32xf32> -> vector<8x32xf32>
    %231 = vector.extract_strided_slice %12 {offsets = [8, 8], sizes = [8, 8], strides = [1, 1]} : vector<16x192xbf16> to vector<8x8xbf16>
    %232 = vector.extract_strided_slice %12 {offsets = [8, 72], sizes = [8, 8], strides = [1, 1]} : vector<16x192xbf16> to vector<8x8xbf16>
    %233 = vector.extract_strided_slice %12 {offsets = [8, 136], sizes = [8, 8], strides = [1, 1]} : vector<16x192xbf16> to vector<8x8xbf16>
    %cst_93 = arith.constant dense<0.000000e+00> : vector<8x8xf32>
    %234 = tpu.matmul %231, %232, %cst_93 {dimension_numbers = #tpu.dot_dimension_numbers<[1], [1], [0], [0], [0, 0, 1, 0], [], []>} : vector<8x8xbf16>, vector<8x8xbf16>, vector<8x8xf32> -> vector<8x8xf32>
    %cst_94 = arith.constant 0.353553385 : f32
    %235 = vector.broadcast %cst_94 : f32 to vector<8x8xf32>
    %236 = arith.mulf %234, %235 : vector<8x8xf32>
    %cst_95 = arith.constant -1.000000e+30 : f32
    %237 = vector.broadcast %cst_95 : f32 to vector<8x8xf32>
    %238 = arith.select %15, %236, %237 : vector<8x8xi1>, vector<8x8xf32>
    %cst_96 = arith.constant dense<0xFF800000> : vector<8xf32>
    %239 = vector.multi_reduction <maximumf>, %238, %cst_96 [1] : vector<8x8xf32> to vector<8xf32>
    %240 = vector.shape_cast %239 : vector<8xf32> to vector<8x1xf32>
    %241 = vector.broadcast %240 : vector<8x1xf32> to vector<8x8xf32>
    %242 = arith.subf %238, %241 : vector<8x8xf32>
    %243 = math.exp %242 : vector<8x8xf32>
    %cst_97 = arith.constant dense<0.000000e+00> : vector<8xf32>
    %244 = vector.multi_reduction <add>, %243, %cst_97 [1] : vector<8x8xf32> to vector<8xf32>
    %245 = vector.shape_cast %244 : vector<8xf32> to vector<8x1xf32>
    %246 = vector.broadcast %245 : vector<8x1xf32> to vector<8x8xf32>
    %247 = arith.divf %243, %246 : vector<8x8xf32>
    %248 = arith.truncf %247 : vector<8x8xf32> to vector<8x8xbf16>
    %cst_98 = arith.constant dense<0.000000e+00> : vector<8x8xf32>
    %249 = tpu.matmul %248, %233, %cst_98 {dimension_numbers = #tpu.dot_dimension_numbers<[1], [0], [0], [1], [0, 0, 1, 1], [], []>} : vector<8x8xbf16>, vector<8x8xbf16>, vector<8x8xf32> -> vector<8x8xf32>
    %250 = arith.truncf %249 : vector<8x8xf32> to vector<8x8xbf16>
    %c0_99 = arith.constant 0 : index
    %c8_100 = arith.constant 8 : index
    %c0_101 = arith.constant 0 : index
    %251 = vector.load %arg7[%c0_99, %c8_100, %c0_101] : memref<1x64x32xbf16, #tpu.memory_space<vmem>>, vector<1x8x32xbf16>
    %252 = vector.shape_cast %251 : vector<1x8x32xbf16> to vector<8x32xbf16>
    %cst_102 = arith.constant dense<0.000000e+00> : vector<8x32xf32>
    %253 = tpu.matmul %250, %252, %cst_102 {dimension_numbers = #tpu.dot_dimension_numbers<[1], [0], [0], [1], [0, 0, 1, 1], [], []>} : vector<8x8xbf16>, vector<8x32xbf16>, vector<8x32xf32> -> vector<8x32xf32>
    %254 = arith.addf %230, %253 : vector<8x32xf32>
    %255 = vector.extract_strided_slice %12 {offsets = [8, 16], sizes = [8, 8], strides = [1, 1]} : vector<16x192xbf16> to vector<8x8xbf16>
    %256 = vector.extract_strided_slice %12 {offsets = [8, 80], sizes = [8, 8], strides = [1, 1]} : vector<16x192xbf16> to vector<8x8xbf16>
    %257 = vector.extract_strided_slice %12 {offsets = [8, 144], sizes = [8, 8], strides = [1, 1]} : vector<16x192xbf16> to vector<8x8xbf16>
    %cst_103 = arith.constant dense<0.000000e+00> : vector<8x8xf32>
    %258 = tpu.matmul %255, %256, %cst_103 {dimension_numbers = #tpu.dot_dimension_numbers<[1], [1], [0], [0], [0, 0, 1, 0], [], []>} : vector<8x8xbf16>, vector<8x8xbf16>, vector<8x8xf32> -> vector<8x8xf32>
    %cst_104 = arith.constant 0.353553385 : f32
    %259 = vector.broadcast %cst_104 : f32 to vector<8x8xf32>
    %260 = arith.mulf %258, %259 : vector<8x8xf32>
    %cst_105 = arith.constant -1.000000e+30 : f32
    %261 = vector.broadcast %cst_105 : f32 to vector<8x8xf32>
    %262 = arith.select %15, %260, %261 : vector<8x8xi1>, vector<8x8xf32>
    %cst_106 = arith.constant dense<0xFF800000> : vector<8xf32>
    %263 = vector.multi_reduction <maximumf>, %262, %cst_106 [1] : vector<8x8xf32> to vector<8xf32>
    %264 = vector.shape_cast %263 : vector<8xf32> to vector<8x1xf32>
    %265 = vector.broadcast %264 : vector<8x1xf32> to vector<8x8xf32>
    %266 = arith.subf %262, %265 : vector<8x8xf32>
    %267 = math.exp %266 : vector<8x8xf32>
    %cst_107 = arith.constant dense<0.000000e+00> : vector<8xf32>
    %268 = vector.multi_reduction <add>, %267, %cst_107 [1] : vector<8x8xf32> to vector<8xf32>
    %269 = vector.shape_cast %268 : vector<8xf32> to vector<8x1xf32>
    %270 = vector.broadcast %269 : vector<8x1xf32> to vector<8x8xf32>
    %271 = arith.divf %267, %270 : vector<8x8xf32>
    %272 = arith.truncf %271 : vector<8x8xf32> to vector<8x8xbf16>
    %cst_108 = arith.constant dense<0.000000e+00> : vector<8x8xf32>
    %273 = tpu.matmul %272, %257, %cst_108 {dimension_numbers = #tpu.dot_dimension_numbers<[1], [0], [0], [1], [0, 0, 1, 1], [], []>} : vector<8x8xbf16>, vector<8x8xbf16>, vector<8x8xf32> -> vector<8x8xf32>
    %274 = arith.truncf %273 : vector<8x8xf32> to vector<8x8xbf16>
    %c0_109 = arith.constant 0 : index
    %c16_110 = arith.constant 16 : index
    %c0_111 = arith.constant 0 : index
    %275 = vector.load %arg7[%c0_109, %c16_110, %c0_111] : memref<1x64x32xbf16, #tpu.memory_space<vmem>>, vector<1x8x32xbf16>
    %276 = vector.shape_cast %275 : vector<1x8x32xbf16> to vector<8x32xbf16>
    %cst_112 = arith.constant dense<0.000000e+00> : vector<8x32xf32>
    %277 = tpu.matmul %274, %276, %cst_112 {dimension_numbers = #tpu.dot_dimension_numbers<[1], [0], [0], [1], [0, 0, 1, 1], [], []>} : vector<8x8xbf16>, vector<8x32xbf16>, vector<8x32xf32> -> vector<8x32xf32>
    %278 = arith.addf %254, %277 : vector<8x32xf32>
    %279 = vector.extract_strided_slice %12 {offsets = [8, 24], sizes = [8, 8], strides = [1, 1]} : vector<16x192xbf16> to vector<8x8xbf16>
    %280 = vector.extract_strided_slice %12 {offsets = [8, 88], sizes = [8, 8], strides = [1, 1]} : vector<16x192xbf16> to vector<8x8xbf16>
    %281 = vector.extract_strided_slice %12 {offsets = [8, 152], sizes = [8, 8], strides = [1, 1]} : vector<16x192xbf16> to vector<8x8xbf16>
    %cst_113 = arith.constant dense<0.000000e+00> : vector<8x8xf32>
    %282 = tpu.matmul %279, %280, %cst_113 {dimension_numbers = #tpu.dot_dimension_numbers<[1], [1], [0], [0], [0, 0, 1, 0], [], []>} : vector<8x8xbf16>, vector<8x8xbf16>, vector<8x8xf32> -> vector<8x8xf32>
    %cst_114 = arith.constant 0.353553385 : f32
    %283 = vector.broadcast %cst_114 : f32 to vector<8x8xf32>
    %284 = arith.mulf %282, %283 : vector<8x8xf32>
    %cst_115 = arith.constant -1.000000e+30 : f32
    %285 = vector.broadcast %cst_115 : f32 to vector<8x8xf32>
    %286 = arith.select %15, %284, %285 : vector<8x8xi1>, vector<8x8xf32>
    %cst_116 = arith.constant dense<0xFF800000> : vector<8xf32>
    %287 = vector.multi_reduction <maximumf>, %286, %cst_116 [1] : vector<8x8xf32> to vector<8xf32>
    %288 = vector.shape_cast %287 : vector<8xf32> to vector<8x1xf32>
    %289 = vector.broadcast %288 : vector<8x1xf32> to vector<8x8xf32>
    %290 = arith.subf %286, %289 : vector<8x8xf32>
    %291 = math.exp %290 : vector<8x8xf32>
    %cst_117 = arith.constant dense<0.000000e+00> : vector<8xf32>
    %292 = vector.multi_reduction <add>, %291, %cst_117 [1] : vector<8x8xf32> to vector<8xf32>
    %293 = vector.shape_cast %292 : vector<8xf32> to vector<8x1xf32>
    %294 = vector.broadcast %293 : vector<8x1xf32> to vector<8x8xf32>
    %295 = arith.divf %291, %294 : vector<8x8xf32>
    %296 = arith.truncf %295 : vector<8x8xf32> to vector<8x8xbf16>
    %cst_118 = arith.constant dense<0.000000e+00> : vector<8x8xf32>
    %297 = tpu.matmul %296, %281, %cst_118 {dimension_numbers = #tpu.dot_dimension_numbers<[1], [0], [0], [1], [0, 0, 1, 1], [], []>} : vector<8x8xbf16>, vector<8x8xbf16>, vector<8x8xf32> -> vector<8x8xf32>
    %298 = arith.truncf %297 : vector<8x8xf32> to vector<8x8xbf16>
    %c0_119 = arith.constant 0 : index
    %c24_120 = arith.constant 24 : index
    %c0_121 = arith.constant 0 : index
    %299 = vector.load %arg7[%c0_119, %c24_120, %c0_121] : memref<1x64x32xbf16, #tpu.memory_space<vmem>>, vector<1x8x32xbf16>
    %300 = vector.shape_cast %299 : vector<1x8x32xbf16> to vector<8x32xbf16>
    %cst_122 = arith.constant dense<0.000000e+00> : vector<8x32xf32>
    %301 = tpu.matmul %298, %300, %cst_122 {dimension_numbers = #tpu.dot_dimension_numbers<[1], [0], [0], [1], [0, 0, 1, 1], [], []>} : vector<8x8xbf16>, vector<8x32xbf16>, vector<8x32xf32> -> vector<8x32xf32>
    %302 = arith.addf %278, %301 : vector<8x32xf32>
    %303 = vector.extract_strided_slice %12 {offsets = [8, 32], sizes = [8, 8], strides = [1, 1]} : vector<16x192xbf16> to vector<8x8xbf16>
    %304 = vector.extract_strided_slice %12 {offsets = [8, 96], sizes = [8, 8], strides = [1, 1]} : vector<16x192xbf16> to vector<8x8xbf16>
    %305 = vector.extract_strided_slice %12 {offsets = [8, 160], sizes = [8, 8], strides = [1, 1]} : vector<16x192xbf16> to vector<8x8xbf16>
    %cst_123 = arith.constant dense<0.000000e+00> : vector<8x8xf32>
    %306 = tpu.matmul %303, %304, %cst_123 {dimension_numbers = #tpu.dot_dimension_numbers<[1], [1], [0], [0], [0, 0, 1, 0], [], []>} : vector<8x8xbf16>, vector<8x8xbf16>, vector<8x8xf32> -> vector<8x8xf32>
    %cst_124 = arith.constant 0.353553385 : f32
    %307 = vector.broadcast %cst_124 : f32 to vector<8x8xf32>
    %308 = arith.mulf %306, %307 : vector<8x8xf32>
    %cst_125 = arith.constant -1.000000e+30 : f32
    %309 = vector.broadcast %cst_125 : f32 to vector<8x8xf32>
    %310 = arith.select %15, %308, %309 : vector<8x8xi1>, vector<8x8xf32>
    %cst_126 = arith.constant dense<0xFF800000> : vector<8xf32>
    %311 = vector.multi_reduction <maximumf>, %310, %cst_126 [1] : vector<8x8xf32> to vector<8xf32>
    %312 = vector.shape_cast %311 : vector<8xf32> to vector<8x1xf32>
    %313 = vector.broadcast %312 : vector<8x1xf32> to vector<8x8xf32>
    %314 = arith.subf %310, %313 : vector<8x8xf32>
    %315 = math.exp %314 : vector<8x8xf32>
    %cst_127 = arith.constant dense<0.000000e+00> : vector<8xf32>
    %316 = vector.multi_reduction <add>, %315, %cst_127 [1] : vector<8x8xf32> to vector<8xf32>
    %317 = vector.shape_cast %316 : vector<8xf32> to vector<8x1xf32>
    %318 = vector.broadcast %317 : vector<8x1xf32> to vector<8x8xf32>
    %319 = arith.divf %315, %318 : vector<8x8xf32>
    %320 = arith.truncf %319 : vector<8x8xf32> to vector<8x8xbf16>
    %cst_128 = arith.constant dense<0.000000e+00> : vector<8x8xf32>
    %321 = tpu.matmul %320, %305, %cst_128 {dimension_numbers = #tpu.dot_dimension_numbers<[1], [0], [0], [1], [0, 0, 1, 1], [], []>} : vector<8x8xbf16>, vector<8x8xbf16>, vector<8x8xf32> -> vector<8x8xf32>
    %322 = arith.truncf %321 : vector<8x8xf32> to vector<8x8xbf16>
    %c0_129 = arith.constant 0 : index
    %c32_130 = arith.constant 32 : index
    %c0_131 = arith.constant 0 : index
    %323 = vector.load %arg7[%c0_129, %c32_130, %c0_131] : memref<1x64x32xbf16, #tpu.memory_space<vmem>>, vector<1x8x32xbf16>
    %324 = vector.shape_cast %323 : vector<1x8x32xbf16> to vector<8x32xbf16>
    %cst_132 = arith.constant dense<0.000000e+00> : vector<8x32xf32>
    %325 = tpu.matmul %322, %324, %cst_132 {dimension_numbers = #tpu.dot_dimension_numbers<[1], [0], [0], [1], [0, 0, 1, 1], [], []>} : vector<8x8xbf16>, vector<8x32xbf16>, vector<8x32xf32> -> vector<8x32xf32>
    %326 = arith.addf %302, %325 : vector<8x32xf32>
    %327 = vector.extract_strided_slice %12 {offsets = [8, 40], sizes = [8, 8], strides = [1, 1]} : vector<16x192xbf16> to vector<8x8xbf16>
    %328 = vector.extract_strided_slice %12 {offsets = [8, 104], sizes = [8, 8], strides = [1, 1]} : vector<16x192xbf16> to vector<8x8xbf16>
    %329 = vector.extract_strided_slice %12 {offsets = [8, 168], sizes = [8, 8], strides = [1, 1]} : vector<16x192xbf16> to vector<8x8xbf16>
    %cst_133 = arith.constant dense<0.000000e+00> : vector<8x8xf32>
    %330 = tpu.matmul %327, %328, %cst_133 {dimension_numbers = #tpu.dot_dimension_numbers<[1], [1], [0], [0], [0, 0, 1, 0], [], []>} : vector<8x8xbf16>, vector<8x8xbf16>, vector<8x8xf32> -> vector<8x8xf32>
    %cst_134 = arith.constant 0.353553385 : f32
    %331 = vector.broadcast %cst_134 : f32 to vector<8x8xf32>
    %332 = arith.mulf %330, %331 : vector<8x8xf32>
    %cst_135 = arith.constant -1.000000e+30 : f32
    %333 = vector.broadcast %cst_135 : f32 to vector<8x8xf32>
    %334 = arith.select %15, %332, %333 : vector<8x8xi1>, vector<8x8xf32>
    %cst_136 = arith.constant dense<0xFF800000> : vector<8xf32>
    %335 = vector.multi_reduction <maximumf>, %334, %cst_136 [1] : vector<8x8xf32> to vector<8xf32>
    %336 = vector.shape_cast %335 : vector<8xf32> to vector<8x1xf32>
    %337 = vector.broadcast %336 : vector<8x1xf32> to vector<8x8xf32>
    %338 = arith.subf %334, %337 : vector<8x8xf32>
    %339 = math.exp %338 : vector<8x8xf32>
    %cst_137 = arith.constant dense<0.000000e+00> : vector<8xf32>
    %340 = vector.multi_reduction <add>, %339, %cst_137 [1] : vector<8x8xf32> to vector<8xf32>
    %341 = vector.shape_cast %340 : vector<8xf32> to vector<8x1xf32>
    %342 = vector.broadcast %341 : vector<8x1xf32> to vector<8x8xf32>
    %343 = arith.divf %339, %342 : vector<8x8xf32>
    %344 = arith.truncf %343 : vector<8x8xf32> to vector<8x8xbf16>
    %cst_138 = arith.constant dense<0.000000e+00> : vector<8x8xf32>
    %345 = tpu.matmul %344, %329, %cst_138 {dimension_numbers = #tpu.dot_dimension_numbers<[1], [0], [0], [1], [0, 0, 1, 1], [], []>} : vector<8x8xbf16>, vector<8x8xbf16>, vector<8x8xf32> -> vector<8x8xf32>
    %346 = arith.truncf %345 : vector<8x8xf32> to vector<8x8xbf16>
    %c0_139 = arith.constant 0 : index
    %c40_140 = arith.constant 40 : index
    %c0_141 = arith.constant 0 : index
    %347 = vector.load %arg7[%c0_139, %c40_140, %c0_141] : memref<1x64x32xbf16, #tpu.memory_space<vmem>>, vector<1x8x32xbf16>
    %348 = vector.shape_cast %347 : vector<1x8x32xbf16> to vector<8x32xbf16>
    %cst_142 = arith.constant dense<0.000000e+00> : vector<8x32xf32>
    %349 = tpu.matmul %346, %348, %cst_142 {dimension_numbers = #tpu.dot_dimension_numbers<[1], [0], [0], [1], [0, 0, 1, 1], [], []>} : vector<8x8xbf16>, vector<8x32xbf16>, vector<8x32xf32> -> vector<8x32xf32>
    %350 = arith.addf %326, %349 : vector<8x32xf32>
    %351 = vector.extract_strided_slice %12 {offsets = [8, 48], sizes = [8, 8], strides = [1, 1]} : vector<16x192xbf16> to vector<8x8xbf16>
    %352 = vector.extract_strided_slice %12 {offsets = [8, 112], sizes = [8, 8], strides = [1, 1]} : vector<16x192xbf16> to vector<8x8xbf16>
    %353 = vector.extract_strided_slice %12 {offsets = [8, 176], sizes = [8, 8], strides = [1, 1]} : vector<16x192xbf16> to vector<8x8xbf16>
    %cst_143 = arith.constant dense<0.000000e+00> : vector<8x8xf32>
    %354 = tpu.matmul %351, %352, %cst_143 {dimension_numbers = #tpu.dot_dimension_numbers<[1], [1], [0], [0], [0, 0, 1, 0], [], []>} : vector<8x8xbf16>, vector<8x8xbf16>, vector<8x8xf32> -> vector<8x8xf32>
    %cst_144 = arith.constant 0.353553385 : f32
    %355 = vector.broadcast %cst_144 : f32 to vector<8x8xf32>
    %356 = arith.mulf %354, %355 : vector<8x8xf32>
    %cst_145 = arith.constant -1.000000e+30 : f32
    %357 = vector.broadcast %cst_145 : f32 to vector<8x8xf32>
    %358 = arith.select %15, %356, %357 : vector<8x8xi1>, vector<8x8xf32>
    %cst_146 = arith.constant dense<0xFF800000> : vector<8xf32>
    %359 = vector.multi_reduction <maximumf>, %358, %cst_146 [1] : vector<8x8xf32> to vector<8xf32>
    %360 = vector.shape_cast %359 : vector<8xf32> to vector<8x1xf32>
    %361 = vector.broadcast %360 : vector<8x1xf32> to vector<8x8xf32>
    %362 = arith.subf %358, %361 : vector<8x8xf32>
    %363 = math.exp %362 : vector<8x8xf32>
    %cst_147 = arith.constant dense<0.000000e+00> : vector<8xf32>
    %364 = vector.multi_reduction <add>, %363, %cst_147 [1] : vector<8x8xf32> to vector<8xf32>
    %365 = vector.shape_cast %364 : vector<8xf32> to vector<8x1xf32>
    %366 = vector.broadcast %365 : vector<8x1xf32> to vector<8x8xf32>
    %367 = arith.divf %363, %366 : vector<8x8xf32>
    %368 = arith.truncf %367 : vector<8x8xf32> to vector<8x8xbf16>
    %cst_148 = arith.constant dense<0.000000e+00> : vector<8x8xf32>
    %369 = tpu.matmul %368, %353, %cst_148 {dimension_numbers = #tpu.dot_dimension_numbers<[1], [0], [0], [1], [0, 0, 1, 1], [], []>} : vector<8x8xbf16>, vector<8x8xbf16>, vector<8x8xf32> -> vector<8x8xf32>
    %370 = arith.truncf %369 : vector<8x8xf32> to vector<8x8xbf16>
    %c0_149 = arith.constant 0 : index
    %c48_150 = arith.constant 48 : index
    %c0_151 = arith.constant 0 : index
    %371 = vector.load %arg7[%c0_149, %c48_150, %c0_151] : memref<1x64x32xbf16, #tpu.memory_space<vmem>>, vector<1x8x32xbf16>
    %372 = vector.shape_cast %371 : vector<1x8x32xbf16> to vector<8x32xbf16>
    %cst_152 = arith.constant dense<0.000000e+00> : vector<8x32xf32>
    %373 = tpu.matmul %370, %372, %cst_152 {dimension_numbers = #tpu.dot_dimension_numbers<[1], [0], [0], [1], [0, 0, 1, 1], [], []>} : vector<8x8xbf16>, vector<8x32xbf16>, vector<8x32xf32> -> vector<8x32xf32>
    %374 = arith.addf %350, %373 : vector<8x32xf32>
    %375 = vector.extract_strided_slice %12 {offsets = [8, 56], sizes = [8, 8], strides = [1, 1]} : vector<16x192xbf16> to vector<8x8xbf16>
    %376 = vector.extract_strided_slice %12 {offsets = [8, 120], sizes = [8, 8], strides = [1, 1]} : vector<16x192xbf16> to vector<8x8xbf16>
    %377 = vector.extract_strided_slice %12 {offsets = [8, 184], sizes = [8, 8], strides = [1, 1]} : vector<16x192xbf16> to vector<8x8xbf16>
    %cst_153 = arith.constant dense<0.000000e+00> : vector<8x8xf32>
    %378 = tpu.matmul %375, %376, %cst_153 {dimension_numbers = #tpu.dot_dimension_numbers<[1], [1], [0], [0], [0, 0, 1, 0], [], []>} : vector<8x8xbf16>, vector<8x8xbf16>, vector<8x8xf32> -> vector<8x8xf32>
    %cst_154 = arith.constant 0.353553385 : f32
    %379 = vector.broadcast %cst_154 : f32 to vector<8x8xf32>
    %380 = arith.mulf %378, %379 : vector<8x8xf32>
    %cst_155 = arith.constant -1.000000e+30 : f32
    %381 = vector.broadcast %cst_155 : f32 to vector<8x8xf32>
    %382 = arith.select %15, %380, %381 : vector<8x8xi1>, vector<8x8xf32>
    %cst_156 = arith.constant dense<0xFF800000> : vector<8xf32>
    %383 = vector.multi_reduction <maximumf>, %382, %cst_156 [1] : vector<8x8xf32> to vector<8xf32>
    %384 = vector.shape_cast %383 : vector<8xf32> to vector<8x1xf32>
    %385 = vector.broadcast %384 : vector<8x1xf32> to vector<8x8xf32>
    %386 = arith.subf %382, %385 : vector<8x8xf32>
    %387 = math.exp %386 : vector<8x8xf32>
    %cst_157 = arith.constant dense<0.000000e+00> : vector<8xf32>
    %388 = vector.multi_reduction <add>, %387, %cst_157 [1] : vector<8x8xf32> to vector<8xf32>
    %389 = vector.shape_cast %388 : vector<8xf32> to vector<8x1xf32>
    %390 = vector.broadcast %389 : vector<8x1xf32> to vector<8x8xf32>
    %391 = arith.divf %387, %390 : vector<8x8xf32>
    %392 = arith.truncf %391 : vector<8x8xf32> to vector<8x8xbf16>
    %cst_158 = arith.constant dense<0.000000e+00> : vector<8x8xf32>
    %393 = tpu.matmul %392, %377, %cst_158 {dimension_numbers = #tpu.dot_dimension_numbers<[1], [0], [0], [1], [0, 0, 1, 1], [], []>} : vector<8x8xbf16>, vector<8x8xbf16>, vector<8x8xf32> -> vector<8x8xf32>
    %394 = arith.truncf %393 : vector<8x8xf32> to vector<8x8xbf16>
    %c0_159 = arith.constant 0 : index
    %c56_160 = arith.constant 56 : index
    %c0_161 = arith.constant 0 : index
    %395 = vector.load %arg7[%c0_159, %c56_160, %c0_161] : memref<1x64x32xbf16, #tpu.memory_space<vmem>>, vector<1x8x32xbf16>
    %396 = vector.shape_cast %395 : vector<1x8x32xbf16> to vector<8x32xbf16>
    %cst_162 = arith.constant dense<0.000000e+00> : vector<8x32xf32>
    %397 = tpu.matmul %394, %396, %cst_162 {dimension_numbers = #tpu.dot_dimension_numbers<[1], [0], [0], [1], [0, 0, 1, 1], [], []>} : vector<8x8xbf16>, vector<8x32xbf16>, vector<8x32xf32> -> vector<8x32xf32>
    %398 = arith.addf %374, %397 : vector<8x32xf32>
    %c8_163 = arith.constant 8 : index
    %c0_164 = arith.constant 0 : index
    %399 = vector.load %arg19[%c8_163, %c0_164] : memref<16x32xf32, #tpu.memory_space<vmem>>, vector<8x32xf32>
    tpu.vector_store %arg19[%c8_163, %c0_164], %398 {strides = array<i32>} : memref<16x32xf32, #tpu.memory_space<vmem>>, vector<8x32xf32>,
    %c0_165 = arith.constant 0 : index
    %c0_166 = arith.constant 0 : index
    %400 = vector.load %arg19[%c0_165, %c0_166] : memref<16x32xf32, #tpu.memory_space<vmem>>, vector<16x32xf32>
    %c0_167 = arith.constant 0 : index
    %c0_168 = arith.constant 0 : index
    %c0_169 = arith.constant 0 : index
    %401 = vector.load %arg8[%c0_167, %c0_168, %c0_169] : memref<1x1x32xf32, #tpu.memory_space<vmem>>, vector<1x1x32xf32>
    %402 = vector.shape_cast %401 : vector<1x1x32xf32> to vector<1x32xf32>
    %403 = vector.broadcast %402 : vector<1x32xf32> to vector<16x32xf32>
    %404 = arith.addf %400, %403 : vector<16x32xf32>
    %405 = arith.addf %404, %3 : vector<16x32xf32>
    %cst_170 = arith.constant dense<0.000000e+00> : vector<16xf32>
    %406 = vector.multi_reduction <add>, %405, %cst_170 [1] : vector<16x32xf32> to vector<16xf32>
    %407 = vector.shape_cast %406 : vector<16xf32> to vector<16x1xf32>
    %cst_171 = arith.constant 3.200000e+01 : f32
    %408 = vector.broadcast %cst_171 : f32 to vector<16x1xf32>
    %409 = arith.divf %407, %408 : vector<16x1xf32>
    %410 = vector.broadcast %409 : vector<16x1xf32> to vector<16x32xf32>
    %411 = arith.subf %405, %410 : vector<16x32xf32>
    %412 = vector.broadcast %409 : vector<16x1xf32> to vector<16x32xf32>
    %413 = arith.subf %405, %412 : vector<16x32xf32>
    %414 = arith.mulf %411, %413 : vector<16x32xf32>
    %cst_172 = arith.constant dense<0.000000e+00> : vector<16xf32>
    %415 = vector.multi_reduction <add>, %414, %cst_172 [1] : vector<16x32xf32> to vector<16xf32>
    %416 = vector.shape_cast %415 : vector<16xf32> to vector<16x1xf32>
    %cst_173 = arith.constant 3.200000e+01 : f32
    %417 = vector.broadcast %cst_173 : f32 to vector<16x1xf32>
    %418 = arith.divf %416, %417 : vector<16x1xf32>
    %419 = vector.broadcast %409 : vector<16x1xf32> to vector<16x32xf32>
    %420 = arith.subf %405, %419 : vector<16x32xf32>
    %cst_174 = arith.constant 9.99999974E-6 : f32
    %421 = vector.broadcast %cst_174 : f32 to vector<16x1xf32>
    %422 = arith.addf %418, %421 : vector<16x1xf32>
    %423 = math.rsqrt %422 : vector<16x1xf32>
    %424 = vector.broadcast %423 : vector<16x1xf32> to vector<16x32xf32>
    %425 = arith.mulf %420, %424 : vector<16x32xf32>
    %c0_175 = arith.constant 0 : index
    %c0_176 = arith.constant 0 : index
    %c0_177 = arith.constant 0 : index
    %426 = vector.load %arg9[%c0_175, %c0_176, %c0_177] : memref<1x1x32xf32, #tpu.memory_space<vmem>>, vector<1x1x32xf32>
    %427 = vector.shape_cast %426 : vector<1x1x32xf32> to vector<1x32xf32>
    %428 = vector.broadcast %427 : vector<1x32xf32> to vector<16x32xf32>
    %429 = arith.mulf %425, %428 : vector<16x32xf32>
    %c0_178 = arith.constant 0 : index
    %c0_179 = arith.constant 0 : index
    %c0_180 = arith.constant 0 : index
    %430 = vector.load %arg10[%c0_178, %c0_179, %c0_180] : memref<1x1x32xf32, #tpu.memory_space<vmem>>, vector<1x1x32xf32>
    %431 = vector.shape_cast %430 : vector<1x1x32xf32> to vector<1x32xf32>
    %432 = vector.broadcast %431 : vector<1x32xf32> to vector<16x32xf32>
    %433 = arith.addf %429, %432 : vector<16x32xf32>
    %434 = arith.truncf %433 : vector<16x32xf32> to vector<16x32xbf16>
    %c0_181 = arith.constant 0 : index
    %c0_182 = arith.constant 0 : index
    %c0_183 = arith.constant 0 : index
    %435 = vector.load %arg11[%c0_181, %c0_182, %c0_183] : memref<1x32x128xbf16, #tpu.memory_space<vmem>>, vector<1x32x128xbf16>
    %436 = vector.shape_cast %435 : vector<1x32x128xbf16> to vector<32x128xbf16>
    %cst_184 = arith.constant dense<0.000000e+00> : vector<16x128xf32>
    %437 = tpu.matmul %434, %436, %cst_184 {dimension_numbers = #tpu.dot_dimension_numbers<[1], [0], [0], [1], [0, 0, 1, 1], [], []>} : vector<16x32xbf16>, vector<32x128xbf16>, vector<16x128xf32> -> vector<16x128xf32>
    %c0_185 = arith.constant 0 : index
    %c0_186 = arith.constant 0 : index
    %c0_187 = arith.constant 0 : index
    %438 = vector.load %arg12[%c0_185, %c0_186, %c0_187] : memref<1x1x128xf32, #tpu.memory_space<vmem>>, vector<1x1x128xf32>
    %439 = vector.shape_cast %438 : vector<1x1x128xf32> to vector<1x128xf32>
    %440 = vector.broadcast %439 : vector<1x128xf32> to vector<16x128xf32>
    %441 = arith.addf %437, %440 : vector<16x128xf32>
    %cst_188 = arith.constant 0.000000e+00 : f32
    %442 = vector.broadcast %cst_188 : f32 to vector<16x128xf32>
    %443 = arith.maximumf %441, %442 : vector<16x128xf32>
    %444 = arith.truncf %443 : vector<16x128xf32> to vector<16x128xbf16>
    %c0_189 = arith.constant 0 : index
    %c0_190 = arith.constant 0 : index
    %c0_191 = arith.constant 0 : index
    %445 = vector.load %arg13[%c0_189, %c0_190, %c0_191] : memref<1x128x32xbf16, #tpu.memory_space<vmem>>, vector<1x128x32xbf16>
    %446 = vector.shape_cast %445 : vector<1x128x32xbf16> to vector<128x32xbf16>
    %cst_192 = arith.constant dense<0.000000e+00> : vector<16x32xf32>
    %447 = tpu.matmul %444, %446, %cst_192 {dimension_numbers = #tpu.dot_dimension_numbers<[1], [0], [0], [1], [0, 0, 1, 1], [], []>} : vector<16x128xbf16>, vector<128x32xbf16>, vector<16x32xf32> -> vector<16x32xf32>
    %c0_193 = arith.constant 0 : index
    %c0_194 = arith.constant 0 : index
    %c0_195 = arith.constant 0 : index
    %448 = vector.load %arg14[%c0_193, %c0_194, %c0_195] : memref<1x1x32xf32, #tpu.memory_space<vmem>>, vector<1x1x32xf32>
    %449 = vector.shape_cast %448 : vector<1x1x32xf32> to vector<1x32xf32>
    %450 = vector.broadcast %449 : vector<1x32xf32> to vector<16x32xf32>
    %451 = arith.addf %447, %450 : vector<16x32xf32>
    %452 = arith.addf %451, %433 : vector<16x32xf32>
    %cst_196 = arith.constant dense<0.000000e+00> : vector<16xf32>
    %453 = vector.multi_reduction <add>, %452, %cst_196 [1] : vector<16x32xf32> to vector<16xf32>
    %454 = vector.shape_cast %453 : vector<16xf32> to vector<16x1xf32>
    %cst_197 = arith.constant 3.200000e+01 : f32
    %455 = vector.broadcast %cst_197 : f32 to vector<16x1xf32>
    %456 = arith.divf %454, %455 : vector<16x1xf32>
    %457 = vector.broadcast %456 : vector<16x1xf32> to vector<16x32xf32>
    %458 = arith.subf %452, %457 : vector<16x32xf32>
    %459 = vector.broadcast %456 : vector<16x1xf32> to vector<16x32xf32>
    %460 = arith.subf %452, %459 : vector<16x32xf32>
    %461 = arith.mulf %458, %460 : vector<16x32xf32>
    %cst_198 = arith.constant dense<0.000000e+00> : vector<16xf32>
    %462 = vector.multi_reduction <add>, %461, %cst_198 [1] : vector<16x32xf32> to vector<16xf32>
    %463 = vector.shape_cast %462 : vector<16xf32> to vector<16x1xf32>
    %cst_199 = arith.constant 3.200000e+01 : f32
    %464 = vector.broadcast %cst_199 : f32 to vector<16x1xf32>
    %465 = arith.divf %463, %464 : vector<16x1xf32>
    %466 = vector.broadcast %456 : vector<16x1xf32> to vector<16x32xf32>
    %467 = arith.subf %452, %466 : vector<16x32xf32>
    %cst_200 = arith.constant 9.99999974E-6 : f32
    %468 = vector.broadcast %cst_200 : f32 to vector<16x1xf32>
    %469 = arith.addf %465, %468 : vector<16x1xf32>
    %470 = math.rsqrt %469 : vector<16x1xf32>
    %471 = vector.broadcast %470 : vector<16x1xf32> to vector<16x32xf32>
    %472 = arith.mulf %467, %471 : vector<16x32xf32>
    %c0_201 = arith.constant 0 : index
    %c0_202 = arith.constant 0 : index
    %c0_203 = arith.constant 0 : index
    %473 = vector.load %arg15[%c0_201, %c0_202, %c0_203] : memref<1x1x32xf32, #tpu.memory_space<vmem>>, vector<1x1x32xf32>
    %474 = vector.shape_cast %473 : vector<1x1x32xf32> to vector<1x32xf32>
    %475 = vector.broadcast %474 : vector<1x32xf32> to vector<16x32xf32>
    %476 = arith.mulf %472, %475 : vector<16x32xf32>
    %c0_204 = arith.constant 0 : index
    %c0_205 = arith.constant 0 : index
    %c0_206 = arith.constant 0 : index
    %477 = vector.load %arg16[%c0_204, %c0_205, %c0_206] : memref<1x1x32xf32, #tpu.memory_space<vmem>>, vector<1x1x32xf32>
    %478 = vector.shape_cast %477 : vector<1x1x32xf32> to vector<1x32xf32>
    %479 = vector.broadcast %478 : vector<1x32xf32> to vector<16x32xf32>
    %480 = arith.addf %476, %479 : vector<16x32xf32>
    %c0_207 = arith.constant 0 : index
    %c0_208 = arith.constant 0 : index
    %481 = vector.load %arg18[%c0_207, %c0_208] : memref<16x32xf32, #tpu.memory_space<vmem>>, vector<16x32xf32>
    tpu.vector_store %arg18[%c0_207, %c0_208], %480 {strides = array<i32>} : memref<16x32xf32, #tpu.memory_space<vmem>>, vector<16x32xf32>,
    %c5_i32 = arith.constant 5 : i32
    %482 = arith.cmpi eq, %arg0, %c5_i32 : i32
    %483 = arith.extui %482 : i1 to i32
    %c0_i32_209 = arith.constant 0 : i32
    %484 = arith.cmpi ne, %483, %c0_i32_209 : i32
    scf.if %484 {
      %485 = arith.truncf %480 : vector<16x32xf32> to vector<16x32xbf16>
      %c0_210 = arith.constant 0 : index
      %c0_211 = arith.constant 0 : index
      %486 = vector.load %arg3[%c0_210, %c0_211] : memref<32x64xbf16, #tpu.memory_space<vmem>>, vector<32x64xbf16>
      %cst_212 = arith.constant dense<0.000000e+00> : vector<16x64xf32>
      %487 = tpu.matmul %485, %486, %cst_212 {dimension_numbers = #tpu.dot_dimension_numbers<[1], [0], [0], [1], [0, 0, 1, 1], [], []>} : vector<16x32xbf16>, vector<32x64xbf16>, vector<16x64xf32> -> vector<16x64xf32>
      %c0_213 = arith.constant 0 : index
      %c0_214 = arith.constant 0 : index
      %488 = vector.load %arg4[%c0_213, %c0_214] : memref<1x64xf32, #tpu.memory_space<vmem>>, vector<1x64xf32>
      %489 = vector.broadcast %488 : vector<1x64xf32> to vector<16x64xf32>
      %490 = arith.addf %487, %489 : vector<16x64xf32>
      %cst_215 = arith.constant dense<0xFF800000> : vector<16xf32>
      %491 = vector.multi_reduction <maximumf>, %490, %cst_215 [1] : vector<16x64xf32> to vector<16xf32>
      %492 = vector.shape_cast %491 : vector<16xf32> to vector<16x1xf32>
      %493 = vector.broadcast %492 : vector<16x1xf32> to vector<16x64xf32>
      %494 = arith.subf %490, %493 : vector<16x64xf32>
      %495 = math.exp %494 : vector<16x64xf32>
      %cst_216 = arith.constant dense<0.000000e+00> : vector<16xf32>
      %496 = vector.multi_reduction <add>, %495, %cst_216 [1] : vector<16x64xf32> to vector<16xf32>
      %497 = vector.shape_cast %496 : vector<16xf32> to vector<16x1xf32>
      %498 = math.log %497 : vector<16x1xf32>
      %499 = arith.addf %492, %498 : vector<16x1xf32>
      %c0_217 = arith.constant 0 : index
      %c0_218 = arith.constant 0 : index
      %500 = vector.load %arg2[%c0_217, %c0_218] : memref<16x1xi32, #tpu.memory_space<vmem>>, vector<16x1xi32>
      %501 = tpu.iota {dimensions = array<i32: 1>} : vector<16x64xi32>
      %502 = vector.broadcast %500 : vector<16x1xi32> to vector<16x64xi32>
      %503 = arith.cmpi eq, %501, %502 : vector<16x64xi32>
      %cst_219 = arith.constant 0.000000e+00 : f32
      %504 = vector.broadcast %cst_219 : f32 to vector<16x64xf32>
      %505 = arith.select %503, %490, %504 : vector<16x64xi1>, vector<16x64xf32>
      %cst_220 = arith.constant dense<0.000000e+00> : vector<16xf32>
      %506 = vector.multi_reduction <add>, %505, %cst_220 [1] : vector<16x64xf32> to vector<16xf32>
      %507 = vector.shape_cast %506 : vector<16xf32> to vector<16x1xf32>
      %c0_i32_221 = arith.constant 0 : i32
      %508 = vector.broadcast %c0_i32_221 : i32 to vector<16x1xi32>
      %509 = arith.cmpi ne, %500, %508 : vector<16x1xi32>
      %510 = arith.extui %509 : vector<16x1xi1> to vector<16x1xi32>
      %511 = arith.sitofp %510 : vector<16x1xi32> to vector<16x1xf32>
      %512 = arith.subf %499, %507 : vector<16x1xf32>
      %513 = arith.mulf %512, %511 : vector<16x1xf32>
      %cst_222 = arith.constant dense<0.000000e+00> : vector<1xf32>
      %514 = vector.multi_reduction <add>, %513, %cst_222 [0] : vector<16x1xf32> to vector<1xf32>
      %515 = vector.shape_cast %514 : vector<1xf32> to vector<1x1xf32>
      %cst_223 = arith.constant dense<0.000000e+00> : vector<1xf32>
      %516 = vector.multi_reduction <add>, %511, %cst_223 [0] : vector<16x1xf32> to vector<1xf32>
      %517 = vector.shape_cast %516 : vector<1xf32> to vector<1x1xf32>
      %518 = arith.divf %515, %517 : vector<1x1xf32>
      %c0_224 = arith.constant 0 : index
      %c0_225 = arith.constant 0 : index
      %519 = vector.load %arg17[%c0_224, %c0_225] : memref<1x1xf32, #tpu.memory_space<vmem>>, vector<1x1xf32>
      tpu.vector_store %arg17[%c0_224, %c0_225], %518 {strides = array<i32>} : memref<1x1xf32, #tpu.memory_space<vmem>>, vector<1x1xf32>,
    } else {
    }
    return
  }
  func.func @transform_0(%arg0: i32) -> (i32, i32) {
    %c0_i32 = arith.constant 0 : i32
    %c0_i32_0 = arith.constant 0 : i32
    %c0_i32_1 = arith.constant 0 : i32
    return %c0_i32, %c0_i32_0 : i32, i32
  }
  func.func @transform_1(%arg0: i32) -> (i32, i32) {
    %c0_i32 = arith.constant 0 : i32
    %c0_i32_0 = arith.constant 0 : i32
    %c0_i32_1 = arith.constant 0 : i32
    return %c0_i32, %c0_i32_0 : i32, i32
  }
  func.func @transform_2(%arg0: i32) -> (i32, i32) {
    %c0_i32 = arith.constant 0 : i32
    %c0_i32_0 = arith.constant 0 : i32
    %c0_i32_1 = arith.constant 0 : i32
    return %c0_i32, %c0_i32_0 : i32, i32
  }
  func.func @transform_3(%arg0: i32) -> (i32, i32) {
    %c0_i32 = arith.constant 0 : i32
    %c0_i32_0 = arith.constant 0 : i32
    %c0_i32_1 = arith.constant 0 : i32
    return %c0_i32, %c0_i32_0 : i32, i32
  }
  func.func @transform_4(%arg0: i32) -> (i32, i32, i32) {
    %c0_i32 = arith.constant 0 : i32
    %c0_i32_0 = arith.constant 0 : i32
    %c0_i32_1 = arith.constant 0 : i32
    return %arg0, %c0_i32, %c0_i32_0 : i32, i32, i32
  }
  func.func @transform_5(%arg0: i32) -> (i32, i32, i32) {
    %c0_i32 = arith.constant 0 : i32
    %c0_i32_0 = arith.constant 0 : i32
    %c0_i32_1 = arith.constant 0 : i32
    return %arg0, %c0_i32, %c0_i32_0 : i32, i32, i32
  }
  func.func @transform_6(%arg0: i32) -> (i32, i32, i32) {
    %c0_i32 = arith.constant 0 : i32
    %c0_i32_0 = arith.constant 0 : i32
    %c0_i32_1 = arith.constant 0 : i32
    return %arg0, %c0_i32, %c0_i32_0 : i32, i32, i32
  }
  func.func @transform_7(%arg0: i32) -> (i32, i32, i32) {
    %c0_i32 = arith.constant 0 : i32
    %c0_i32_0 = arith.constant 0 : i32
    %c0_i32_1 = arith.constant 0 : i32
    return %arg0, %c0_i32, %c0_i32_0 : i32, i32, i32
  }
  func.func @transform_8(%arg0: i32) -> (i32, i32, i32) {
    %c0_i32 = arith.constant 0 : i32
    %c0_i32_0 = arith.constant 0 : i32
    %c0_i32_1 = arith.constant 0 : i32
    return %arg0, %c0_i32, %c0_i32_0 : i32, i32, i32
  }
  func.func @transform_9(%arg0: i32) -> (i32, i32, i32) {
    %c0_i32 = arith.constant 0 : i32
    %c0_i32_0 = arith.constant 0 : i32
    %c0_i32_1 = arith.constant 0 : i32
    return %arg0, %c0_i32, %c0_i32_0 : i32, i32, i32
  }
  func.func @transform_10(%arg0: i32) -> (i32, i32, i32) {
    %c0_i32 = arith.constant 0 : i32
    %c0_i32_0 = arith.constant 0 : i32
    %c0_i32_1 = arith.constant 0 : i32
    return %arg0, %c0_i32, %c0_i32_0 : i32, i32, i32
  }
  func.func @transform_11(%arg0: i32) -> (i32, i32, i32) {
    %c0_i32 = arith.constant 0 : i32
    %c0_i32_0 = arith.constant 0 : i32
    %c0_i32_1 = arith.constant 0 : i32
    return %arg0, %c0_i32, %c0_i32_0 : i32, i32, i32
  }
  func.func @transform_12(%arg0: i32) -> (i32, i32, i32) {
    %c0_i32 = arith.constant 0 : i32
    %c0_i32_0 = arith.constant 0 : i32
    %c0_i32_1 = arith.constant 0 : i32
    return %arg0, %c0_i32, %c0_i32_0 : i32, i32, i32
  }
  func.func @transform_13(%arg0: i32) -> (i32, i32, i32) {
    %c0_i32 = arith.constant 0 : i32
    %c0_i32_0 = arith.constant 0 : i32
    %c0_i32_1 = arith.constant 0 : i32
    return %arg0, %c0_i32, %c0_i32_0 : i32, i32, i32
  }
  func.func @transform_14(%arg0: i32) -> (i32, i32, i32) {
    %c0_i32 = arith.constant 0 : i32
    %c0_i32_0 = arith.constant 0 : i32
    %c0_i32_1 = arith.constant 0 : i32
    return %arg0, %c0_i32, %c0_i32_0 : i32, i32, i32
  }
  func.func @transform_15(%arg0: i32) -> (i32, i32, i32) {
    %c0_i32 = arith.constant 0 : i32
    %c0_i32_0 = arith.constant 0 : i32
    %c0_i32_1 = arith.constant 0 : i32
    return %arg0, %c0_i32, %c0_i32_0 : i32, i32, i32
  }
  func.func @transform_16(%arg0: i32) -> (i32, i32) {
    %c0_i32 = arith.constant 0 : i32
    %c0_i32_0 = arith.constant 0 : i32
    %c0_i32_1 = arith.constant 0 : i32
    return %c0_i32, %c0_i32_0 : i32, i32
  }
}

</mosaic_0001>

<llo_original>
// kernel: model_forward.1
$region0: #{model_forward.1}
  #allocation0 [shape = 'u32[]', space=smem, size = 0x4, offset = 0x4, fixed_abs, tag = 'smem constant byte address 0x4 - core index']
  #allocation1 [shape = 'u32[144,128]{1,0:T(1,128)}', space=vmem, size = 0x12000, scoped, tag = 'internal scratch']
  #allocation2 [shape = 'f32[16,32]{1,0:T(8,128)}', space=vmem, size = 0x2000, scoped, tag = 'scratch operand']
  #allocation3 [shape = 'f32[16,32]{1,0:T(8,128)}', space=vmem, size = 0x2000, scoped, tag = 'scratch operand']
  %s0 = inlined_call_operand.vmem [shape: f32[16,32], index: 0, kind: input, shape index: {}]
  %s1 = inlined_call_operand.vmem [shape: s32[16,1], index: 1, kind: input, shape index: {}]
  %s2 = inlined_call_operand.vmem [shape: bf16[32,64], index: 2, kind: input, shape index: {}]
  %s3 = inlined_call_operand.vmem [shape: f32[1,64], index: 3, kind: input, shape index: {}]
  %s4 = inlined_call_operand.vmem [shape: bf16[6,32,192], index: 4, kind: input, shape index: {}]
  %s5 = inlined_call_operand.vmem [shape: f32[6,1,192], index: 5, kind: input, shape index: {}]
  %s6 = inlined_call_operand.vmem [shape: bf16[6,64,32], index: 6, kind: input, shape index: {}]
  %s7 = inlined_call_operand.vmem [shape: f32[6,1,32], index: 7, kind: input, shape index: {}]
  %s8 = inlined_call_operand.vmem [shape: f32[6,1,32], index: 8, kind: input, shape index: {}]
  %s9 = inlined_call_operand.vmem [shape: f32[6,1,32], index: 9, kind: input, shape index: {}]
  %s10 = inlined_call_operand.vmem [shape: bf16[6,32,128], index: 10, kind: input, shape index: {}]
  %s11 = inlined_call_operand.vmem [shape: f32[6,1,128], index: 11, kind: input, shape index: {}]
  %s12 = inlined_call_operand.vmem [shape: bf16[6,128,32], index: 12, kind: input, shape index: {}]
  %s13 = inlined_call_operand.vmem [shape: f32[6,1,32], index: 13, kind: input, shape index: {}]
  %s14 = inlined_call_operand.vmem [shape: f32[6,1,32], index: 14, kind: input, shape index: {}]
  %s15 = inlined_call_operand.vmem [shape: f32[6,1,32], index: 15, kind: input, shape index: {}]
  %s16 = inlined_call_operand.hbm [shape: f32[1,1], index: 16, kind: output, shape index: {}]
  %s17 = sld [smem:[#allocation0]]
  $region105: #{model_forward.1} parent=0
    _
  %s19 = ssub.s32 1, %s17
  %s20 = scalar_select 0, %s19, %s17
  $region1: #{model_forward.1} parent=0
    #allocation4 [shape = 'u8[512]{0}', space=vmem, size = 0x400, scoped, tag = 'output window, operand 0, single buffered']
    #allocation5 [shape = 's32[2]{0}', space=sflag, size = 0x8, scoped, tag = 'scoped memory for model_forward.1']
    %21 = vsyncpa [#allocation5], 0
    loop: start=0, step=1, limit=8
    $region2: #{model_forward.1} parent=1 // loop_pre_header
      _
    $region3: #{model_forward.1} parent=1 // loop_header
      %s23 = sphi 0, %s27
      %p24 = scmp.ge.s32.totalorder %s23, 8
      %s31 = sphi 0, %s31
      %s33 = sphi 0, %s31
      %s34 = sphi 0, %s33
      %s48 = sphi 0, %s34
      %s52 = sphi 0, %s52
      %s54 = sphi 0, %s52
      %s55 = sphi 0, %s54
      %s69 = sphi 0, %s55
      %s73 = sphi 0, %s73
      %s75 = sphi 0, %s73
      %s76 = sphi 0, %s75
      %s90 = sphi 0, %s76
      %s94 = sphi 0, %s94
      %s96 = sphi 0, %s94
      %s97 = sphi 0, %s96
      %s111 = sphi 0, %s97
      %s117 = sphi 0, %s119
      %s120 = sphi 0, %s117
      %s121 = sphi 0, %s120
      %s137 = sphi 0, %s121
      %s143 = sphi 0, %s145
      %s146 = sphi 0, %s143
      %s147 = sphi 0, %s146
      %s163 = sphi 0, %s147
      %s169 = sphi 0, %s171
      %s172 = sphi 0, %s169
      %s173 = sphi 0, %s172
      %s189 = sphi 0, %s173
      %s195 = sphi 0, %s197
      %s198 = sphi 0, %s195
      %s199 = sphi 0, %s198
      %s215 = sphi 0, %s199
      %s221 = sphi 0, %s223
      %s224 = sphi 0, %s221
      %s225 = sphi 0, %s224
      %s241 = sphi 0, %s225
      %s247 = sphi 0, %s249
      %s250 = sphi 0, %s247
      %s251 = sphi 0, %s250
      %s267 = sphi 0, %s251
      %s273 = sphi 0, %s275
      %s276 = sphi 0, %s273
      %s277 = sphi 0, %s276
      %s293 = sphi 0, %s277
      %s299 = sphi 0, %s301
      %s302 = sphi 0, %s299
      %s303 = sphi 0, %s302
      %s319 = sphi 0, %s303
      %s325 = sphi 0, %s327
      %s328 = sphi 0, %s325
      %s329 = sphi 0, %s328
      %s345 = sphi 0, %s329
      %s351 = sphi 0, %s353
      %s354 = sphi 0, %s351
      %s355 = sphi 0, %s354
      %s371 = sphi 0, %s355
      %s377 = sphi 0, %s379
      %s380 = sphi 0, %s377
      %s381 = sphi 0, %s380
      %s397 = sphi 0, %s381
      %s403 = sphi 0, %s405
      %s406 = sphi 0, %s403
      %s407 = sphi 0, %s406
      %s423 = sphi 0, %s407
      %s427 = sphi 0, %s427
      %s429 = sphi 0, %s427
      %s430 = sphi 0, %s429
      %s444 = sphi 0, %s430
    $region4: #{model_forward.1} parent=1 // loop_header_branch
      %26 = sbr.rel (%p24) target = $region8
    $region5: #{model_forward.1} parent=1 // loop_body
      %s28 = ssub.s32 %s23, 1
      %s29 = ssub.s32 %s23, 2
      %s30 = sadd.s32 %s23, 1
      %s32 = sadd.s32 %s31, 1
      %p35 = scmp.eq.s32.totalorder %s23, 5
      %p36 = scmp.ne.s32.totalorder %s31, %s33
      %p37 = scmp.eq.s32.totalorder %s23, 0
      %p38 = por %p36, %p37
      %p39 = scmp.ne.s32.totalorder %s31, %s33
      %p40 = scmp.eq.s32.totalorder %s28, 5
      %p41 = por %p39, %p40
      %p42 = scmp.ne.s32.totalorder %s33, %s34
      %p43 = scmp.eq.s32.totalorder %s28, 0
      %p44 = por %p42, %p43
      %p45 = scmp.ne.s32.totalorder %s33, %s34
      %p46 = scmp.eq.s32.totalorder %s29, 5
      %p47 = por %p45, %p46
      %p49 = scmp.ne.s32.totalorder %s34, %s48
      %p50 = scmp.eq.s32.totalorder %s29, 0
      %p51 = por %p49, %p50
      %s53 = sadd.s32 %s52, 1
      %p56 = scmp.eq.s32.totalorder %s23, 5
      %p57 = scmp.ne.s32.totalorder %s52, %s54
      %p58 = scmp.eq.s32.totalorder %s23, 0
      %p59 = por %p57, %p58
      %p60 = scmp.ne.s32.totalorder %s52, %s54
      %p61 = scmp.eq.s32.totalorder %s28, 5
      %p62 = por %p60, %p61
      %p63 = scmp.ne.s32.totalorder %s54, %s55
      %p64 = scmp.eq.s32.totalorder %s28, 0
      %p65 = por %p63, %p64
      %p66 = scmp.ne.s32.totalorder %s54, %s55
      %p67 = scmp.eq.s32.totalorder %s29, 5
      %p68 = por %p66, %p67
      %p70 = scmp.ne.s32.totalorder %s55, %s69
      %p71 = scmp.eq.s32.totalorder %s29, 0
      %p72 = por %p70, %p71
      %s74 = sadd.s32 %s73, 1
      %p77 = scmp.eq.s32.totalorder %s23, 5
      %p78 = scmp.ne.s32.totalorder %s73, %s75
      %p79 = scmp.eq.s32.totalorder %s23, 0
      %p80 = por %p78, %p79
      %p81 = scmp.ne.s32.totalorder %s73, %s75
      %p82 = scmp.eq.s32.totalorder %s28, 5
      %p83 = por %p81, %p82
      %p84 = scmp.ne.s32.totalorder %s75, %s76
      %p85 = scmp.eq.s32.totalorder %s28, 0
      %p86 = por %p84, %p85
      %p87 = scmp.ne.s32.totalorder %s75, %s76
      %p88 = scmp.eq.s32.totalorder %s29, 5
      %p89 = por %p87, %p88
      %p91 = scmp.ne.s32.totalorder %s76, %s90
      %p92 = scmp.eq.s32.totalorder %s29, 0
      %p93 = por %p91, %p92
      %s95 = sadd.s32 %s94, 1
      %p98 = scmp.eq.s32.totalorder %s23, 5
      %p99 = scmp.ne.s32.totalorder %s94, %s96
      %p100 = scmp.eq.s32.totalorder %s23, 0
      %p101 = por %p99, %p100
      %p102 = scmp.ne.s32.totalorder %s94, %s96
      %p103 = scmp.eq.s32.totalorder %s28, 5
      %p104 = por %p102, %p103
      %p105 = scmp.ne.s32.totalorder %s96, %s97
      %p106 = scmp.eq.s32.totalorder %s28, 0
      %p107 = por %p105, %p106
      %p108 = scmp.ne.s32.totalorder %s96, %s97
      %p109 = scmp.eq.s32.totalorder %s29, 5
      %p110 = por %p108, %p109
      %p112 = scmp.ne.s32.totalorder %s97, %s111
      %p113 = scmp.eq.s32.totalorder %s29, 0
      %p114 = por %p112, %p113
      %s115 = ssub.s32 %s23, %s30
      %p116 = scmp.eq.s32.totalorder %s115, 0
      %s118 = sadd.s32 %s117, 1
      %s119 = scalar_select %p116, %s117, %s118
      %p122 = pneg %p116
      %p123 = scmp.eq.s32.totalorder %s23, 5
      %p124 = por %p122, %p123
      %p125 = scmp.ne.s32.totalorder %s117, %s120
      %p126 = scmp.eq.s32.totalorder %s23, 0
      %p127 = por %p125, %p126
      %p128 = scmp.ne.s32.totalorder %s117, %s120
      %p129 = scmp.eq.s32.totalorder %s28, 5
      %p130 = por %p128, %p129
      %p131 = scmp.ne.s32.totalorder %s120, %s121
      %p132 = scmp.eq.s32.totalorder %s28, 0
      %p133 = por %p131, %p132
      %p134 = scmp.ne.s32.totalorder %s120, %s121
      %p135 = scmp.eq.s32.totalorder %s29, 5
      %p136 = por %p134, %p135
      %p138 = scmp.ne.s32.totalorder %s121, %s137
      %p139 = scmp.eq.s32.totalorder %s29, 0
      %p140 = por %p138, %p139
      %s141 = ssub.s32 %s23, %s30
      %p142 = scmp.eq.s32.totalorder %s141, 0
      %s144 = sadd.s32 %s143, 1
      %s145 = scalar_select %p142, %s143, %s144
      %p148 = pneg %p142
      %p149 = scmp.eq.s32.totalorder %s23, 5
      %p150 = por %p148, %p149
      %p151 = scmp.ne.s32.totalorder %s143, %s146
      %p152 = scmp.eq.s32.totalorder %s23, 0
      %p153 = por %p151, %p152
      %p154 = scmp.ne.s32.totalorder %s143, %s146
      %p155 = scmp.eq.s32.totalorder %s28, 5
      %p156 = por %p154, %p155
      %p157 = scmp.ne.s32.totalorder %s146, %s147
      %p158 = scmp.eq.s32.totalorder %s28, 0
      %p159 = por %p157, %p158
      %p160 = scmp.ne.s32.totalorder %s146, %s147
      %p161 = scmp.eq.s32.totalorder %s29, 5
      %p162 = por %p160, %p161
      %p164 = scmp.ne.s32.totalorder %s147, %s163
      %p165 = scmp.eq.s32.totalorder %s29, 0
      %p166 = por %p164, %p165
      %s167 = ssub.s32 %s23, %s30
      %p168 = scmp.eq.s32.totalorder %s167, 0
      %s170 = sadd.s32 %s169, 1
      %s171 = scalar_select %p168, %s169, %s170
      %p174 = pneg %p168
      %p175 = scmp.eq.s32.totalorder %s23, 5
      %p176 = por %p174, %p175
      %p177 = scmp.ne.s32.totalorder %s169, %s172
      %p178 = scmp.eq.s32.totalorder %s23, 0
      %p179 = por %p177, %p178
      %p180 = scmp.ne.s32.totalorder %s169, %s172
      %p181 = scmp.eq.s32.totalorder %s28, 5
      %p182 = por %p180, %p181
      %p183 = scmp.ne.s32.totalorder %s172, %s173
      %p184 = scmp.eq.s32.totalorder %s28, 0
      %p185 = por %p183, %p184
      %p186 = scmp.ne.s32.totalorder %s172, %s173
      %p187 = scmp.eq.s32.totalorder %s29, 5
      %p188 = por %p186, %p187
      %p190 = scmp.ne.s32.totalorder %s173, %s189
      %p191 = scmp.eq.s32.totalorder %s29, 0
      %p192 = por %p190, %p191
      %s193 = ssub.s32 %s23, %s30
      %p194 = scmp.eq.s32.totalorder %s193, 0
      %s196 = sadd.s32 %s195, 1
      %s197 = scalar_select %p194, %s195, %s196
      %p200 = pneg %p194
      %p201 = scmp.eq.s32.totalorder %s23, 5
      %p202 = por %p200, %p201
      %p203 = scmp.ne.s32.totalorder %s195, %s198
      %p204 = scmp.eq.s32.totalorder %s23, 0
      %p205 = por %p203, %p204
      %p206 = scmp.ne.s32.totalorder %s195, %s198
      %p207 = scmp.eq.s32.totalorder %s28, 5
      %p208 = por %p206, %p207
      %p209 = scmp.ne.s32.totalorder %s198, %s199
      %p210 = scmp.eq.s32.totalorder %s28, 0
      %p211 = por %p209, %p210
      %p212 = scmp.ne.s32.totalorder %s198, %s199
      %p213 = scmp.eq.s32.totalorder %s29, 5
      %p214 = por %p212, %p213
      %p216 = scmp.ne.s32.totalorder %s199, %s215
      %p217 = scmp.eq.s32.totalorder %s29, 0
      %p218 = por %p216, %p217
      %s219 = ssub.s32 %s23, %s30
      %p220 = scmp.eq.s32.totalorder %s219, 0
      %s222 = sadd.s32 %s221, 1
      %s223 = scalar_select %p220, %s221, %s222
      %p226 = pneg %p220
      %p227 = scmp.eq.s32.totalorder %s23, 5
      %p228 = por %p226, %p227
      %p229 = scmp.ne.s32.totalorder %s221, %s224
      %p230 = scmp.eq.s32.totalorder %s23, 0
      %p231 = por %p229, %p230
      %p232 = scmp.ne.s32.totalorder %s221, %s224
      %p233 = scmp.eq.s32.totalorder %s28, 5
      %p234 = por %p232, %p233
      %p235 = scmp.ne.s32.totalorder %s224, %s225
      %p236 = scmp.eq.s32.totalorder %s28, 0
      %p237 = por %p235, %p236
      %p238 = scmp.ne.s32.totalorder %s224, %s225
      %p239 = scmp.eq.s32.totalorder %s29, 5
      %p240 = por %p238, %p239
      %p242 = scmp.ne.s32.totalorder %s225, %s241
      %p243 = scmp.eq.s32.totalorder %s29, 0
      %p244 = por %p242, %p243
      %s245 = ssub.s32 %s23, %s30
      %p246 = scmp.eq.s32.totalorder %s245, 0
      %s248 = sadd.s32 %s247, 1
      %s249 = scalar_select %p246, %s247, %s248
      %p252 = pneg %p246
      %p253 = scmp.eq.s32.totalorder %s23, 5
      %p254 = por %p252, %p253
      %p255 = scmp.ne.s32.totalorder %s247, %s250
      %p256 = scmp.eq.s32.totalorder %s23, 0
      %p257 = por %p255, %p256
      %p258 = scmp.ne.s32.totalorder %s247, %s250
      %p259 = scmp.eq.s32.totalorder %s28, 5
      %p260 = por %p258, %p259
      %p261 = scmp.ne.s32.totalorder %s250, %s251
      %p262 = scmp.eq.s32.totalorder %s28, 0
      %p263 = por %p261, %p262
      %p264 = scmp.ne.s32.totalorder %s250, %s251
      %p265 = scmp.eq.s32.totalorder %s29, 5
      %p266 = por %p264, %p265
      %p268 = scmp.ne.s32.totalorder %s251, %s267
      %p269 = scmp.eq.s32.totalorder %s29, 0
      %p270 = por %p268, %p269
      %s271 = ssub.s32 %s23, %s30
      %p272 = scmp.eq.s32.totalorder %s271, 0
      %s274 = sadd.s32 %s273, 1
      %s275 = scalar_select %p272, %s273, %s274
      %p278 = pneg %p272
      %p279 = scmp.eq.s32.totalorder %s23, 5
      %p280 = por %p278, %p279
      %p281 = scmp.ne.s32.totalorder %s273, %s276
      %p282 = scmp.eq.s32.totalorder %s23, 0
      %p283 = por %p281, %p282
      %p284 = scmp.ne.s32.totalorder %s273, %s276
      %p285 = scmp.eq.s32.totalorder %s28, 5
      %p286 = por %p284, %p285
      %p287 = scmp.ne.s32.totalorder %s276, %s277
      %p288 = scmp.eq.s32.totalorder %s28, 0
      %p289 = por %p287, %p288
      %p290 = scmp.ne.s32.totalorder %s276, %s277
      %p291 = scmp.eq.s32.totalorder %s29, 5
      %p292 = por %p290, %p291
      %p294 = scmp.ne.s32.totalorder %s277, %s293
      %p295 = scmp.eq.s32.totalorder %s29, 0
      %p296 = por %p294, %p295
      %s297 = ssub.s32 %s23, %s30
      %p298 = scmp.eq.s32.totalorder %s297, 0
      %s300 = sadd.s32 %s299, 1
      %s301 = scalar_select %p298, %s299, %s300
      %p304 = pneg %p298
      %p305 = scmp.eq.s32.totalorder %s23, 5
      %p306 = por %p304, %p305
      %p307 = scmp.ne.s32.totalorder %s299, %s302
      %p308 = scmp.eq.s32.totalorder %s23, 0
      %p309 = por %p307, %p308
      %p310 = scmp.ne.s32.totalorder %s299, %s302
      %p311 = scmp.eq.s32.totalorder %s28, 5
      %p312 = por %p310, %p311
      %p313 = scmp.ne.s32.totalorder %s302, %s303
      %p314 = scmp.eq.s32.totalorder %s28, 0
      %p315 = por %p313, %p314
      %p316 = scmp.ne.s32.totalorder %s302, %s303
      %p317 = scmp.eq.s32.totalorder %s29, 5
      %p318 = por %p316, %p317
      %p320 = scmp.ne.s32.totalorder %s303, %s319
      %p321 = scmp.eq.s32.totalorder %s29, 0
      %p322 = por %p320, %p321
      %s323 = ssub.s32 %s23, %s30
      %p324 = scmp.eq.s32.totalorder %s323, 0
      %s326 = sadd.s32 %s325, 1
      %s327 = scalar_select %p324, %s325, %s326
      %p330 = pneg %p324
      %p331 = scmp.eq.s32.totalorder %s23, 5
      %p332 = por %p330, %p331
      %p333 = scmp.ne.s32.totalorder %s325, %s328
      %p334 = scmp.eq.s32.totalorder %s23, 0
      %p335 = por %p333, %p334
      %p336 = scmp.ne.s32.totalorder %s325, %s328
      %p337 = scmp.eq.s32.totalorder %s28, 5
      %p338 = por %p336, %p337
      %p339 = scmp.ne.s32.totalorder %s328, %s329
      %p340 = scmp.eq.s32.totalorder %s28, 0
      %p341 = por %p339, %p340
      %p342 = scmp.ne.s32.totalorder %s328, %s329
      %p343 = scmp.eq.s32.totalorder %s29, 5
      %p344 = por %p342, %p343
      %p346 = scmp.ne.s32.totalorder %s329, %s345
      %p347 = scmp.eq.s32.totalorder %s29, 0
      %p348 = por %p346, %p347
      %s349 = ssub.s32 %s23, %s30
      %p350 = scmp.eq.s32.totalorder %s349, 0
      %s352 = sadd.s32 %s351, 1
      %s353 = scalar_select %p350, %s351, %s352
      %p356 = pneg %p350
      %p357 = scmp.eq.s32.totalorder %s23, 5
      %p358 = por %p356, %p357
      %p359 = scmp.ne.s32.totalorder %s351, %s354
      %p360 = scmp.eq.s32.totalorder %s23, 0
      %p361 = por %p359, %p360
      %p362 = scmp.ne.s32.totalorder %s351, %s354
      %p363 = scmp.eq.s32.totalorder %s28, 5
      %p364 = por %p362, %p363
      %p365 = scmp.ne.s32.totalorder %s354, %s355
      %p366 = scmp.eq.s32.totalorder %s28, 0
      %p367 = por %p365, %p366
      %p368 = scmp.ne.s32.totalorder %s354, %s355
      %p369 = scmp.eq.s32.totalorder %s29, 5
      %p370 = por %p368, %p369
      %p372 = scmp.ne.s32.totalorder %s355, %s371
      %p373 = scmp.eq.s32.totalorder %s29, 0
      %p374 = por %p372, %p373
      %s375 = ssub.s32 %s23, %s30
      %p376 = scmp.eq.s32.totalorder %s375, 0
      %s378 = sadd.s32 %s377, 1
      %s379 = scalar_select %p376, %s377, %s378
      %p382 = pneg %p376
      %p383 = scmp.eq.s32.totalorder %s23, 5
      %p384 = por %p382, %p383
      %p385 = scmp.ne.s32.totalorder %s377, %s380
      %p386 = scmp.eq.s32.totalorder %s23, 0
      %p387 = por %p385, %p386
      %p388 = scmp.ne.s32.totalorder %s377, %s380
      %p389 = scmp.eq.s32.totalorder %s28, 5
      %p390 = por %p388, %p389
      %p391 = scmp.ne.s32.totalorder %s380, %s381
      %p392 = scmp.eq.s32.totalorder %s28, 0
      %p393 = por %p391, %p392
      %p394 = scmp.ne.s32.totalorder %s380, %s381
      %p395 = scmp.eq.s32.totalorder %s29, 5
      %p396 = por %p394, %p395
      %p398 = scmp.ne.s32.totalorder %s381, %s397
      %p399 = scmp.eq.s32.totalorder %s29, 0
      %p400 = por %p398, %p399
      %s401 = ssub.s32 %s23, %s30
      %p402 = scmp.eq.s32.totalorder %s401, 0
      %s404 = sadd.s32 %s403, 1
      %s405 = scalar_select %p402, %s403, %s404
      %p408 = pneg %p402
      %p409 = scmp.eq.s32.totalorder %s23, 5
      %p410 = por %p408, %p409
      %p411 = scmp.ne.s32.totalorder %s403, %s406
      %p412 = scmp.eq.s32.totalorder %s23, 0
      %p413 = por %p411, %p412
      %p414 = scmp.ne.s32.totalorder %s403, %s406
      %p415 = scmp.eq.s32.totalorder %s28, 5
      %p416 = por %p414, %p415
      %p417 = scmp.ne.s32.totalorder %s406, %s407
      %p418 = scmp.eq.s32.totalorder %s28, 0
      %p419 = por %p417, %p418
      %p420 = scmp.ne.s32.totalorder %s406, %s407
      %p421 = scmp.eq.s32.totalorder %s29, 5
      %p422 = por %p420, %p421
      %p424 = scmp.ne.s32.totalorder %s407, %s423
      %p425 = scmp.eq.s32.totalorder %s29, 0
      %p426 = por %p424, %p425
      %s428 = sadd.s32 %s427, 1
      %p431 = scmp.eq.s32.totalorder %s23, 5
      %p432 = scmp.ne.s32.totalorder %s427, %s429
      %p433 = scmp.eq.s32.totalorder %s23, 0
      %p434 = por %p432, %p433
      %p435 = scmp.ne.s32.totalorder %s427, %s429
      %p436 = scmp.eq.s32.totalorder %s28, 5
      %p437 = por %p435, %p436
      %p438 = scmp.ne.s32.totalorder %s429, %s430
      %p439 = scmp.eq.s32.totalorder %s28, 0
      %p440 = por %p438, %p439
      %p441 = scmp.ne.s32.totalorder %s429, %s430
      %p442 = scmp.eq.s32.totalorder %s29, 5
      %p443 = por %p441, %p442
      %p445 = scmp.ne.s32.totalorder %s430, %s444
      %p446 = scmp.eq.s32.totalorder %s29, 0
      %p447 = por %p445, %p446
      %p448 = scmp.le.s32.totalorder 1, %s23
      %p449 = scmp.lt.s32.totalorder %s23, 7
      %p450 = pnand %p448, %p449
      %p451 = pneg %p450
      // Predicated region
      $region9: #{model_forward.1} parent=5 // pred_check
        _
      $region10: #{model_forward.1} parent=5 // pred_check_branch
        %453 = sbr.rel (%p450) target = $region12
      $region11: #{model_forward.1} parent=5 // pred_region
        %s454 = ssub.s32 %s23, 1
        // Predicated region
        $region13: #{model_forward.1} parent=11 // pred_check
          %p455 = pneg %p44
        $region14: #{model_forward.1} parent=11 // pred_check_branch
          %457 = sbr.rel (%p455) target = $region16
        $region15: #{model_forward.1} parent=11 // pred_region
          _
        $region16: #{model_forward.1} parent=11 // pred_fallthru
          _
        // Predicated region
        $region17: #{model_forward.1} parent=11 // pred_check
          %p458 = pneg %p65
        $region18: #{model_forward.1} parent=11 // pred_check_branch
          %460 = sbr.rel (%p458) target = $region20
        $region19: #{model_forward.1} parent=11 // pred_region
          _
        $region20: #{model_forward.1} parent=11 // pred_fallthru
          _
        // Predicated region
        $region21: #{model_forward.1} parent=11 // pred_check
          %p461 = pneg %p86
        $region22: #{model_forward.1} parent=11 // pred_check_branch
          %463 = sbr.rel (%p461) target = $region24
        $region23: #{model_forward.1} parent=11 // pred_region
          _
        $region24: #{model_forward.1} parent=11 // pred_fallthru
          _
        // Predicated region
        $region25: #{model_forward.1} parent=11 // pred_check
          %p464 = pneg %p107
        $region26: #{model_forward.1} parent=11 // pred_check_branch
          %466 = sbr.rel (%p464) target = $region28
        $region27: #{model_forward.1} parent=11 // pred_region
          _
        $region28: #{model_forward.1} parent=11 // pred_fallthru
          _
      $region12: #{model_forward.1} parent=5 // pred_fallthru
        _
      %p467 = scmp.lt.s32.totalorder %s23, 6
      // Predicated region
      $region29: #{model_forward.1} parent=5 // pred_check
        %p468 = pneg %p467
      $region30: #{model_forward.1} parent=5 // pred_check_branch
        %470 = sbr.rel (%p468) target = $region32
      $region31: #{model_forward.1} parent=5 // pred_region
        // Predicated region
        $region33: #{model_forward.1} parent=31 // pred_check
          %p471 = pneg %p127
        $region34: #{model_forward.1} parent=31 // pred_check_branch
          %473 = sbr.rel (%p471) target = $region36
        $region35: #{model_forward.1} parent=31 // pred_region
          %p474 = scmp.lt.s32.totalorder %s23, 5
          %s475 = scalar_select %p474, %s23, 5
          %s476 = smul.addr %s475, 8
          %s477 = smul.addr %s476, 4
          %s478 = scalar_lea.vmem %s4, %s477
        $region36: #{model_forward.1} parent=31 // pred_fallthru
          _
        // Predicated region
        $region37: #{model_forward.1} parent=31 // pred_check
          %p479 = pneg %p153
        $region38: #{model_forward.1} parent=31 // pred_check_branch
          %481 = sbr.rel (%p479) target = $region40
        $region39: #{model_forward.1} parent=31 // pred_region
          %p482 = scmp.lt.s32.totalorder %s23, 5
          %s483 = scalar_select %p482, %s23, 5
          %s484 = smul.addr %s483, 2
          %s485 = scalar_lea.vmem %s5, %s484
        $region40: #{model_forward.1} parent=31 // pred_fallthru
          _
        // Predicated region
        $region41: #{model_forward.1} parent=31 // pred_check
          %p486 = pneg %p179
        $region42: #{model_forward.1} parent=31 // pred_check_branch
          %488 = sbr.rel (%p486) target = $region44
        $region43: #{model_forward.1} parent=31 // pred_region
          %p489 = scmp.lt.s32.totalorder %s23, 5
          %s490 = scalar_select %p489, %s23, 5
          %s491 = smul.addr %s490, 8
          %s492 = smul.addr %s491, 4
          %s493 = scalar_lea.vmem %s6, %s492
        $region44: #{model_forward.1} parent=31 // pred_fallthru
          _
        // Predicated region
        $region45: #{model_forward.1} parent=31 // pred_check
          %p494 = pneg %p205
        $region46: #{model_forward.1} parent=31 // pred_check_branch
          %496 = sbr.rel (%p494) target = $region48
        $region47: #{model_forward.1} parent=31 // pred_region
          %p497 = scmp.lt.s32.totalorder %s23, 5
          %s498 = scalar_select %p497, %s23, 5
          %s499 = scalar_lea.vmem %s7, %s498
        $region48: #{model_forward.1} parent=31 // pred_fallthru
          _
        // Predicated region
        $region49: #{model_forward.1} parent=31 // pred_check
          %p500 = pneg %p231
        $region50: #{model_forward.1} parent=31 // pred_check_branch
          %502 = sbr.rel (%p500) target = $region52
        $region51: #{model_forward.1} parent=31 // pred_region
          %p503 = scmp.lt.s32.totalorder %s23, 5
          %s504 = scalar_select %p503, %s23, 5
          %s505 = scalar_lea.vmem %s8, %s504
        $region52: #{model_forward.1} parent=31 // pred_fallthru
          _
        // Predicated region
        $region53: #{model_forward.1} parent=31 // pred_check
          %p506 = pneg %p257
        $region54: #{model_forward.1} parent=31 // pred_check_branch
          %508 = sbr.rel (%p506) target = $region56
        $region55: #{model_forward.1} parent=31 // pred_region
          %p509 = scmp.lt.s32.totalorder %s23, 5
          %s510 = scalar_select %p509, %s23, 5
          %s511 = scalar_lea.vmem %s9, %s510
        $region56: #{model_forward.1} parent=31 // pred_fallthru
          _
        // Predicated region
        $region57: #{model_forward.1} parent=31 // pred_check
          %p512 = pneg %p283
        $region58: #{model_forward.1} parent=31 // pred_check_branch
          %514 = sbr.rel (%p512) target = $region60
        $region59: #{model_forward.1} parent=31 // pred_region
          %p515 = scmp.lt.s32.totalorder %s23, 5
          %s516 = scalar_select %p515, %s23, 5
          %s517 = smul.addr %s516, 4
          %s518 = smul.addr %s517, 4
          %s519 = scalar_lea.vmem %s10, %s518
        $region60: #{model_forward.1} parent=31 // pred_fallthru
          _
        // Predicated region
        $region61: #{model_forward.1} parent=31 // pred_check
          %p520 = pneg %p309
        $region62: #{model_forward.1} parent=31 // pred_check_branch
          %522 = sbr.rel (%p520) target = $region64
        $region63: #{model_forward.1} parent=31 // pred_region
          %p523 = scmp.lt.s32.totalorder %s23, 5
          %s524 = scalar_select %p523, %s23, 5
          %s525 = scalar_lea.vmem %s11, %s524
        $region64: #{model_forward.1} parent=31 // pred_fallthru
          _
        // Predicated region
        $region65: #{model_forward.1} parent=31 // pred_check
          %p526 = pneg %p335
        $region66: #{model_forward.1} parent=31 // pred_check_branch
          %528 = sbr.rel (%p526) target = $region68
        $region67: #{model_forward.1} parent=31 // pred_region
          %p529 = scmp.lt.s32.totalorder %s23, 5
          %s530 = scalar_select %p529, %s23, 5
          %s531 = smul.addr %s530, 16
          %s532 = smul.addr %s531, 4
          %s533 = scalar_lea.vmem %s12, %s532
        $region68: #{model_forward.1} parent=31 // pred_fallthru
          _
        // Predicated region
        $region69: #{model_forward.1} parent=31 // pred_check
          %p534 = pneg %p361
        $region70: #{model_forward.1} parent=31 // pred_check_branch
          %536 = sbr.rel (%p534) target = $region72
        $region71: #{model_forward.1} parent=31 // pred_region
          %p537 = scmp.lt.s32.totalorder %s23, 5
          %s538 = scalar_select %p537, %s23, 5
          %s539 = scalar_lea.vmem %s13, %s538
        $region72: #{model_forward.1} parent=31 // pred_fallthru
          _
        // Predicated region
        $region73: #{model_forward.1} parent=31 // pred_check
          %p540 = pneg %p387
        $region74: #{model_forward.1} parent=31 // pred_check_branch
          %542 = sbr.rel (%p540) target = $region76
        $region75: #{model_forward.1} parent=31 // pred_region
          %p543 = scmp.lt.s32.totalorder %s23, 5
          %s544 = scalar_select %p543, %s23, 5
          %s545 = scalar_lea.vmem %s14, %s544
        $region76: #{model_forward.1} parent=31 // pred_fallthru
          _
        // Predicated region
        $region77: #{model_forward.1} parent=31 // pred_check
          %p546 = pneg %p413
        $region78: #{model_forward.1} parent=31 // pred_check_branch
          %548 = sbr.rel (%p546) target = $region80
        $region79: #{model_forward.1} parent=31 // pred_region
          %p549 = scmp.lt.s32.totalorder %s23, 5
          %s550 = scalar_select %p549, %s23, 5
          %s551 = scalar_lea.vmem %s15, %s550
        $region80: #{model_forward.1} parent=31 // pred_fallthru
          _
      $region32: #{model_forward.1} parent=5 // pred_fallthru
        _
      %p552 = scmp.le.s32.totalorder 1, %s23
      %p553 = scmp.lt.s32.totalorder %s23, 7
      %p554 = pnand %p552, %p553
      %p555 = pneg %p554
      // Predicated region
      $region81: #{model_forward.1} parent=5 // pred_check
        _
      $region82: #{model_forward.1} parent=5 // pred_check_branch
        %557 = sbr.rel (%p554) target = $region84
      $region83: #{model_forward.1} parent=5 // pred_region
        %s558 = ssub.s32 %s23, 1
        %p559 = pneg %p44
        %p560 = pneg %p41
        %p561 = pneg %p65
        %p562 = pneg %p62
        %p563 = pneg %p86
        %p564 = pneg %p83
        %p565 = pneg %p107
        %p566 = pneg %p104
        %p567 = scmp.lt.s32.totalorder %s28, 5
        %s568 = scalar_select %p567, %s28, 5
        %s569 = smul.addr %s568, 8
        %s570 = smul.addr %s569, 4
        %s571 = scalar_lea.vmem %s4, %s570
        %p572 = pneg %p133
        %p573 = pneg %p130
        %p574 = scmp.lt.s32.totalorder %s28, 5
        %s575 = scalar_select %p574, %s28, 5
        %s576 = smul.addr %s575, 2
        %s577 = scalar_lea.vmem %s5, %s576
        %p578 = pneg %p159
        %p579 = pneg %p156
        %p580 = scmp.lt.s32.totalorder %s28, 5
        %s581 = scalar_select %p580, %s28, 5
        %s582 = smul.addr %s581, 8
        %s583 = smul.addr %s582, 4
        %s584 = scalar_lea.vmem %s6, %s583
        %p585 = pneg %p185
        %p586 = pneg %p182
        %p587 = scmp.lt.s32.totalorder %s28, 5
        %s588 = scalar_select %p587, %s28, 5
        %s589 = scalar_lea.vmem %s7, %s588
        %p590 = pneg %p211
        %p591 = pneg %p208
        %p592 = scmp.lt.s32.totalorder %s28, 5
        %s593 = scalar_select %p592, %s28, 5
        %s594 = scalar_lea.vmem %s8, %s593
        %p595 = pneg %p237
        %p596 = pneg %p234
        %p597 = scmp.lt.s32.totalorder %s28, 5
        %s598 = scalar_select %p597, %s28, 5
        %s599 = scalar_lea.vmem %s9, %s598
        %p600 = pneg %p263
        %p601 = pneg %p260
        %p602 = scmp.lt.s32.totalorder %s28, 5
        %s603 = scalar_select %p602, %s28, 5
        %s604 = smul.addr %s603, 4
        %s605 = smul.addr %s604, 4
        %s606 = scalar_lea.vmem %s10, %s605
        %p607 = pneg %p289
        %p608 = pneg %p286
        %p609 = scmp.lt.s32.totalorder %s28, 5
        %s610 = scalar_select %p609, %s28, 5
        %s611 = scalar_lea.vmem %s11, %s610
        %p612 = pneg %p315
        %p613 = pneg %p312
        %p614 = scmp.lt.s32.totalorder %s28, 5
        %s615 = scalar_select %p614, %s28, 5
        %s616 = smul.addr %s615, 16
        %s617 = smul.addr %s616, 4
        %s618 = scalar_lea.vmem %s12, %s617
        %p619 = pneg %p341
        %p620 = pneg %p338
        %p621 = scmp.lt.s32.totalorder %s28, 5
        %s622 = scalar_select %p621, %s28, 5
        %s623 = scalar_lea.vmem %s13, %s622
        %p624 = pneg %p367
        %p625 = pneg %p364
        %p626 = scmp.lt.s32.totalorder %s28, 5
        %s627 = scalar_select %p626, %s28, 5
        %s628 = scalar_lea.vmem %s14, %s627
        %p629 = pneg %p393
        %p630 = pneg %p390
        %p631 = scmp.lt.s32.totalorder %s28, 5
        %s632 = scalar_select %p631, %s28, 5
        %s633 = scalar_lea.vmem %s15, %s632
        %p634 = pneg %p419
        %p635 = pneg %p416
        %p636 = pneg %p440
        %p637 = pneg %p437
        %p638 = scmp.lt.s32.totalorder %s28, 5
        %s639 = scalar_select %p638, %s28, 5
        %s640 = smul.addr %s639, 8
        %s641 = smul.addr %s640, 4
        %s642 = scalar_lea.vmem %s4, %s641
        %p643 = scmp.lt.s32.totalorder %s28, 5
        %s644 = scalar_select %p643, %s28, 5
        %s645 = smul.addr %s644, 2
        %s646 = scalar_lea.vmem %s5, %s645
        %p647 = scmp.lt.s32.totalorder %s28, 5
        %s648 = scalar_select %p647, %s28, 5
        %s649 = smul.addr %s648, 8
        %s650 = smul.addr %s649, 4
        %s651 = scalar_lea.vmem %s6, %s650
        %p652 = scmp.lt.s32.totalorder %s28, 5
        %s653 = scalar_select %p652, %s28, 5
        %s654 = scalar_lea.vmem %s7, %s653
        %p655 = scmp.lt.s32.totalorder %s28, 5
        %s656 = scalar_select %p655, %s28, 5
        %s657 = scalar_lea.vmem %s8, %s656
        %p658 = scmp.lt.s32.totalorder %s28, 5
        %s659 = scalar_select %p658, %s28, 5
        %s660 = scalar_lea.vmem %s9, %s659
        %p661 = scmp.lt.s32.totalorder %s28, 5
        %s662 = scalar_select %p661, %s28, 5
        %s663 = smul.addr %s662, 4
        %s664 = smul.addr %s663, 4
        %s665 = scalar_lea.vmem %s10, %s664
        %p666 = scmp.lt.s32.totalorder %s28, 5
        %s667 = scalar_select %p666, %s28, 5
        %s668 = scalar_lea.vmem %s11, %s667
        %p669 = scmp.lt.s32.totalorder %s28, 5
        %s670 = scalar_select %p669, %s28, 5
        %s671 = smul.addr %s670, 16
        %s672 = smul.addr %s671, 4
        %s673 = scalar_lea.vmem %s12, %s672
        %p674 = scmp.lt.s32.totalorder %s28, 5
        %s675 = scalar_select %p674, %s28, 5
        %s676 = scalar_lea.vmem %s13, %s675
        %p677 = scmp.lt.s32.totalorder %s28, 5
        %s678 = scalar_select %p677, %s28, 5
        %s679 = scalar_lea.vmem %s14, %s678
        %p680 = scmp.lt.s32.totalorder %s28, 5
        %s681 = scalar_select %p680, %s28, 5
        %s682 = scalar_lea.vmem %s15, %s681
        %p684 = scmp.eq.s32.totalorder %s28, 0
        // Predicated region
        $region85: #{model_forward.1} parent=83 // pred_check
          %p685 = pneg %p684
        $region86: #{model_forward.1} parent=83 // pred_check_branch
          %687 = sbr.rel (%p685) target = $region88
        $region87: #{model_forward.1} parent=83 // pred_region
          %v688 = vld [vmem:[%s0] sm:$0xff]
          %v689 = vld [vmem:[%s0 + $0x8] sm:$0xff]
          %vm690 = vcmask 261120
          %691 = vst.msk [vmem:[#allocation2] sm:$0xff] %vm690, %v688
          %692 = vst.msk [vmem:[#allocation2 + $0x8] sm:$0xff] %vm690, %v689
        $region88: #{model_forward.1} parent=83 // pred_fallthru
          _
        %v693 = vld [vmem:[#allocation2] sm:$0xff]
        %v694 = vld [vmem:[#allocation2 + $0x8] sm:$0xff]
        %v695 = vpack.c.bf16 %v694, %v693
        %v696 = vld [vmem:[%s642] sm:$0xff]
        %v697 = vld [vmem:[%s642 + $0x8] sm:$0xff]
        %v698 = vld [vmem:[%s642 + $0x10] sm:$0xff]
        %v699 = vld [vmem:[%s642 + $0x18] sm:$0xff]
        %v700 = vld [vmem:[%s646] sm:$0x3]
        %v702 = vlaneseq
        %v703 = vshrl.u32 %v702, 7
        %v704 = vsub.s32 0, %v703
        %v705 = vrot.slane %v700, %v704
        %v706 = vlaneseq
        %v707 = vshrl.u32 %v706, 7
        %v708 = vsub.s32 1, %v707
        %v709 = vrot.slane %v700, %v708
        %v716 = vunpack.c.l.b16 %v696
        %v717 = vunpack.c.h.b16 %v696
        %v718 = vunpack.c.l.b16 %v697
        %v719 = vunpack.c.h.b16 %v697
        %v720 = vunpack.c.l.b16 %v698
        %v721 = vunpack.c.h.b16 %v698
        %v722 = vunpack.c.l.b16 %v699
        %v723 = vunpack.c.h.b16 %v699
        %v724 = vpack.c.b16 %v718, %v716
        %v725 = vpack.c.b16 %v719, %v717
        %v726 = vpack.c.b16 %v722, %v720
        %v727 = vpack.c.b16 %v723, %v721
        %vm732 = vcmask 261120
        %v734 = vsel %vm732, %v695, 0
        %736 = vmatprep.subr.bf16.mxu0 0
        %737 = vmatpush1.bf16.msra.mxu0 0
        %738 = vmatprep.subr.bf16.mxu0 0
        %739 = vmatpush1.bf16.msra.mxu0 0
        %740 = vmatprep.subr.bf16.mxu0 0
        %741 = vmatpush1.bf16.msra.mxu0 0
        %742 = vmatprep.subr.bf16.mxu0 0
        %743 = vmatpush1.bf16.msra.mxu0 0
        %744 = vmatprep.subr.bf16.mxu0 0
        %745 = vmatpush1.bf16.msra.mxu0 0
        %746 = vmatprep.subr.bf16.mxu0 0
        %747 = vmatpush1.bf16.msra.mxu0 0
        %748 = vmatprep.subr.bf16.mxu0 %v727
        %749 = vmatpush1.bf16.msra.mxu0 %v726
        %750 = vmatprep.subr.bf16.mxu0 %v725
        %751 = vmatpush1.bf16.msra.mxu0 %v724
        %752 = vmatprep.subr.bf16.mxu0 0
        %753 = vmatpush2.bf16.msra.mxu0 0
        %754 = vmatprep.subr.bf16.mxu0 0
        %755 = vmatpush2.bf16.msra.mxu0 0
        %756 = vmatprep.subr.bf16.mxu0 0
        %757 = vmatpush2.bf16.msra.mxu0 0
        %758 = vmatprep.subr.bf16.mxu0 0
        %759 = vmatpush2.bf16.msra.mxu0 0
        %760 = vmatprep.subr.bf16.mxu0 0
        %761 = vmatpush2.bf16.msra.mxu0 0
        %762 = vmatprep.subr.bf16.mxu0 0
        %763 = vmatpush2.bf16.msra.mxu0 0
        %764 = vmatprep.subr.bf16.mxu0 0
        %765 = vmatpush2.bf16.msra.mxu0 0
        %766 = vmatprep.subr.bf16.mxu0 0
        %767 = vmatpush2.bf16.msra.mxu0 0
        %768 = vmatprep.mubr.bf16.mxu0 0
        %769 = vmatmul.mubr.bf16.gmra.mxu0 %v734
        %v770 = vpop.f32.mrf.mxu0
        %v771 = vadd.f32 %v705, %v770
        %v772 = vpop.f32.mrf.mxu0
        %v773 = vadd.f32 %v709, %v772
        %v774 = vpop.f32.mrf.mxu0
        %v775 = vadd.f32 %v705, %v774
        %v776 = vpop.f32.mrf.mxu0
        %v777 = vadd.f32 %v709, %v776
        %778 = vdwg.mxu0
        %v779 = vpack.c.bf16 %v775, %v771
        %v780 = vpack.c.bf16 %v777, %v773
        %v781 = vlaneseq
        %v782 = vshrl.u32 %v781, 7
        %v783 = vlaneseq
        %v784 = vand.u32 %v783, 127
        %vm785 = vcmp.le.s32.totalorder %v784, %v782
        %787 = vrot.lane.b32.xlu0 %v779, 64
        %v788 = vpop.permute.xlu0 %787
        %vm789 = vcmask 64512
        %v791 = vsel %vm789, %v779, 0
        %v794 = vsel %vm789, %v788, 0
        %796 = vmatprep.subr.bf16.mxu0 0
        %797 = vmatpush1.bf16.xpose.msra.mxu0 0
        %798 = vmatprep.subr.bf16.mxu0 0
        %799 = vmatpush1.bf16.xpose.msra.mxu0 0
        %800 = vmatprep.subr.bf16.mxu0 0
        %801 = vmatpush1.bf16.xpose.msra.mxu0 0
        %802 = vmatprep.subr.bf16.mxu0 0
        %803 = vmatpush1.bf16.xpose.msra.mxu0 0
        %804 = vmatprep.subr.bf16.mxu0 0
        %805 = vmatpush1.bf16.xpose.msra.mxu0 0
        %806 = vmatprep.subr.bf16.mxu0 0
        %807 = vmatpush1.bf16.xpose.msra.mxu0 0
        %808 = vmatprep.subr.bf16.mxu0 0
        %809 = vmatpush1.bf16.xpose.msra.mxu0 0
        %810 = vmatprep.subr.bf16.mxu0 0
        %811 = vmatpush1.bf16.xpose.msra.mxu0 %v794
        %812 = vmatprep.subr.bf16.mxu0 0
        %813 = vmatpush2.bf16.xpose.msra.mxu0 0
        %814 = vmatprep.subr.bf16.mxu0 0
        %815 = vmatpush2.bf16.xpose.msra.mxu0 0
        %816 = vmatprep.subr.bf16.mxu0 0
        %817 = vmatpush2.bf16.xpose.msra.mxu0 0
        %818 = vmatprep.subr.bf16.mxu0 0
        %819 = vmatpush2.bf16.xpose.msra.mxu0 0
        %820 = vmatprep.subr.bf16.mxu0 0
        %821 = vmatpush2.bf16.xpose.msra.mxu0 0
        %822 = vmatprep.subr.bf16.mxu0 0
        %823 = vmatpush2.bf16.xpose.msra.mxu0 0
        %824 = vmatprep.subr.bf16.mxu0 0
        %825 = vmatpush2.bf16.xpose.msra.mxu0 0
        %826 = vmatprep.subr.bf16.mxu0 0
        %827 = vmatpush2.bf16.xpose.msra.mxu0 0
        %828 = vmatprep.mubr.bf16.mxu0 0
        %829 = vmatmul.mubr.bf16.gmra.mxu0 %v791
        %v830 = vpop.f32.mrf.mxu0
        %v831 = vadd.f32 0.0, %v830
        %v832 = vpop.f32.mrf.mxu0
        %v833 = vpop.f32.mrf.mxu0
        %v834 = vpop.f32.mrf.mxu0
        %835 = vdwg.mxu0
        %v836 = vmul.f32 %v831, 0.35355338
        %v837 = vsel %vm785, %v836, -1e+30
        %v838 = vsel %vm789, %v837, -inf
        %839 = vmax.xlane.f32.xlu0 %v838
        %v840 = vpop.xlane.xlu0 %839
        %v841 = vsub.f32 %v837, %v840
        %v842 = vmul.f32 %v841, 1.442695
        %v843 = vpow.pop %v842
        %v844 = vsel %vm789, %v843, 0.0
        %845 = vadd.xlane.f32.xlu0 %v844
        %v846 = vpop.xlane.xlu0 %845
        %v847 = vrcp.pop %v846
        %v848 = vmul.f32 %v843, %v847
        %v849 = vpack.c.bf16 %v848, %v848
        %v851 = vsel %vm789, %v849, 0
        %vm853 = vcmask 1043456
        %v855 = vsel %vm853, %v780, 0
        %857 = vmatprep.subr.bf16.mxu0 0
        %858 = vmatpush1.bf16.msra.mxu0 0
        %859 = vmatprep.subr.bf16.mxu0 0
        %860 = vmatpush1.bf16.msra.mxu0 0
        %861 = vmatprep.subr.bf16.mxu0 0
        %862 = vmatpush1.bf16.msra.mxu0 0
        %863 = vmatprep.subr.bf16.mxu0 0
        %864 = vmatpush1.bf16.msra.mxu0 0
        %865 = vmatprep.subr.bf16.mxu0 0
        %866 = vmatpush1.bf16.msra.mxu0 0
        %867 = vmatprep.subr.bf16.mxu0 0
        %868 = vmatpush1.bf16.msra.mxu0 0
        %869 = vmatprep.subr.bf16.mxu0 0
        %870 = vmatpush1.bf16.msra.mxu0 0
        %871 = vmatprep.subr.bf16.mxu0 0
        %872 = vmatpush1.bf16.msra.mxu0 %v855
        %873 = vmatprep.subr.bf16.mxu0 0
        %874 = vmatpush2.bf16.msra.mxu0 0
        %875 = vmatprep.subr.bf16.mxu0 0
        %876 = vmatpush2.bf16.msra.mxu0 0
        %877 = vmatprep.subr.bf16.mxu0 0
        %878 = vmatpush2.bf16.msra.mxu0 0
        %879 = vmatprep.subr.bf16.mxu0 0
        %880 = vmatpush2.bf16.msra.mxu0 0
        %881 = vmatprep.subr.bf16.mxu0 0
        %882 = vmatpush2.bf16.msra.mxu0 0
        %883 = vmatprep.subr.bf16.mxu0 0
        %884 = vmatpush2.bf16.msra.mxu0 0
        %885 = vmatprep.subr.bf16.mxu0 0
        %886 = vmatpush2.bf16.msra.mxu0 0
        %887 = vmatprep.subr.bf16.mxu0 0
        %888 = vmatpush2.bf16.msra.mxu0 0
        %889 = vmatprep.mubr.bf16.mxu0 0
        %890 = vmatmul.mubr.bf16.gmra.mxu0 %v851
        %v891 = vpop.f32.mrf.mxu0
        %v892 = vadd.f32 0.0, %v891
        %v893 = vpop.f32.mrf.mxu0
        %v894 = vpop.f32.mrf.mxu0
        %v895 = vpop.f32.mrf.mxu0
        %896 = vdwg.mxu0
        %v897 = vpack.c.bf16 %v892, %v892
        %v898 = vld [vmem:[%s651] sm:$0xf]
        %899 = vrot.lane.b32.xlu0 %v779, 120
        %v900 = vpop.permute.xlu0 %899
        %901 = vrot.lane.b32.xlu0 %v779, 56
        %v902 = vpop.permute.xlu0 %901
        %v904 = vsel %vm789, %v900, 0
        %v907 = vsel %vm789, %v902, 0
        %909 = vmatprep.subr.bf16.mxu0 0
        %910 = vmatpush1.bf16.xpose.msra.mxu0 0
        %911 = vmatprep.subr.bf16.mxu0 0
        %912 = vmatpush1.bf16.xpose.msra.mxu0 0
        %913 = vmatprep.subr.bf16.mxu0 0
        %914 = vmatpush1.bf16.xpose.msra.mxu0 0
        %915 = vmatprep.subr.bf16.mxu0 0
        %916 = vmatpush1.bf16.xpose.msra.mxu0 0
        %917 = vmatprep.subr.bf16.mxu0 0
        %918 = vmatpush1.bf16.xpose.msra.mxu0 0
        %919 = vmatprep.subr.bf16.mxu0 0
        %920 = vmatpush1.bf16.xpose.msra.mxu0 0
        %921 = vmatprep.subr.bf16.mxu0 0
        %922 = vmatpush1.bf16.xpose.msra.mxu0 0
        %923 = vmatprep.subr.bf16.mxu0 0
        %924 = vmatpush1.bf16.xpose.msra.mxu0 %v907
        %925 = vmatprep.subr.bf16.mxu0 0
        %926 = vmatpush2.bf16.xpose.msra.mxu0 0
        %927 = vmatprep.subr.bf16.mxu0 0
        %928 = vmatpush2.bf16.xpose.msra.mxu0 0
        %929 = vmatprep.subr.bf16.mxu0 0
        %930 = vmatpush2.bf16.xpose.msra.mxu0 0
        %931 = vmatprep.subr.bf16.mxu0 0
        %932 = vmatpush2.bf16.xpose.msra.mxu0 0
        %933 = vmatprep.subr.bf16.mxu0 0
        %934 = vmatpush2.bf16.xpose.msra.mxu0 0
        %935 = vmatprep.subr.bf16.mxu0 0
        %936 = vmatpush2.bf16.xpose.msra.mxu0 0
        %937 = vmatprep.subr.bf16.mxu0 0
        %938 = vmatpush2.bf16.xpose.msra.mxu0 0
        %939 = vmatprep.subr.bf16.mxu0 0
        %940 = vmatpush2.bf16.xpose.msra.mxu0 0
        %941 = vmatprep.mubr.bf16.mxu0 0
        %942 = vmatmul.mubr.bf16.gmra.mxu0 %v904
        %v943 = vpop.f32.mrf.mxu0
        %v944 = vadd.f32 0.0, %v943
        %v945 = vpop.f32.mrf.mxu0
        %v946 = vpop.f32.mrf.mxu0
        %v947 = vpop.f32.mrf.mxu0
        %948 = vdwg.mxu0
        %v949 = vmul.f32 %v944, 0.35355338
        %v950 = vsel %vm785, %v949, -1e+30
        %v951 = vsel %vm789, %v950, -inf
        %952 = vmax.xlane.f32.xlu0 %v951
        %v953 = vpop.xlane.xlu0 %952
        %v954 = vsub.f32 %v950, %v953
        %v955 = vmul.f32 %v954, 1.442695
        %v956 = vpow.pop %v955
        %v957 = vsel %vm789, %v956, 0.0
        %958 = vadd.xlane.f32.xlu0 %v957
        %v959 = vpop.xlane.xlu0 %958
        %v960 = vrcp.pop %v959
        %v961 = vmul.f32 %v956, %v960
        %v962 = vpack.c.bf16 %v961, %v961
        %964 = vrot.lane.b32.xlu0 %v780, 120
        %v965 = vpop.permute.xlu0 %964
        %v967 = vsel %vm789, %v962, 0
        %v970 = vsel %vm853, %v965, 0
        %972 = vmatprep.subr.bf16.mxu0 0
        %973 = vmatpush1.bf16.msra.mxu0 0
        %974 = vmatprep.subr.bf16.mxu0 0
        %975 = vmatpush1.bf16.msra.mxu0 0
        %976 = vmatprep.subr.bf16.mxu0 0
        %977 = vmatpush1.bf16.msra.mxu0 0
        %978 = vmatprep.subr.bf16.mxu0 0
        %979 = vmatpush1.bf16.msra.mxu0 0
        %980 = vmatprep.subr.bf16.mxu0 0
        %981 = vmatpush1.bf16.msra.mxu0 0
        %982 = vmatprep.subr.bf16.mxu0 0
        %983 = vmatpush1.bf16.msra.mxu0 0
        %984 = vmatprep.subr.bf16.mxu0 0
        %985 = vmatpush1.bf16.msra.mxu0 0
        %986 = vmatprep.subr.bf16.mxu0 0
        %987 = vmatpush1.bf16.msra.mxu0 %v970
        %988 = vmatprep.subr.bf16.mxu0 0
        %989 = vmatpush2.bf16.msra.mxu0 0
        %990 = vmatprep.subr.bf16.mxu0 0
        %991 = vmatpush2.bf16.msra.mxu0 0
        %992 = vmatprep.subr.bf16.mxu0 0
        %993 = vmatpush2.bf16.msra.mxu0 0
        %994 = vmatprep.subr.bf16.mxu0 0
        %995 = vmatpush2.bf16.msra.mxu0 0
        %996 = vmatprep.subr.bf16.mxu0 0
        %997 = vmatpush2.bf16.msra.mxu0 0
        %998 = vmatprep.subr.bf16.mxu0 0
        %999 = vmatpush2.bf16.msra.mxu0 0
        %1000 = vmatprep.subr.bf16.mxu0 0
        %1001 = vmatpush2.bf16.msra.mxu0 0
        %1002 = vmatprep.subr.bf16.mxu0 0
        %1003 = vmatpush2.bf16.msra.mxu0 0
        %1004 = vmatprep.mubr.bf16.mxu0 0
        %1005 = vmatmul.mubr.bf16.gmra.mxu0 %v967
        %v1006 = vpop.f32.mrf.mxu0
        %v1007 = vadd.f32 0.0, %v1006
        %v1008 = vpop.f32.mrf.mxu0
        %v1009 = vpop.f32.mrf.mxu0
        %v1010 = vpop.f32.mrf.mxu0
        %1011 = vdwg.mxu0
        %v1012 = vpack.c.bf16 %v1007, %v1007
        %v1013 = vld [vmem:[%s651 + $0x4] sm:$0xf]
        %v1015 = vsel %vm789, %v1012, 0
        %v1018 = vsel %vm853, %v1013, 0
        %1020 = vmatprep.subr.bf16.mxu0 0
        %1021 = vmatpush1.bf16.msra.mxu0 0
        %1022 = vmatprep.subr.bf16.mxu0 0
        %1023 = vmatpush1.bf16.msra.mxu0 0
        %1024 = vmatprep.subr.bf16.mxu0 0
        %1025 = vmatpush1.bf16.msra.mxu0 0
        %1026 = vmatprep.subr.bf16.mxu0 0
        %1027 = vmatpush1.bf16.msra.mxu0 0
        %1028 = vmatprep.subr.bf16.mxu0 0
        %1029 = vmatpush1.bf16.msra.mxu0 0
        %1030 = vmatprep.subr.bf16.mxu0 0
        %1031 = vmatpush1.bf16.msra.mxu0 0
        %1032 = vmatprep.subr.bf16.mxu0 0
        %1033 = vmatpush1.bf16.msra.mxu0 0
        %1034 = vmatprep.subr.bf16.mxu0 0
        %1035 = vmatpush1.bf16.msra.mxu0 %v1018
        %1036 = vmatprep.subr.bf16.mxu0 0
        %1037 = vmatpush2.bf16.msra.mxu0 0
        %1038 = vmatprep.subr.bf16.mxu0 0
        %1039 = vmatpush2.bf16.msra.mxu0 0
        %1040 = vmatprep.subr.bf16.mxu0 0
        %1041 = vmatpush2.bf16.msra.mxu0 0
        %1042 = vmatprep.subr.bf16.mxu0 0
        %1043 = vmatpush2.bf16.msra.mxu0 0
        %1044 = vmatprep.subr.bf16.mxu0 0
        %1045 = vmatpush2.bf16.msra.mxu0 0
        %1046 = vmatprep.subr.bf16.mxu0 0
        %1047 = vmatpush2.bf16.msra.mxu0 0
        %1048 = vmatprep.subr.bf16.mxu0 0
        %1049 = vmatpush2.bf16.msra.mxu0 0
        %1050 = vmatprep.subr.bf16.mxu0 0
        %1051 = vmatpush2.bf16.msra.mxu0 0
        %1052 = vmatprep.mubr.bf16.mxu0 0
        %1053 = vmatmul.mubr.bf16.gmra.mxu0 %v1015
        %v1054 = vpop.f32.mrf.mxu0
        %v1055 = vadd.f32 0.0, %v1054
        %v1056 = vpop.f32.mrf.mxu0
        %v1057 = vpop.f32.mrf.mxu0
        %v1058 = vpop.f32.mrf.mxu0
        %1059 = vdwg.mxu0
        %v1061 = vsel %vm789, %v897, 0
        %v1064 = vsel %vm853, %v898, 0
        %1066 = vmatprep.subr.bf16.mxu0 0
        %1067 = vmatpush1.bf16.msra.mxu0 0
        %1068 = vmatprep.subr.bf16.mxu0 0
        %1069 = vmatpush1.bf16.msra.mxu0 0
        %1070 = vmatprep.subr.bf16.mxu0 0
        %1071 = vmatpush1.bf16.msra.mxu0 0
        %1072 = vmatprep.subr.bf16.mxu0 0
        %1073 = vmatpush1.bf16.msra.mxu0 0
        %1074 = vmatprep.subr.bf16.mxu0 0
        %1075 = vmatpush1.bf16.msra.mxu0 0
        %1076 = vmatprep.subr.bf16.mxu0 0
        %1077 = vmatpush1.bf16.msra.mxu0 0
        %1078 = vmatprep.subr.bf16.mxu0 0
        %1079 = vmatpush1.bf16.msra.mxu0 0
        %1080 = vmatprep.subr.bf16.mxu0 0
        %1081 = vmatpush1.bf16.msra.mxu0 %v1064
        %1082 = vmatprep.subr.bf16.mxu0 0
        %1083 = vmatpush2.bf16.msra.mxu0 0
        %1084 = vmatprep.subr.bf16.mxu0 0
        %1085 = vmatpush2.bf16.msra.mxu0 0
        %1086 = vmatprep.subr.bf16.mxu0 0
        %1087 = vmatpush2.bf16.msra.mxu0 0
        %1088 = vmatprep.subr.bf16.mxu0 0
        %1089 = vmatpush2.bf16.msra.mxu0 0
        %1090 = vmatprep.subr.bf16.mxu0 0
        %1091 = vmatpush2.bf16.msra.mxu0 0
        %1092 = vmatprep.subr.bf16.mxu0 0
        %1093 = vmatpush2.bf16.msra.mxu0 0
        %1094 = vmatprep.subr.bf16.mxu0 0
        %1095 = vmatpush2.bf16.msra.mxu0 0
        %1096 = vmatprep.subr.bf16.mxu0 0
        %1097 = vmatpush2.bf16.msra.mxu0 0
        %1098 = vmatprep.mubr.bf16.mxu0 0
        %1099 = vmatmul.mubr.bf16.gmra.mxu0 %v1061
        %v1100 = vpop.f32.mrf.mxu0
        %v1101 = vadd.f32 %v1055, %v1100
        %v1102 = vpop.f32.mrf.mxu0
        %v1103 = vpop.f32.mrf.mxu0
        %v1104 = vpop.f32.mrf.mxu0
        %1105 = vdwg.mxu0
        %1106 = vrot.lane.b32.xlu0 %v779, 112
        %v1107 = vpop.permute.xlu0 %1106
        %1108 = vrot.lane.b32.xlu0 %v779, 48
        %v1109 = vpop.permute.xlu0 %1108
        %v1111 = vsel %vm789, %v1107, 0
        %v1114 = vsel %vm789, %v1109, 0
        %1116 = vmatprep.subr.bf16.mxu0 0
        %1117 = vmatpush1.bf16.xpose.msra.mxu0 0
        %1118 = vmatprep.subr.bf16.mxu0 0
        %1119 = vmatpush1.bf16.xpose.msra.mxu0 0
        %1120 = vmatprep.subr.bf16.mxu0 0
        %1121 = vmatpush1.bf16.xpose.msra.mxu0 0
        %1122 = vmatprep.subr.bf16.mxu0 0
        %1123 = vmatpush1.bf16.xpose.msra.mxu0 0
        %1124 = vmatprep.subr.bf16.mxu0 0
        %1125 = vmatpush1.bf16.xpose.msra.mxu0 0
        %1126 = vmatprep.subr.bf16.mxu0 0
        %1127 = vmatpush1.bf16.xpose.msra.mxu0 0
        %1128 = vmatprep.subr.bf16.mxu0 0
        %1129 = vmatpush1.bf16.xpose.msra.mxu0 0
        %1130 = vmatprep.subr.bf16.mxu0 0
        %1131 = vmatpush1.bf16.xpose.msra.mxu0 %v1114
        %1132 = vmatprep.subr.bf16.mxu0 0
        %1133 = vmatpush2.bf16.xpose.msra.mxu0 0
        %1134 = vmatprep.subr.bf16.mxu0 0
        %1135 = vmatpush2.bf16.xpose.msra.mxu0 0
        %1136 = vmatprep.subr.bf16.mxu0 0
        %1137 = vmatpush2.bf16.xpose.msra.mxu0 0
        %1138 = vmatprep.subr.bf16.mxu0 0
        %1139 = vmatpush2.bf16.xpose.msra.mxu0 0
        %1140 = vmatprep.subr.bf16.mxu0 0
        %1141 = vmatpush2.bf16.xpose.msra.mxu0 0
        %1142 = vmatprep.subr.bf16.mxu0 0
        %1143 = vmatpush2.bf16.xpose.msra.mxu0 0
        %1144 = vmatprep.subr.bf16.mxu0 0
        %1145 = vmatpush2.bf16.xpose.msra.mxu0 0
        %1146 = vmatprep.subr.bf16.mxu0 0
        %1147 = vmatpush2.bf16.xpose.msra.mxu0 0
        %1148 = vmatprep.mubr.bf16.mxu0 0
        %1149 = vmatmul.mubr.bf16.gmra.mxu0 %v1111
        %v1150 = vpop.f32.mrf.mxu0
        %v1151 = vadd.f32 0.0, %v1150
        %v1152 = vpop.f32.mrf.mxu0
        %v1153 = vpop.f32.mrf.mxu0
        %v1154 = vpop.f32.mrf.mxu0
        %1155 = vdwg.mxu0
        %v1156 = vmul.f32 %v1151, 0.35355338
        %v1157 = vsel %vm785, %v1156, -1e+30
        %v1158 = vsel %vm789, %v1157, -inf
        %1159 = vmax.xlane.f32.xlu0 %v1158
        %v1160 = vpop.xlane.xlu0 %1159
        %v1161 = vsub.f32 %v1157, %v1160
        %v1162 = vmul.f32 %v1161, 1.442695
        %v1163 = vpow.pop %v1162
        %v1164 = vsel %vm789, %v1163, 0.0
        %1165 = vadd.xlane.f32.xlu0 %v1164
        %v1166 = vpop.xlane.xlu0 %1165
        %v1167 = vrcp.pop %v1166
        %v1168 = vmul.f32 %v1163, %v1167
        %v1169 = vpack.c.bf16 %v1168, %v1168
        %1170 = vrot.lane.b32.xlu0 %v780, 112
        %v1171 = vpop.permute.xlu0 %1170
        %v1173 = vsel %vm789, %v1169, 0
        %v1176 = vsel %vm853, %v1171, 0
        %1178 = vmatprep.subr.bf16.mxu0 0
        %1179 = vmatpush1.bf16.msra.mxu0 0
        %1180 = vmatprep.subr.bf16.mxu0 0
        %1181 = vmatpush1.bf16.msra.mxu0 0
        %1182 = vmatprep.subr.bf16.mxu0 0
        %1183 = vmatpush1.bf16.msra.mxu0 0
        %1184 = vmatprep.subr.bf16.mxu0 0
        %1185 = vmatpush1.bf16.msra.mxu0 0
        %1186 = vmatprep.subr.bf16.mxu0 0
        %1187 = vmatpush1.bf16.msra.mxu0 0
        %1188 = vmatprep.subr.bf16.mxu0 0
        %1189 = vmatpush1.bf16.msra.mxu0 0
        %1190 = vmatprep.subr.bf16.mxu0 0
        %1191 = vmatpush1.bf16.msra.mxu0 0
        %1192 = vmatprep.subr.bf16.mxu0 0
        %1193 = vmatpush1.bf16.msra.mxu0 %v1176
        %1194 = vmatprep.subr.bf16.mxu0 0
        %1195 = vmatpush2.bf16.msra.mxu0 0
        %1196 = vmatprep.subr.bf16.mxu0 0
        %1197 = vmatpush2.bf16.msra.mxu0 0
        %1198 = vmatprep.subr.bf16.mxu0 0
        %1199 = vmatpush2.bf16.msra.mxu0 0
        %1200 = vmatprep.subr.bf16.mxu0 0
        %1201 = vmatpush2.bf16.msra.mxu0 0
        %1202 = vmatprep.subr.bf16.mxu0 0
        %1203 = vmatpush2.bf16.msra.mxu0 0
        %1204 = vmatprep.subr.bf16.mxu0 0
        %1205 = vmatpush2.bf16.msra.mxu0 0
        %1206 = vmatprep.subr.bf16.mxu0 0
        %1207 = vmatpush2.bf16.msra.mxu0 0
        %1208 = vmatprep.subr.bf16.mxu0 0
        %1209 = vmatpush2.bf16.msra.mxu0 0
        %1210 = vmatprep.mubr.bf16.mxu0 0
        %1211 = vmatmul.mubr.bf16.gmra.mxu0 %v1173
        %v1212 = vpop.f32.mrf.mxu0
        %v1213 = vadd.f32 0.0, %v1212
        %v1214 = vpop.f32.mrf.mxu0
        %v1215 = vpop.f32.mrf.mxu0
        %v1216 = vpop.f32.mrf.mxu0
        %1217 = vdwg.mxu0
        %v1218 = vpack.c.bf16 %v1213, %v1213
        %v1219 = vld [vmem:[%s651 + $0x8] sm:$0xf]
        %v1221 = vsel %vm789, %v1218, 0
        %v1224 = vsel %vm853, %v1219, 0
        %1226 = vmatprep.subr.bf16.mxu0 0
        %1227 = vmatpush1.bf16.msra.mxu0 0
        %1228 = vmatprep.subr.bf16.mxu0 0
        %1229 = vmatpush1.bf16.msra.mxu0 0
        %1230 = vmatprep.subr.bf16.mxu0 0
        %1231 = vmatpush1.bf16.msra.mxu0 0
        %1232 = vmatprep.subr.bf16.mxu0 0
        %1233 = vmatpush1.bf16.msra.mxu0 0
        %1234 = vmatprep.subr.bf16.mxu0 0
        %1235 = vmatpush1.bf16.msra.mxu0 0
        %1236 = vmatprep.subr.bf16.mxu0 0
        %1237 = vmatpush1.bf16.msra.mxu0 0
        %1238 = vmatprep.subr.bf16.mxu0 0
        %1239 = vmatpush1.bf16.msra.mxu0 0
        %1240 = vmatprep.subr.bf16.mxu0 0
        %1241 = vmatpush1.bf16.msra.mxu0 %v1224
        %1242 = vmatprep.subr.bf16.mxu0 0
        %1243 = vmatpush2.bf16.msra.mxu0 0
        %1244 = vmatprep.subr.bf16.mxu0 0
        %1245 = vmatpush2.bf16.msra.mxu0 0
        %1246 = vmatprep.subr.bf16.mxu0 0
        %1247 = vmatpush2.bf16.msra.mxu0 0
        %1248 = vmatprep.subr.bf16.mxu0 0
        %1249 = vmatpush2.bf16.msra.mxu0 0
        %1250 = vmatprep.subr.bf16.mxu0 0
        %1251 = vmatpush2.bf16.msra.mxu0 0
        %1252 = vmatprep.subr.bf16.mxu0 0
        %1253 = vmatpush2.bf16.msra.mxu0 0
        %1254 = vmatprep.subr.bf16.mxu0 0
        %1255 = vmatpush2.bf16.msra.mxu0 0
        %1256 = vmatprep.subr.bf16.mxu0 0
        %1257 = vmatpush2.bf16.msra.mxu0 0
        %1258 = vmatprep.mubr.bf16.mxu0 0
        %1259 = vmatmul.mubr.bf16.gmra.mxu0 %v1221
        %v1260 = vpop.f32.mrf.mxu0
        %v1261 = vadd.f32 0.0, %v1260
        %v1262 = vpop.f32.mrf.mxu0
        %v1263 = vpop.f32.mrf.mxu0
        %v1264 = vpop.f32.mrf.mxu0
        %1265 = vdwg.mxu0
        %v1266 = vadd.f32 %v1101, %v1261
        %1267 = vrot.lane.b32.xlu0 %v779, 104
        %v1268 = vpop.permute.xlu0 %1267
        %1269 = vrot.lane.b32.xlu0 %v779, 40
        %v1270 = vpop.permute.xlu0 %1269
        %v1272 = vsel %vm789, %v1268, 0
        %v1275 = vsel %vm789, %v1270, 0
        %1277 = vmatprep.subr.bf16.mxu0 0
        %1278 = vmatpush1.bf16.xpose.msra.mxu0 0
        %1279 = vmatprep.subr.bf16.mxu0 0
        %1280 = vmatpush1.bf16.xpose.msra.mxu0 0
        %1281 = vmatprep.subr.bf16.mxu0 0
        %1282 = vmatpush1.bf16.xpose.msra.mxu0 0
        %1283 = vmatprep.subr.bf16.mxu0 0
        %1284 = vmatpush1.bf16.xpose.msra.mxu0 0
        %1285 = vmatprep.subr.bf16.mxu0 0
        %1286 = vmatpush1.bf16.xpose.msra.mxu0 0
        %1287 = vmatprep.subr.bf16.mxu0 0
        %1288 = vmatpush1.bf16.xpose.msra.mxu0 0
        %1289 = vmatprep.subr.bf16.mxu0 0
        %1290 = vmatpush1.bf16.xpose.msra.mxu0 0
        %1291 = vmatprep.subr.bf16.mxu0 0
        %1292 = vmatpush1.bf16.xpose.msra.mxu0 %v1275
        %1293 = vmatprep.subr.bf16.mxu0 0
        %1294 = vmatpush2.bf16.xpose.msra.mxu0 0
        %1295 = vmatprep.subr.bf16.mxu0 0
        %1296 = vmatpush2.bf16.xpose.msra.mxu0 0
        %1297 = vmatprep.subr.bf16.mxu0 0
        %1298 = vmatpush2.bf16.xpose.msra.mxu0 0
        %1299 = vmatprep.subr.bf16.mxu0 0
        %1300 = vmatpush2.bf16.xpose.msra.mxu0 0
        %1301 = vmatprep.subr.bf16.mxu0 0
        %1302 = vmatpush2.bf16.xpose.msra.mxu0 0
        %1303 = vmatprep.subr.bf16.mxu0 0
        %1304 = vmatpush2.bf16.xpose.msra.mxu0 0
        %1305 = vmatprep.subr.bf16.mxu0 0
        %1306 = vmatpush2.bf16.xpose.msra.mxu0 0
        %1307 = vmatprep.subr.bf16.mxu0 0
        %1308 = vmatpush2.bf16.xpose.msra.mxu0 0
        %1309 = vmatprep.mubr.bf16.mxu0 0
        %1310 = vmatmul.mubr.bf16.gmra.mxu0 %v1272
        %v1311 = vpop.f32.mrf.mxu0
        %v1312 = vadd.f32 0.0, %v1311
        %v1313 = vpop.f32.mrf.mxu0
        %v1314 = vpop.f32.mrf.mxu0
        %v1315 = vpop.f32.mrf.mxu0
        %1316 = vdwg.mxu0
        %v1317 = vmul.f32 %v1312, 0.35355338
        %v1318 = vsel %vm785, %v1317, -1e+30
        %v1319 = vsel %vm789, %v1318, -inf
        %1320 = vmax.xlane.f32.xlu0 %v1319
        %v1321 = vpop.xlane.xlu0 %1320
        %v1322 = vsub.f32 %v1318, %v1321
        %v1323 = vmul.f32 %v1322, 1.442695
        %v1324 = vpow.pop %v1323
        %v1325 = vsel %vm789, %v1324, 0.0
        %1326 = vadd.xlane.f32.xlu0 %v1325
        %v1327 = vpop.xlane.xlu0 %1326
        %v1328 = vrcp.pop %v1327
        %v1329 = vmul.f32 %v1324, %v1328
        %v1330 = vpack.c.bf16 %v1329, %v1329
        %1331 = vrot.lane.b32.xlu0 %v780, 104
        %v1332 = vpop.permute.xlu0 %1331
        %v1334 = vsel %vm789, %v1330, 0
        %v1337 = vsel %vm853, %v1332, 0
        %1339 = vmatprep.subr.bf16.mxu0 0
        %1340 = vmatpush1.bf16.msra.mxu0 0
        %1341 = vmatprep.subr.bf16.mxu0 0
        %1342 = vmatpush1.bf16.msra.mxu0 0
        %1343 = vmatprep.subr.bf16.mxu0 0
        %1344 = vmatpush1.bf16.msra.mxu0 0
        %1345 = vmatprep.subr.bf16.mxu0 0
        %1346 = vmatpush1.bf16.msra.mxu0 0
        %1347 = vmatprep.subr.bf16.mxu0 0
        %1348 = vmatpush1.bf16.msra.mxu0 0
        %1349 = vmatprep.subr.bf16.mxu0 0
        %1350 = vmatpush1.bf16.msra.mxu0 0
        %1351 = vmatprep.subr.bf16.mxu0 0
        %1352 = vmatpush1.bf16.msra.mxu0 0
        %1353 = vmatprep.subr.bf16.mxu0 0
        %1354 = vmatpush1.bf16.msra.mxu0 %v1337
        %1355 = vmatprep.subr.bf16.mxu0 0
        %1356 = vmatpush2.bf16.msra.mxu0 0
        %1357 = vmatprep.subr.bf16.mxu0 0
        %1358 = vmatpush2.bf16.msra.mxu0 0
        %1359 = vmatprep.subr.bf16.mxu0 0
        %1360 = vmatpush2.bf16.msra.mxu0 0
        %1361 = vmatprep.subr.bf16.mxu0 0
        %1362 = vmatpush2.bf16.msra.mxu0 0
        %1363 = vmatprep.subr.bf16.mxu0 0
        %1364 = vmatpush2.bf16.msra.mxu0 0
        %1365 = vmatprep.subr.bf16.mxu0 0
        %1366 = vmatpush2.bf16.msra.mxu0 0
        %1367 = vmatprep.subr.bf16.mxu0 0
        %1368 = vmatpush2.bf16.msra.mxu0 0
        %1369 = vmatprep.subr.bf16.mxu0 0
        %1370 = vmatpush2.bf16.msra.mxu0 0
        %1371 = vmatprep.mubr.bf16.mxu0 0
        %1372 = vmatmul.mubr.bf16.gmra.mxu0 %v1334
        %v1373 = vpop.f32.mrf.mxu0
        %v1374 = vadd.f32 0.0, %v1373
        %v1375 = vpop.f32.mrf.mxu0
        %v1376 = vpop.f32.mrf.mxu0
        %v1377 = vpop.f32.mrf.mxu0
        %1378 = vdwg.mxu0
        %v1379 = vpack.c.bf16 %v1374, %v1374
        %v1380 = vld [vmem:[%s651 + $0xc] sm:$0xf]
        %v1382 = vsel %vm789, %v1379, 0
        %v1385 = vsel %vm853, %v1380, 0
        %1387 = vmatprep.subr.bf16.mxu0 0
        %1388 = vmatpush1.bf16.msra.mxu0 0
        %1389 = vmatprep.subr.bf16.mxu0 0
        %1390 = vmatpush1.bf16.msra.mxu0 0
        %1391 = vmatprep.subr.bf16.mxu0 0
        %1392 = vmatpush1.bf16.msra.mxu0 0
        %1393 = vmatprep.subr.bf16.mxu0 0
        %1394 = vmatpush1.bf16.msra.mxu0 0
        %1395 = vmatprep.subr.bf16.mxu0 0
        %1396 = vmatpush1.bf16.msra.mxu0 0
        %1397 = vmatprep.subr.bf16.mxu0 0
        %1398 = vmatpush1.bf16.msra.mxu0 0
        %1399 = vmatprep.subr.bf16.mxu0 0
        %1400 = vmatpush1.bf16.msra.mxu0 0
        %1401 = vmatprep.subr.bf16.mxu0 0
        %1402 = vmatpush1.bf16.msra.mxu0 %v1385
        %1403 = vmatprep.subr.bf16.mxu0 0
        %1404 = vmatpush2.bf16.msra.mxu0 0
        %1405 = vmatprep.subr.bf16.mxu0 0
        %1406 = vmatpush2.bf16.msra.mxu0 0
        %1407 = vmatprep.subr.bf16.mxu0 0
        %1408 = vmatpush2.bf16.msra.mxu0 0
        %1409 = vmatprep.subr.bf16.mxu0 0
        %1410 = vmatpush2.bf16.msra.mxu0 0
        %1411 = vmatprep.subr.bf16.mxu0 0
        %1412 = vmatpush2.bf16.msra.mxu0 0
        %1413 = vmatprep.subr.bf16.mxu0 0
        %1414 = vmatpush2.bf16.msra.mxu0 0
        %1415 = vmatprep.subr.bf16.mxu0 0
        %1416 = vmatpush2.bf16.msra.mxu0 0
        %1417 = vmatprep.subr.bf16.mxu0 0
        %1418 = vmatpush2.bf16.msra.mxu0 0
        %1419 = vmatprep.mubr.bf16.mxu0 0
        %1420 = vmatmul.mubr.bf16.gmra.mxu0 %v1382
        %v1421 = vpop.f32.mrf.mxu0
        %v1422 = vadd.f32 0.0, %v1421
        %v1423 = vpop.f32.mrf.mxu0
        %v1424 = vpop.f32.mrf.mxu0
        %v1425 = vpop.f32.mrf.mxu0
        %1426 = vdwg.mxu0
        %v1427 = vadd.f32 %v1266, %v1422
        %1428 = vrot.lane.b32.xlu0 %v779, 96
        %v1429 = vpop.permute.xlu0 %1428
        %1430 = vrot.lane.b32.xlu0 %v779, 32
        %v1431 = vpop.permute.xlu0 %1430
        %v1433 = vsel %vm789, %v1429, 0
        %v1436 = vsel %vm789, %v1431, 0
        %1438 = vmatprep.subr.bf16.mxu0 0
        %1439 = vmatpush1.bf16.xpose.msra.mxu0 0
        %1440 = vmatprep.subr.bf16.mxu0 0
        %1441 = vmatpush1.bf16.xpose.msra.mxu0 0
        %1442 = vmatprep.subr.bf16.mxu0 0
        %1443 = vmatpush1.bf16.xpose.msra.mxu0 0
        %1444 = vmatprep.subr.bf16.mxu0 0
        %1445 = vmatpush1.bf16.xpose.msra.mxu0 0
        %1446 = vmatprep.subr.bf16.mxu0 0
        %1447 = vmatpush1.bf16.xpose.msra.mxu0 0
        %1448 = vmatprep.subr.bf16.mxu0 0
        %1449 = vmatpush1.bf16.xpose.msra.mxu0 0
        %1450 = vmatprep.subr.bf16.mxu0 0
        %1451 = vmatpush1.bf16.xpose.msra.mxu0 0
        %1452 = vmatprep.subr.bf16.mxu0 0
        %1453 = vmatpush1.bf16.xpose.msra.mxu0 %v1436
        %1454 = vmatprep.subr.bf16.mxu0 0
        %1455 = vmatpush2.bf16.xpose.msra.mxu0 0
        %1456 = vmatprep.subr.bf16.mxu0 0
        %1457 = vmatpush2.bf16.xpose.msra.mxu0 0
        %1458 = vmatprep.subr.bf16.mxu0 0
        %1459 = vmatpush2.bf16.xpose.msra.mxu0 0
        %1460 = vmatprep.subr.bf16.mxu0 0
        %1461 = vmatpush2.bf16.xpose.msra.mxu0 0
        %1462 = vmatprep.subr.bf16.mxu0 0
        %1463 = vmatpush2.bf16.xpose.msra.mxu0 0
        %1464 = vmatprep.subr.bf16.mxu0 0
        %1465 = vmatpush2.bf16.xpose.msra.mxu0 0
        %1466 = vmatprep.subr.bf16.mxu0 0
        %1467 = vmatpush2.bf16.xpose.msra.mxu0 0
        %1468 = vmatprep.subr.bf16.mxu0 0
        %1469 = vmatpush2.bf16.xpose.msra.mxu0 0
        %1470 = vmatprep.mubr.bf16.mxu0 0
        %1471 = vmatmul.mubr.bf16.gmra.mxu0 %v1433
        %v1472 = vpop.f32.mrf.mxu0
        %v1473 = vadd.f32 0.0, %v1472
        %v1474 = vpop.f32.mrf.mxu0
        %v1475 = vpop.f32.mrf.mxu0
        %v1476 = vpop.f32.mrf.mxu0
        %1477 = vdwg.mxu0
        %v1478 = vmul.f32 %v1473, 0.35355338
        %v1479 = vsel %vm785, %v1478, -1e+30
        %v1480 = vsel %vm789, %v1479, -inf
        %1481 = vmax.xlane.f32.xlu0 %v1480
        %v1482 = vpop.xlane.xlu0 %1481
        %v1483 = vsub.f32 %v1479, %v1482
        %v1484 = vmul.f32 %v1483, 1.442695
        %v1485 = vpow.pop %v1484
        %v1486 = vsel %vm789, %v1485, 0.0
        %1487 = vadd.xlane.f32.xlu0 %v1486
        %v1488 = vpop.xlane.xlu0 %1487
        %v1489 = vrcp.pop %v1488
        %v1490 = vmul.f32 %v1485, %v1489
        %v1491 = vpack.c.bf16 %v1490, %v1490
        %1492 = vrot.lane.b32.xlu0 %v780, 96
        %v1493 = vpop.permute.xlu0 %1492
        %v1495 = vsel %vm789, %v1491, 0
        %v1498 = vsel %vm853, %v1493, 0
        %1500 = vmatprep.subr.bf16.mxu0 0
        %1501 = vmatpush1.bf16.msra.mxu0 0
        %1502 = vmatprep.subr.bf16.mxu0 0
        %1503 = vmatpush1.bf16.msra.mxu0 0
        %1504 = vmatprep.subr.bf16.mxu0 0
        %1505 = vmatpush1.bf16.msra.mxu0 0
        %1506 = vmatprep.subr.bf16.mxu0 0
        %1507 = vmatpush1.bf16.msra.mxu0 0
        %1508 = vmatprep.subr.bf16.mxu0 0
        %1509 = vmatpush1.bf16.msra.mxu0 0
        %1510 = vmatprep.subr.bf16.mxu0 0
        %1511 = vmatpush1.bf16.msra.mxu0 0
        %1512 = vmatprep.subr.bf16.mxu0 0
        %1513 = vmatpush1.bf16.msra.mxu0 0
        %1514 = vmatprep.subr.bf16.mxu0 0
        %1515 = vmatpush1.bf16.msra.mxu0 %v1498
        %1516 = vmatprep.subr.bf16.mxu0 0
        %1517 = vmatpush2.bf16.msra.mxu0 0
        %1518 = vmatprep.subr.bf16.mxu0 0
        %1519 = vmatpush2.bf16.msra.mxu0 0
        %1520 = vmatprep.subr.bf16.mxu0 0
        %1521 = vmatpush2.bf16.msra.mxu0 0
        %1522 = vmatprep.subr.bf16.mxu0 0
        %1523 = vmatpush2.bf16.msra.mxu0 0
        %1524 = vmatprep.subr.bf16.mxu0 0
        %1525 = vmatpush2.bf16.msra.mxu0 0
        %1526 = vmatprep.subr.bf16.mxu0 0
        %1527 = vmatpush2.bf16.msra.mxu0 0
        %1528 = vmatprep.subr.bf16.mxu0 0
        %1529 = vmatpush2.bf16.msra.mxu0 0
        %1530 = vmatprep.subr.bf16.mxu0 0
        %1531 = vmatpush2.bf16.msra.mxu0 0
        %1532 = vmatprep.mubr.bf16.mxu0 0
        %1533 = vmatmul.mubr.bf16.gmra.mxu0 %v1495
        %v1534 = vpop.f32.mrf.mxu0
        %v1535 = vadd.f32 0.0, %v1534
        %v1536 = vpop.f32.mrf.mxu0
        %v1537 = vpop.f32.mrf.mxu0
        %v1538 = vpop.f32.mrf.mxu0
        %1539 = vdwg.mxu0
        %v1540 = vpack.c.bf16 %v1535, %v1535
        %v1541 = vld [vmem:[%s651 + $0x10] sm:$0xf]
        %v1543 = vsel %vm789, %v1540, 0
        %v1546 = vsel %vm853, %v1541, 0
        %1548 = vmatprep.subr.bf16.mxu0 0
        %1549 = vmatpush1.bf16.msra.mxu0 0
        %1550 = vmatprep.subr.bf16.mxu0 0
        %1551 = vmatpush1.bf16.msra.mxu0 0
        %1552 = vmatprep.subr.bf16.mxu0 0
        %1553 = vmatpush1.bf16.msra.mxu0 0
        %1554 = vmatprep.subr.bf16.mxu0 0
        %1555 = vmatpush1.bf16.msra.mxu0 0
        %1556 = vmatprep.subr.bf16.mxu0 0
        %1557 = vmatpush1.bf16.msra.mxu0 0
        %1558 = vmatprep.subr.bf16.mxu0 0
        %1559 = vmatpush1.bf16.msra.mxu0 0
        %1560 = vmatprep.subr.bf16.mxu0 0
        %1561 = vmatpush1.bf16.msra.mxu0 0
        %1562 = vmatprep.subr.bf16.mxu0 0
        %1563 = vmatpush1.bf16.msra.mxu0 %v1546
        %1564 = vmatprep.subr.bf16.mxu0 0
        %1565 = vmatpush2.bf16.msra.mxu0 0
        %1566 = vmatprep.subr.bf16.mxu0 0
        %1567 = vmatpush2.bf16.msra.mxu0 0
        %1568 = vmatprep.subr.bf16.mxu0 0
        %1569 = vmatpush2.bf16.msra.mxu0 0
        %1570 = vmatprep.subr.bf16.mxu0 0
        %1571 = vmatpush2.bf16.msra.mxu0 0
        %1572 = vmatprep.subr.bf16.mxu0 0
        %1573 = vmatpush2.bf16.msra.mxu0 0
        %1574 = vmatprep.subr.bf16.mxu0 0
        %1575 = vmatpush2.bf16.msra.mxu0 0
        %1576 = vmatprep.subr.bf16.mxu0 0
        %1577 = vmatpush2.bf16.msra.mxu0 0
        %1578 = vmatprep.subr.bf16.mxu0 0
        %1579 = vmatpush2.bf16.msra.mxu0 0
        %1580 = vmatprep.mubr.bf16.mxu0 0
        %1581 = vmatmul.mubr.bf16.gmra.mxu0 %v1543
        %v1582 = vpop.f32.mrf.mxu0
        %v1583 = vadd.f32 0.0, %v1582
        %v1584 = vpop.f32.mrf.mxu0
        %v1585 = vpop.f32.mrf.mxu0
        %v1586 = vpop.f32.mrf.mxu0
        %1587 = vdwg.mxu0
        %v1588 = vadd.f32 %v1427, %v1583
        %1589 = vrot.lane.b32.xlu0 %v779, 88
        %v1590 = vpop.permute.xlu0 %1589
        %1591 = vrot.lane.b32.xlu0 %v779, 24
        %v1592 = vpop.permute.xlu0 %1591
        %v1594 = vsel %vm789, %v1590, 0
        %v1597 = vsel %vm789, %v1592, 0
        %1599 = vmatprep.subr.bf16.mxu0 0
        %1600 = vmatpush1.bf16.xpose.msra.mxu0 0
        %1601 = vmatprep.subr.bf16.mxu0 0
        %1602 = vmatpush1.bf16.xpose.msra.mxu0 0
        %1603 = vmatprep.subr.bf16.mxu0 0
        %1604 = vmatpush1.bf16.xpose.msra.mxu0 0
        %1605 = vmatprep.subr.bf16.mxu0 0
        %1606 = vmatpush1.bf16.xpose.msra.mxu0 0
        %1607 = vmatprep.subr.bf16.mxu0 0
        %1608 = vmatpush1.bf16.xpose.msra.mxu0 0
        %1609 = vmatprep.subr.bf16.mxu0 0
        %1610 = vmatpush1.bf16.xpose.msra.mxu0 0
        %1611 = vmatprep.subr.bf16.mxu0 0
        %1612 = vmatpush1.bf16.xpose.msra.mxu0 0
        %1613 = vmatprep.subr.bf16.mxu0 0
        %1614 = vmatpush1.bf16.xpose.msra.mxu0 %v1597
        %1615 = vmatprep.subr.bf16.mxu0 0
        %1616 = vmatpush2.bf16.xpose.msra.mxu0 0
        %1617 = vmatprep.subr.bf16.mxu0 0
        %1618 = vmatpush2.bf16.xpose.msra.mxu0 0
        %1619 = vmatprep.subr.bf16.mxu0 0
        %1620 = vmatpush2.bf16.xpose.msra.mxu0 0
        %1621 = vmatprep.subr.bf16.mxu0 0
        %1622 = vmatpush2.bf16.xpose.msra.mxu0 0
        %1623 = vmatprep.subr.bf16.mxu0 0
        %1624 = vmatpush2.bf16.xpose.msra.mxu0 0
        %1625 = vmatprep.subr.bf16.mxu0 0
        %1626 = vmatpush2.bf16.xpose.msra.mxu0 0
        %1627 = vmatprep.subr.bf16.mxu0 0
        %1628 = vmatpush2.bf16.xpose.msra.mxu0 0
        %1629 = vmatprep.subr.bf16.mxu0 0
        %1630 = vmatpush2.bf16.xpose.msra.mxu0 0
        %1631 = vmatprep.mubr.bf16.mxu0 0
        %1632 = vmatmul.mubr.bf16.gmra.mxu0 %v1594
        %v1633 = vpop.f32.mrf.mxu0
        %v1634 = vadd.f32 0.0, %v1633
        %v1635 = vpop.f32.mrf.mxu0
        %v1636 = vpop.f32.mrf.mxu0
        %v1637 = vpop.f32.mrf.mxu0
        %1638 = vdwg.mxu0
        %v1639 = vmul.f32 %v1634, 0.35355338
        %v1640 = vsel %vm785, %v1639, -1e+30
        %v1641 = vsel %vm789, %v1640, -inf
        %1642 = vmax.xlane.f32.xlu0 %v1641
        %v1643 = vpop.xlane.xlu0 %1642
        %v1644 = vsub.f32 %v1640, %v1643
        %v1645 = vmul.f32 %v1644, 1.442695
        %v1646 = vpow.pop %v1645
        %v1647 = vsel %vm789, %v1646, 0.0
        %1648 = vadd.xlane.f32.xlu0 %v1647
        %v1649 = vpop.xlane.xlu0 %1648
        %v1650 = vrcp.pop %v1649
        %v1651 = vmul.f32 %v1646, %v1650
        %v1652 = vpack.c.bf16 %v1651, %v1651
        %1653 = vrot.lane.b32.xlu0 %v780, 88
        %v1654 = vpop.permute.xlu0 %1653
        %v1656 = vsel %vm789, %v1652, 0
        %v1659 = vsel %vm853, %v1654, 0
        %1661 = vmatprep.subr.bf16.mxu0 0
        %1662 = vmatpush1.bf16.msra.mxu0 0
        %1663 = vmatprep.subr.bf16.mxu0 0
        %1664 = vmatpush1.bf16.msra.mxu0 0
        %1665 = vmatprep.subr.bf16.mxu0 0
        %1666 = vmatpush1.bf16.msra.mxu0 0
        %1667 = vmatprep.subr.bf16.mxu0 0
        %1668 = vmatpush1.bf16.msra.mxu0 0
        %1669 = vmatprep.subr.bf16.mxu0 0
        %1670 = vmatpush1.bf16.msra.mxu0 0
        %1671 = vmatprep.subr.bf16.mxu0 0
        %1672 = vmatpush1.bf16.msra.mxu0 0
        %1673 = vmatprep.subr.bf16.mxu0 0
        %1674 = vmatpush1.bf16.msra.mxu0 0
        %1675 = vmatprep.subr.bf16.mxu0 0
        %1676 = vmatpush1.bf16.msra.mxu0 %v1659
        %1677 = vmatprep.subr.bf16.mxu0 0
        %1678 = vmatpush2.bf16.msra.mxu0 0
        %1679 = vmatprep.subr.bf16.mxu0 0
        %1680 = vmatpush2.bf16.msra.mxu0 0
        %1681 = vmatprep.subr.bf16.mxu0 0
        %1682 = vmatpush2.bf16.msra.mxu0 0
        %1683 = vmatprep.subr.bf16.mxu0 0
        %1684 = vmatpush2.bf16.msra.mxu0 0
        %1685 = vmatprep.subr.bf16.mxu0 0
        %1686 = vmatpush2.bf16.msra.mxu0 0
        %1687 = vmatprep.subr.bf16.mxu0 0
        %1688 = vmatpush2.bf16.msra.mxu0 0
        %1689 = vmatprep.subr.bf16.mxu0 0
        %1690 = vmatpush2.bf16.msra.mxu0 0
        %1691 = vmatprep.subr.bf16.mxu0 0
        %1692 = vmatpush2.bf16.msra.mxu0 0
        %1693 = vmatprep.mubr.bf16.mxu0 0
        %1694 = vmatmul.mubr.bf16.gmra.mxu0 %v1656
        %v1695 = vpop.f32.mrf.mxu0
        %v1696 = vadd.f32 0.0, %v1695
        %v1697 = vpop.f32.mrf.mxu0
        %v1698 = vpop.f32.mrf.mxu0
        %v1699 = vpop.f32.mrf.mxu0
        %1700 = vdwg.mxu0
        %v1701 = vpack.c.bf16 %v1696, %v1696
        %v1702 = vld [vmem:[%s651 + $0x14] sm:$0xf]
        %v1704 = vsel %vm789, %v1701, 0
        %v1707 = vsel %vm853, %v1702, 0
        %1709 = vmatprep.subr.bf16.mxu0 0
        %1710 = vmatpush1.bf16.msra.mxu0 0
        %1711 = vmatprep.subr.bf16.mxu0 0
        %1712 = vmatpush1.bf16.msra.mxu0 0
        %1713 = vmatprep.subr.bf16.mxu0 0
        %1714 = vmatpush1.bf16.msra.mxu0 0
        %1715 = vmatprep.subr.bf16.mxu0 0
        %1716 = vmatpush1.bf16.msra.mxu0 0
        %1717 = vmatprep.subr.bf16.mxu0 0
        %1718 = vmatpush1.bf16.msra.mxu0 0
        %1719 = vmatprep.subr.bf16.mxu0 0
        %1720 = vmatpush1.bf16.msra.mxu0 0
        %1721 = vmatprep.subr.bf16.mxu0 0
        %1722 = vmatpush1.bf16.msra.mxu0 0
        %1723 = vmatprep.subr.bf16.mxu0 0
        %1724 = vmatpush1.bf16.msra.mxu0 %v1707
        %1725 = vmatprep.subr.bf16.mxu0 0
        %1726 = vmatpush2.bf16.msra.mxu0 0
        %1727 = vmatprep.subr.bf16.mxu0 0
        %1728 = vmatpush2.bf16.msra.mxu0 0
        %1729 = vmatprep.subr.bf16.mxu0 0
        %1730 = vmatpush2.bf16.msra.mxu0 0
        %1731 = vmatprep.subr.bf16.mxu0 0
        %1732 = vmatpush2.bf16.msra.mxu0 0
        %1733 = vmatprep.subr.bf16.mxu0 0
        %1734 = vmatpush2.bf16.msra.mxu0 0
        %1735 = vmatprep.subr.bf16.mxu0 0
        %1736 = vmatpush2.bf16.msra.mxu0 0
        %1737 = vmatprep.subr.bf16.mxu0 0
        %1738 = vmatpush2.bf16.msra.mxu0 0
        %1739 = vmatprep.subr.bf16.mxu0 0
        %1740 = vmatpush2.bf16.msra.mxu0 0
        %1741 = vmatprep.mubr.bf16.mxu0 0
        %1742 = vmatmul.mubr.bf16.gmra.mxu0 %v1704
        %v1743 = vpop.f32.mrf.mxu0
        %v1744 = vadd.f32 0.0, %v1743
        %v1745 = vpop.f32.mrf.mxu0
        %v1746 = vpop.f32.mrf.mxu0
        %v1747 = vpop.f32.mrf.mxu0
        %1748 = vdwg.mxu0
        %v1749 = vadd.f32 %v1588, %v1744
        %1750 = vrot.lane.b32.xlu0 %v779, 80
        %v1751 = vpop.permute.xlu0 %1750
        %1752 = vrot.lane.b32.xlu0 %v779, 16
        %v1753 = vpop.permute.xlu0 %1752
        %v1755 = vsel %vm789, %v1751, 0
        %v1758 = vsel %vm789, %v1753, 0
        %1760 = vmatprep.subr.bf16.mxu0 0
        %1761 = vmatpush1.bf16.xpose.msra.mxu0 0
        %1762 = vmatprep.subr.bf16.mxu0 0
        %1763 = vmatpush1.bf16.xpose.msra.mxu0 0
        %1764 = vmatprep.subr.bf16.mxu0 0
        %1765 = vmatpush1.bf16.xpose.msra.mxu0 0
        %1766 = vmatprep.subr.bf16.mxu0 0
        %1767 = vmatpush1.bf16.xpose.msra.mxu0 0
        %1768 = vmatprep.subr.bf16.mxu0 0
        %1769 = vmatpush1.bf16.xpose.msra.mxu0 0
        %1770 = vmatprep.subr.bf16.mxu0 0
        %1771 = vmatpush1.bf16.xpose.msra.mxu0 0
        %1772 = vmatprep.subr.bf16.mxu0 0
        %1773 = vmatpush1.bf16.xpose.msra.mxu0 0
        %1774 = vmatprep.subr.bf16.mxu0 0
        %1775 = vmatpush1.bf16.xpose.msra.mxu0 %v1758
        %1776 = vmatprep.subr.bf16.mxu0 0
        %1777 = vmatpush2.bf16.xpose.msra.mxu0 0
        %1778 = vmatprep.subr.bf16.mxu0 0
        %1779 = vmatpush2.bf16.xpose.msra.mxu0 0
        %1780 = vmatprep.subr.bf16.mxu0 0
        %1781 = vmatpush2.bf16.xpose.msra.mxu0 0
        %1782 = vmatprep.subr.bf16.mxu0 0
        %1783 = vmatpush2.bf16.xpose.msra.mxu0 0
        %1784 = vmatprep.subr.bf16.mxu0 0
        %1785 = vmatpush2.bf16.xpose.msra.mxu0 0
        %1786 = vmatprep.subr.bf16.mxu0 0
        %1787 = vmatpush2.bf16.xpose.msra.mxu0 0
        %1788 = vmatprep.subr.bf16.mxu0 0
        %1789 = vmatpush2.bf16.xpose.msra.mxu0 0
        %1790 = vmatprep.subr.bf16.mxu0 0
        %1791 = vmatpush2.bf16.xpose.msra.mxu0 0
        %1792 = vmatprep.mubr.bf16.mxu0 0
        %1793 = vmatmul.mubr.bf16.gmra.mxu0 %v1755
        %v1794 = vpop.f32.mrf.mxu0
        %v1795 = vadd.f32 0.0, %v1794
        %v1796 = vpop.f32.mrf.mxu0
        %v1797 = vpop.f32.mrf.mxu0
        %v1798 = vpop.f32.mrf.mxu0
        %1799 = vdwg.mxu0
        %v1800 = vmul.f32 %v1795, 0.35355338
        %v1801 = vsel %vm785, %v1800, -1e+30
        %v1802 = vsel %vm789, %v1801, -inf
        %1803 = vmax.xlane.f32.xlu0 %v1802
        %v1804 = vpop.xlane.xlu0 %1803
        %v1805 = vsub.f32 %v1801, %v1804
        %v1806 = vmul.f32 %v1805, 1.442695
        %v1807 = vpow.pop %v1806
        %v1808 = vsel %vm789, %v1807, 0.0
        %1809 = vadd.xlane.f32.xlu0 %v1808
        %v1810 = vpop.xlane.xlu0 %1809
        %v1811 = vrcp.pop %v1810
        %v1812 = vmul.f32 %v1807, %v1811
        %v1813 = vpack.c.bf16 %v1812, %v1812
        %1814 = vrot.lane.b32.xlu0 %v780, 80
        %v1815 = vpop.permute.xlu0 %1814
        %v1817 = vsel %vm789, %v1813, 0
        %v1820 = vsel %vm853, %v1815, 0
        %1822 = vmatprep.subr.bf16.mxu0 0
        %1823 = vmatpush1.bf16.msra.mxu0 0
        %1824 = vmatprep.subr.bf16.mxu0 0
        %1825 = vmatpush1.bf16.msra.mxu0 0
        %1826 = vmatprep.subr.bf16.mxu0 0
        %1827 = vmatpush1.bf16.msra.mxu0 0
        %1828 = vmatprep.subr.bf16.mxu0 0
        %1829 = vmatpush1.bf16.msra.mxu0 0
        %1830 = vmatprep.subr.bf16.mxu0 0
        %1831 = vmatpush1.bf16.msra.mxu0 0
        %1832 = vmatprep.subr.bf16.mxu0 0
        %1833 = vmatpush1.bf16.msra.mxu0 0
        %1834 = vmatprep.subr.bf16.mxu0 0
        %1835 = vmatpush1.bf16.msra.mxu0 0
        %1836 = vmatprep.subr.bf16.mxu0 0
        %1837 = vmatpush1.bf16.msra.mxu0 %v1820
        %1838 = vmatprep.subr.bf16.mxu0 0
        %1839 = vmatpush2.bf16.msra.mxu0 0
        %1840 = vmatprep.subr.bf16.mxu0 0
        %1841 = vmatpush2.bf16.msra.mxu0 0
        %1842 = vmatprep.subr.bf16.mxu0 0
        %1843 = vmatpush2.bf16.msra.mxu0 0
        %1844 = vmatprep.subr.bf16.mxu0 0
        %1845 = vmatpush2.bf16.msra.mxu0 0
        %1846 = vmatprep.subr.bf16.mxu0 0
        %1847 = vmatpush2.bf16.msra.mxu0 0
        %1848 = vmatprep.subr.bf16.mxu0 0
        %1849 = vmatpush2.bf16.msra.mxu0 0
        %1850 = vmatprep.subr.bf16.mxu0 0
        %1851 = vmatpush2.bf16.msra.mxu0 0
        %1852 = vmatprep.subr.bf16.mxu0 0
        %1853 = vmatpush2.bf16.msra.mxu0 0
        %1854 = vmatprep.mubr.bf16.mxu0 0
        %1855 = vmatmul.mubr.bf16.gmra.mxu0 %v1817
        %v1856 = vpop.f32.mrf.mxu0
        %v1857 = vadd.f32 0.0, %v1856
        %v1858 = vpop.f32.mrf.mxu0
        %v1859 = vpop.f32.mrf.mxu0
        %v1860 = vpop.f32.mrf.mxu0
        %1861 = vdwg.mxu0
        %v1862 = vpack.c.bf16 %v1857, %v1857
        %v1863 = vld [vmem:[%s651 + $0x18] sm:$0xf]
        %v1865 = vsel %vm789, %v1862, 0
        %v1868 = vsel %vm853, %v1863, 0
        %1870 = vmatprep.subr.bf16.mxu0 0
        %1871 = vmatpush1.bf16.msra.mxu0 0
        %1872 = vmatprep.subr.bf16.mxu0 0
        %1873 = vmatpush1.bf16.msra.mxu0 0
        %1874 = vmatprep.subr.bf16.mxu0 0
        %1875 = vmatpush1.bf16.msra.mxu0 0
        %1876 = vmatprep.subr.bf16.mxu0 0
        %1877 = vmatpush1.bf16.msra.mxu0 0
        %1878 = vmatprep.subr.bf16.mxu0 0
        %1879 = vmatpush1.bf16.msra.mxu0 0
        %1880 = vmatprep.subr.bf16.mxu0 0
        %1881 = vmatpush1.bf16.msra.mxu0 0
        %1882 = vmatprep.subr.bf16.mxu0 0
        %1883 = vmatpush1.bf16.msra.mxu0 0
        %1884 = vmatprep.subr.bf16.mxu0 0
        %1885 = vmatpush1.bf16.msra.mxu0 %v1868
        %1886 = vmatprep.subr.bf16.mxu0 0
        %1887 = vmatpush2.bf16.msra.mxu0 0
        %1888 = vmatprep.subr.bf16.mxu0 0
        %1889 = vmatpush2.bf16.msra.mxu0 0
        %1890 = vmatprep.subr.bf16.mxu0 0
        %1891 = vmatpush2.bf16.msra.mxu0 0
        %1892 = vmatprep.subr.bf16.mxu0 0
        %1893 = vmatpush2.bf16.msra.mxu0 0
        %1894 = vmatprep.subr.bf16.mxu0 0
        %1895 = vmatpush2.bf16.msra.mxu0 0
        %1896 = vmatprep.subr.bf16.mxu0 0
        %1897 = vmatpush2.bf16.msra.mxu0 0
        %1898 = vmatprep.subr.bf16.mxu0 0
        %1899 = vmatpush2.bf16.msra.mxu0 0
        %1900 = vmatprep.subr.bf16.mxu0 0
        %1901 = vmatpush2.bf16.msra.mxu0 0
        %1902 = vmatprep.mubr.bf16.mxu0 0
        %1903 = vmatmul.mubr.bf16.gmra.mxu0 %v1865
        %v1904 = vpop.f32.mrf.mxu0
        %v1905 = vadd.f32 0.0, %v1904
        %v1906 = vpop.f32.mrf.mxu0
        %v1907 = vpop.f32.mrf.mxu0
        %v1908 = vpop.f32.mrf.mxu0
        %1909 = vdwg.mxu0
        %v1910 = vadd.f32 %v1749, %v1905
        %1911 = vrot.lane.b32.xlu0 %v779, 72
        %v1912 = vpop.permute.xlu0 %1911
        %1913 = vrot.lane.b32.xlu0 %v779, 8
        %v1914 = vpop.permute.xlu0 %1913
        %v1916 = vsel %vm789, %v1912, 0
        %v1919 = vsel %vm789, %v1914, 0
        %1921 = vmatprep.subr.bf16.mxu0 0
        %1922 = vmatpush1.bf16.xpose.msra.mxu0 0
        %1923 = vmatprep.subr.bf16.mxu0 0
        %1924 = vmatpush1.bf16.xpose.msra.mxu0 0
        %1925 = vmatprep.subr.bf16.mxu0 0
        %1926 = vmatpush1.bf16.xpose.msra.mxu0 0
        %1927 = vmatprep.subr.bf16.mxu0 0
        %1928 = vmatpush1.bf16.xpose.msra.mxu0 0
        %1929 = vmatprep.subr.bf16.mxu0 0
        %1930 = vmatpush1.bf16.xpose.msra.mxu0 0
        %1931 = vmatprep.subr.bf16.mxu0 0
        %1932 = vmatpush1.bf16.xpose.msra.mxu0 0
        %1933 = vmatprep.subr.bf16.mxu0 0
        %1934 = vmatpush1.bf16.xpose.msra.mxu0 0
        %1935 = vmatprep.subr.bf16.mxu0 0
        %1936 = vmatpush1.bf16.xpose.msra.mxu0 %v1919
        %1937 = vmatprep.subr.bf16.mxu0 0
        %1938 = vmatpush2.bf16.xpose.msra.mxu0 0
        %1939 = vmatprep.subr.bf16.mxu0 0
        %1940 = vmatpush2.bf16.xpose.msra.mxu0 0
        %1941 = vmatprep.subr.bf16.mxu0 0
        %1942 = vmatpush2.bf16.xpose.msra.mxu0 0
        %1943 = vmatprep.subr.bf16.mxu0 0
        %1944 = vmatpush2.bf16.xpose.msra.mxu0 0
        %1945 = vmatprep.subr.bf16.mxu0 0
        %1946 = vmatpush2.bf16.xpose.msra.mxu0 0
        %1947 = vmatprep.subr.bf16.mxu0 0
        %1948 = vmatpush2.bf16.xpose.msra.mxu0 0
        %1949 = vmatprep.subr.bf16.mxu0 0
        %1950 = vmatpush2.bf16.xpose.msra.mxu0 0
        %1951 = vmatprep.subr.bf16.mxu0 0
        %1952 = vmatpush2.bf16.xpose.msra.mxu0 0
        %1953 = vmatprep.mubr.bf16.mxu0 0
        %1954 = vmatmul.mubr.bf16.gmra.mxu0 %v1916
        %v1955 = vpop.f32.mrf.mxu0
        %v1956 = vadd.f32 0.0, %v1955
        %v1957 = vpop.f32.mrf.mxu0
        %v1958 = vpop.f32.mrf.mxu0
        %v1959 = vpop.f32.mrf.mxu0
        %1960 = vdwg.mxu0
        %v1961 = vmul.f32 %v1956, 0.35355338
        %v1962 = vsel %vm785, %v1961, -1e+30
        %v1963 = vsel %vm789, %v1962, -inf
        %1964 = vmax.xlane.f32.xlu0 %v1963
        %v1965 = vpop.xlane.xlu0 %1964
        %v1966 = vsub.f32 %v1962, %v1965
        %v1967 = vmul.f32 %v1966, 1.442695
        %v1968 = vpow.pop %v1967
        %v1969 = vsel %vm789, %v1968, 0.0
        %1970 = vadd.xlane.f32.xlu0 %v1969
        %v1971 = vpop.xlane.xlu0 %1970
        %v1972 = vrcp.pop %v1971
        %v1973 = vmul.f32 %v1968, %v1972
        %v1974 = vpack.c.bf16 %v1973, %v1973
        %1975 = vrot.lane.b32.xlu0 %v780, 72
        %v1976 = vpop.permute.xlu0 %1975
        %v1978 = vsel %vm789, %v1974, 0
        %v1981 = vsel %vm853, %v1976, 0
        %1983 = vmatprep.subr.bf16.mxu0 0
        %1984 = vmatpush1.bf16.msra.mxu0 0
        %1985 = vmatprep.subr.bf16.mxu0 0
        %1986 = vmatpush1.bf16.msra.mxu0 0
        %1987 = vmatprep.subr.bf16.mxu0 0
        %1988 = vmatpush1.bf16.msra.mxu0 0
        %1989 = vmatprep.subr.bf16.mxu0 0
        %1990 = vmatpush1.bf16.msra.mxu0 0
        %1991 = vmatprep.subr.bf16.mxu0 0
        %1992 = vmatpush1.bf16.msra.mxu0 0
        %1993 = vmatprep.subr.bf16.mxu0 0
        %1994 = vmatpush1.bf16.msra.mxu0 0
        %1995 = vmatprep.subr.bf16.mxu0 0
        %1996 = vmatpush1.bf16.msra.mxu0 0
        %1997 = vmatprep.subr.bf16.mxu0 0
        %1998 = vmatpush1.bf16.msra.mxu0 %v1981
        %1999 = vmatprep.subr.bf16.mxu0 0
        %2000 = vmatpush2.bf16.msra.mxu0 0
        %2001 = vmatprep.subr.bf16.mxu0 0
        %2002 = vmatpush2.bf16.msra.mxu0 0
        %2003 = vmatprep.subr.bf16.mxu0 0
        %2004 = vmatpush2.bf16.msra.mxu0 0
        %2005 = vmatprep.subr.bf16.mxu0 0
        %2006 = vmatpush2.bf16.msra.mxu0 0
        %2007 = vmatprep.subr.bf16.mxu0 0
        %2008 = vmatpush2.bf16.msra.mxu0 0
        %2009 = vmatprep.subr.bf16.mxu0 0
        %2010 = vmatpush2.bf16.msra.mxu0 0
        %2011 = vmatprep.subr.bf16.mxu0 0
        %2012 = vmatpush2.bf16.msra.mxu0 0
        %2013 = vmatprep.subr.bf16.mxu0 0
        %2014 = vmatpush2.bf16.msra.mxu0 0
        %2015 = vmatprep.mubr.bf16.mxu0 0
        %2016 = vmatmul.mubr.bf16.gmra.mxu0 %v1978
        %v2017 = vpop.f32.mrf.mxu0
        %v2018 = vadd.f32 0.0, %v2017
        %v2019 = vpop.f32.mrf.mxu0
        %v2020 = vpop.f32.mrf.mxu0
        %v2021 = vpop.f32.mrf.mxu0
        %2022 = vdwg.mxu0
        %v2023 = vpack.c.bf16 %v2018, %v2018
        %v2024 = vld [vmem:[%s651 + $0x1c] sm:$0xf]
        %v2026 = vsel %vm789, %v2023, 0
        %v2029 = vsel %vm853, %v2024, 0
        %2031 = vmatprep.subr.bf16.mxu0 0
        %2032 = vmatpush1.bf16.msra.mxu0 0
        %2033 = vmatprep.subr.bf16.mxu0 0
        %2034 = vmatpush1.bf16.msra.mxu0 0
        %2035 = vmatprep.subr.bf16.mxu0 0
        %2036 = vmatpush1.bf16.msra.mxu0 0
        %2037 = vmatprep.subr.bf16.mxu0 0
        %2038 = vmatpush1.bf16.msra.mxu0 0
        %2039 = vmatprep.subr.bf16.mxu0 0
        %2040 = vmatpush1.bf16.msra.mxu0 0
        %2041 = vmatprep.subr.bf16.mxu0 0
        %2042 = vmatpush1.bf16.msra.mxu0 0
        %2043 = vmatprep.subr.bf16.mxu0 0
        %2044 = vmatpush1.bf16.msra.mxu0 0
        %2045 = vmatprep.subr.bf16.mxu0 0
        %2046 = vmatpush1.bf16.msra.mxu0 %v2029
        %2047 = vmatprep.subr.bf16.mxu0 0
        %2048 = vmatpush2.bf16.msra.mxu0 0
        %2049 = vmatprep.subr.bf16.mxu0 0
        %2050 = vmatpush2.bf16.msra.mxu0 0
        %2051 = vmatprep.subr.bf16.mxu0 0
        %2052 = vmatpush2.bf16.msra.mxu0 0
        %2053 = vmatprep.subr.bf16.mxu0 0
        %2054 = vmatpush2.bf16.msra.mxu0 0
        %2055 = vmatprep.subr.bf16.mxu0 0
        %2056 = vmatpush2.bf16.msra.mxu0 0
        %2057 = vmatprep.subr.bf16.mxu0 0
        %2058 = vmatpush2.bf16.msra.mxu0 0
        %2059 = vmatprep.subr.bf16.mxu0 0
        %2060 = vmatpush2.bf16.msra.mxu0 0
        %2061 = vmatprep.subr.bf16.mxu0 0
        %2062 = vmatpush2.bf16.msra.mxu0 0
        %2063 = vmatprep.mubr.bf16.mxu0 0
        %2064 = vmatmul.mubr.bf16.gmra.mxu0 %v2026
        %v2065 = vpop.f32.mrf.mxu0
        %v2066 = vadd.f32 0.0, %v2065
        %v2067 = vpop.f32.mrf.mxu0
        %v2068 = vpop.f32.mrf.mxu0
        %v2069 = vpop.f32.mrf.mxu0
        %2070 = vdwg.mxu0
        %v2071 = vadd.f32 %v1910, %v2066
        %2072 = vst.msk [vmem:[#allocation3] sm:$0xff] %vm732, %v2071
        %v2073 = vrot.slane %v779, 4
        %2074 = vrot.lane.b32.xlu0 %v2073, 64
        %v2075 = vpop.permute.xlu0 %2074
        %v2077 = vsel %vm789, %v2073, 0
        %v2080 = vsel %vm789, %v2075, 0
        %2082 = vmatprep.subr.bf16.mxu0 0
        %2083 = vmatpush1.bf16.xpose.msra.mxu0 0
        %2084 = vmatprep.subr.bf16.mxu0 0
        %2085 = vmatpush1.bf16.xpose.msra.mxu0 0
        %2086 = vmatprep.subr.bf16.mxu0 0
        %2087 = vmatpush1.bf16.xpose.msra.mxu0 0
        %2088 = vmatprep.subr.bf16.mxu0 0
        %2089 = vmatpush1.bf16.xpose.msra.mxu0 0
        %2090 = vmatprep.subr.bf16.mxu0 0
        %2091 = vmatpush1.bf16.xpose.msra.mxu0 0
        %2092 = vmatprep.subr.bf16.mxu0 0
        %2093 = vmatpush1.bf16.xpose.msra.mxu0 0
        %2094 = vmatprep.subr.bf16.mxu0 0
        %2095 = vmatpush1.bf16.xpose.msra.mxu0 0
        %2096 = vmatprep.subr.bf16.mxu0 0
        %2097 = vmatpush1.bf16.xpose.msra.mxu0 %v2080
        %2098 = vmatprep.subr.bf16.mxu0 0
        %2099 = vmatpush2.bf16.xpose.msra.mxu0 0
        %2100 = vmatprep.subr.bf16.mxu0 0
        %2101 = vmatpush2.bf16.xpose.msra.mxu0 0
        %2102 = vmatprep.subr.bf16.mxu0 0
        %2103 = vmatpush2.bf16.xpose.msra.mxu0 0
        %2104 = vmatprep.subr.bf16.mxu0 0
        %2105 = vmatpush2.bf16.xpose.msra.mxu0 0
        %2106 = vmatprep.subr.bf16.mxu0 0
        %2107 = vmatpush2.bf16.xpose.msra.mxu0 0
        %2108 = vmatprep.subr.bf16.mxu0 0
        %2109 = vmatpush2.bf16.xpose.msra.mxu0 0
        %2110 = vmatprep.subr.bf16.mxu0 0
        %2111 = vmatpush2.bf16.xpose.msra.mxu0 0
        %2112 = vmatprep.subr.bf16.mxu0 0
        %2113 = vmatpush2.bf16.xpose.msra.mxu0 0
        %2114 = vmatprep.mubr.bf16.mxu0 0
        %2115 = vmatmul.mubr.bf16.gmra.mxu0 %v2077
        %v2116 = vpop.f32.mrf.mxu0
        %v2117 = vadd.f32 0.0, %v2116
        %v2118 = vpop.f32.mrf.mxu0
        %v2119 = vpop.f32.mrf.mxu0
        %v2120 = vpop.f32.mrf.mxu0
        %2121 = vdwg.mxu0
        %v2122 = vmul.f32 %v2117, 0.35355338
        %v2123 = vsel %vm785, %v2122, -1e+30
        %v2124 = vsel %vm789, %v2123, -inf
        %2125 = vmax.xlane.f32.xlu0 %v2124
        %v2126 = vpop.xlane.xlu0 %2125
        %v2127 = vsub.f32 %v2123, %v2126
        %v2128 = vmul.f32 %v2127, 1.442695
        %v2129 = vpow.pop %v2128
        %v2130 = vsel %vm789, %v2129, 0.0
        %2131 = vadd.xlane.f32.xlu0 %v2130
        %v2132 = vpop.xlane.xlu0 %2131
        %v2133 = vrcp.pop %v2132
        %v2134 = vmul.f32 %v2129, %v2133
        %v2135 = vpack.c.bf16 %v2134, %v2134
        %v2136 = vrot.slane %v780, 4
        %v2138 = vsel %vm789, %v2135, 0
        %v2141 = vsel %vm853, %v2136, 0
        %2143 = vmatprep.subr.bf16.mxu0 0
        %2144 = vmatpush1.bf16.msra.mxu0 0
        %2145 = vmatprep.subr.bf16.mxu0 0
        %2146 = vmatpush1.bf16.msra.mxu0 0
        %2147 = vmatprep.subr.bf16.mxu0 0
        %2148 = vmatpush1.bf16.msra.mxu0 0
        %2149 = vmatprep.subr.bf16.mxu0 0
        %2150 = vmatpush1.bf16.msra.mxu0 0
        %2151 = vmatprep.subr.bf16.mxu0 0
        %2152 = vmatpush1.bf16.msra.mxu0 0
        %2153 = vmatprep.subr.bf16.mxu0 0
        %2154 = vmatpush1.bf16.msra.mxu0 0
        %2155 = vmatprep.subr.bf16.mxu0 0
        %2156 = vmatpush1.bf16.msra.mxu0 0
        %2157 = vmatprep.subr.bf16.mxu0 0
        %2158 = vmatpush1.bf16.msra.mxu0 %v2141
        %2159 = vmatprep.subr.bf16.mxu0 0
        %2160 = vmatpush2.bf16.msra.mxu0 0
        %2161 = vmatprep.subr.bf16.mxu0 0
        %2162 = vmatpush2.bf16.msra.mxu0 0
        %2163 = vmatprep.subr.bf16.mxu0 0
        %2164 = vmatpush2.bf16.msra.mxu0 0
        %2165 = vmatprep.subr.bf16.mxu0 0
        %2166 = vmatpush2.bf16.msra.mxu0 0
        %2167 = vmatprep.subr.bf16.mxu0 0
        %2168 = vmatpush2.bf16.msra.mxu0 0
        %2169 = vmatprep.subr.bf16.mxu0 0
        %2170 = vmatpush2.bf16.msra.mxu0 0
        %2171 = vmatprep.subr.bf16.mxu0 0
        %2172 = vmatpush2.bf16.msra.mxu0 0
        %2173 = vmatprep.subr.bf16.mxu0 0
        %2174 = vmatpush2.bf16.msra.mxu0 0
        %2175 = vmatprep.mubr.bf16.mxu0 0
        %2176 = vmatmul.mubr.bf16.gmra.mxu0 %v2138
        %v2177 = vpop.f32.mrf.mxu0
        %v2178 = vadd.f32 0.0, %v2177
        %v2179 = vpop.f32.mrf.mxu0
        %v2180 = vpop.f32.mrf.mxu0
        %v2181 = vpop.f32.mrf.mxu0
        %2182 = vdwg.mxu0
        %v2183 = vpack.c.bf16 %v2178, %v2178
        %v2184 = vld [vmem:[%s651] sm:$0xf]
        %2185 = vrot.lane.b32.xlu0 %v2073, 120
        %v2186 = vpop.permute.xlu0 %2185
        %2187 = vrot.lane.b32.xlu0 %v2073, 56
        %v2188 = vpop.permute.xlu0 %2187
        %v2190 = vsel %vm789, %v2186, 0
        %v2193 = vsel %vm789, %v2188, 0
        %2195 = vmatprep.subr.bf16.mxu0 0
        %2196 = vmatpush1.bf16.xpose.msra.mxu0 0
        %2197 = vmatprep.subr.bf16.mxu0 0
        %2198 = vmatpush1.bf16.xpose.msra.mxu0 0
        %2199 = vmatprep.subr.bf16.mxu0 0
        %2200 = vmatpush1.bf16.xpose.msra.mxu0 0
        %2201 = vmatprep.subr.bf16.mxu0 0
        %2202 = vmatpush1.bf16.xpose.msra.mxu0 0
        %2203 = vmatprep.subr.bf16.mxu0 0
        %2204 = vmatpush1.bf16.xpose.msra.mxu0 0
        %2205 = vmatprep.subr.bf16.mxu0 0
        %2206 = vmatpush1.bf16.xpose.msra.mxu0 0
        %2207 = vmatprep.subr.bf16.mxu0 0
        %2208 = vmatpush1.bf16.xpose.msra.mxu0 0
        %2209 = vmatprep.subr.bf16.mxu0 0
        %2210 = vmatpush1.bf16.xpose.msra.mxu0 %v2193
        %2211 = vmatprep.subr.bf16.mxu0 0
        %2212 = vmatpush2.bf16.xpose.msra.mxu0 0
        %2213 = vmatprep.subr.bf16.mxu0 0
        %2214 = vmatpush2.bf16.xpose.msra.mxu0 0
        %2215 = vmatprep.subr.bf16.mxu0 0
        %2216 = vmatpush2.bf16.xpose.msra.mxu0 0
        %2217 = vmatprep.subr.bf16.mxu0 0
        %2218 = vmatpush2.bf16.xpose.msra.mxu0 0
        %2219 = vmatprep.subr.bf16.mxu0 0
        %2220 = vmatpush2.bf16.xpose.msra.mxu0 0
        %2221 = vmatprep.subr.bf16.mxu0 0
        %2222 = vmatpush2.bf16.xpose.msra.mxu0 0
        %2223 = vmatprep.subr.bf16.mxu0 0
        %2224 = vmatpush2.bf16.xpose.msra.mxu0 0
        %2225 = vmatprep.subr.bf16.mxu0 0
        %2226 = vmatpush2.bf16.xpose.msra.mxu0 0
        %2227 = vmatprep.mubr.bf16.mxu0 0
        %2228 = vmatmul.mubr.bf16.gmra.mxu0 %v2190
        %v2229 = vpop.f32.mrf.mxu0
        %v2230 = vadd.f32 0.0, %v2229
        %v2231 = vpop.f32.mrf.mxu0
        %v2232 = vpop.f32.mrf.mxu0
        %v2233 = vpop.f32.mrf.mxu0
        %2234 = vdwg.mxu0
        %v2235 = vmul.f32 %v2230, 0.35355338
        %v2236 = vsel %vm785, %v2235, -1e+30
        %v2237 = vsel %vm789, %v2236, -inf
        %2238 = vmax.xlane.f32.xlu0 %v2237
        %v2239 = vpop.xlane.xlu0 %2238
        %v2240 = vsub.f32 %v2236, %v2239
        %v2241 = vmul.f32 %v2240, 1.442695
        %v2242 = vpow.pop %v2241
        %v2243 = vsel %vm789, %v2242, 0.0
        %2244 = vadd.xlane.f32.xlu0 %v2243
        %v2245 = vpop.xlane.xlu0 %2244
        %v2246 = vrcp.pop %v2245
        %v2247 = vmul.f32 %v2242, %v2246
        %v2248 = vpack.c.bf16 %v2247, %v2247
        %2249 = vrot.lane.b32.xlu0 %v2136, 120
        %v2250 = vpop.permute.xlu0 %2249
        %v2252 = vsel %vm789, %v2248, 0
        %v2255 = vsel %vm853, %v2250, 0
        %2257 = vmatprep.subr.bf16.mxu0 0
        %2258 = vmatpush1.bf16.msra.mxu0 0
        %2259 = vmatprep.subr.bf16.mxu0 0
        %2260 = vmatpush1.bf16.msra.mxu0 0
        %2261 = vmatprep.subr.bf16.mxu0 0
        %2262 = vmatpush1.bf16.msra.mxu0 0
        %2263 = vmatprep.subr.bf16.mxu0 0
        %2264 = vmatpush1.bf16.msra.mxu0 0
        %2265 = vmatprep.subr.bf16.mxu0 0
        %2266 = vmatpush1.bf16.msra.mxu0 0
        %2267 = vmatprep.subr.bf16.mxu0 0
        %2268 = vmatpush1.bf16.msra.mxu0 0
        %2269 = vmatprep.subr.bf16.mxu0 0
        %2270 = vmatpush1.bf16.msra.mxu0 0
        %2271 = vmatprep.subr.bf16.mxu0 0
        %2272 = vmatpush1.bf16.msra.mxu0 %v2255
        %2273 = vmatprep.subr.bf16.mxu0 0
        %2274 = vmatpush2.bf16.msra.mxu0 0
        %2275 = vmatprep.subr.bf16.mxu0 0
        %2276 = vmatpush2.bf16.msra.mxu0 0
        %2277 = vmatprep.subr.bf16.mxu0 0
        %2278 = vmatpush2.bf16.msra.mxu0 0
        %2279 = vmatprep.subr.bf16.mxu0 0
        %2280 = vmatpush2.bf16.msra.mxu0 0
        %2281 = vmatprep.subr.bf16.mxu0 0
        %2282 = vmatpush2.bf16.msra.mxu0 0
        %2283 = vmatprep.subr.bf16.mxu0 0
        %2284 = vmatpush2.bf16.msra.mxu0 0
        %2285 = vmatprep.subr.bf16.mxu0 0
        %2286 = vmatpush2.bf16.msra.mxu0 0
        %2287 = vmatprep.subr.bf16.mxu0 0
        %2288 = vmatpush2.bf16.msra.mxu0 0
        %2289 = vmatprep.mubr.bf16.mxu0 0
        %2290 = vmatmul.mubr.bf16.gmra.mxu0 %v2252
        %v2291 = vpop.f32.mrf.mxu0
        %v2292 = vadd.f32 0.0, %v2291
        %v2293 = vpop.f32.mrf.mxu0
        %v2294 = vpop.f32.mrf.mxu0
        %v2295 = vpop.f32.mrf.mxu0
        %2296 = vdwg.mxu0
        %v2297 = vpack.c.bf16 %v2292, %v2292
        %v2298 = vld [vmem:[%s651 + $0x4] sm:$0xf]
        %v2300 = vsel %vm789, %v2297, 0
        %v2303 = vsel %vm853, %v2298, 0
        %2305 = vmatprep.subr.bf16.mxu0 0
        %2306 = vmatpush1.bf16.msra.mxu0 0
        %2307 = vmatprep.subr.bf16.mxu0 0
        %2308 = vmatpush1.bf16.msra.mxu0 0
        %2309 = vmatprep.subr.bf16.mxu0 0
        %2310 = vmatpush1.bf16.msra.mxu0 0
        %2311 = vmatprep.subr.bf16.mxu0 0
        %2312 = vmatpush1.bf16.msra.mxu0 0
        %2313 = vmatprep.subr.bf16.mxu0 0
        %2314 = vmatpush1.bf16.msra.mxu0 0
        %2315 = vmatprep.subr.bf16.mxu0 0
        %2316 = vmatpush1.bf16.msra.mxu0 0
        %2317 = vmatprep.subr.bf16.mxu0 0
        %2318 = vmatpush1.bf16.msra.mxu0 0
        %2319 = vmatprep.subr.bf16.mxu0 0
        %2320 = vmatpush1.bf16.msra.mxu0 %v2303
        %2321 = vmatprep.subr.bf16.mxu0 0
        %2322 = vmatpush2.bf16.msra.mxu0 0
        %2323 = vmatprep.subr.bf16.mxu0 0
        %2324 = vmatpush2.bf16.msra.mxu0 0
        %2325 = vmatprep.subr.bf16.mxu0 0
        %2326 = vmatpush2.bf16.msra.mxu0 0
        %2327 = vmatprep.subr.bf16.mxu0 0
        %2328 = vmatpush2.bf16.msra.mxu0 0
        %2329 = vmatprep.subr.bf16.mxu0 0
        %2330 = vmatpush2.bf16.msra.mxu0 0
        %2331 = vmatprep.subr.bf16.mxu0 0
        %2332 = vmatpush2.bf16.msra.mxu0 0
        %2333 = vmatprep.subr.bf16.mxu0 0
        %2334 = vmatpush2.bf16.msra.mxu0 0
        %2335 = vmatprep.subr.bf16.mxu0 0
        %2336 = vmatpush2.bf16.msra.mxu0 0
        %2337 = vmatprep.mubr.bf16.mxu0 0
        %2338 = vmatmul.mubr.bf16.gmra.mxu0 %v2300
        %v2339 = vpop.f32.mrf.mxu0
        %v2340 = vadd.f32 0.0, %v2339
        %v2341 = vpop.f32.mrf.mxu0
        %v2342 = vpop.f32.mrf.mxu0
        %v2343 = vpop.f32.mrf.mxu0
        %2344 = vdwg.mxu0
        %v2346 = vsel %vm789, %v2183, 0
        %v2349 = vsel %vm853, %v2184, 0
        %2351 = vmatprep.subr.bf16.mxu0 0
        %2352 = vmatpush1.bf16.msra.mxu0 0
        %2353 = vmatprep.subr.bf16.mxu0 0
        %2354 = vmatpush1.bf16.msra.mxu0 0
        %2355 = vmatprep.subr.bf16.mxu0 0
        %2356 = vmatpush1.bf16.msra.mxu0 0
        %2357 = vmatprep.subr.bf16.mxu0 0
        %2358 = vmatpush1.bf16.msra.mxu0 0
        %2359 = vmatprep.subr.bf16.mxu0 0
        %2360 = vmatpush1.bf16.msra.mxu0 0
        %2361 = vmatprep.subr.bf16.mxu0 0
        %2362 = vmatpush1.bf16.msra.mxu0 0
        %2363 = vmatprep.subr.bf16.mxu0 0
        %2364 = vmatpush1.bf16.msra.mxu0 0
        %2365 = vmatprep.subr.bf16.mxu0 0
        %2366 = vmatpush1.bf16.msra.mxu0 %v2349
        %2367 = vmatprep.subr.bf16.mxu0 0
        %2368 = vmatpush2.bf16.msra.mxu0 0
        %2369 = vmatprep.subr.bf16.mxu0 0
        %2370 = vmatpush2.bf16.msra.mxu0 0
        %2371 = vmatprep.subr.bf16.mxu0 0
        %2372 = vmatpush2.bf16.msra.mxu0 0
        %2373 = vmatprep.subr.bf16.mxu0 0
        %2374 = vmatpush2.bf16.msra.mxu0 0
        %2375 = vmatprep.subr.bf16.mxu0 0
        %2376 = vmatpush2.bf16.msra.mxu0 0
        %2377 = vmatprep.subr.bf16.mxu0 0
        %2378 = vmatpush2.bf16.msra.mxu0 0
        %2379 = vmatprep.subr.bf16.mxu0 0
        %2380 = vmatpush2.bf16.msra.mxu0 0
        %2381 = vmatprep.subr.bf16.mxu0 0
        %2382 = vmatpush2.bf16.msra.mxu0 0
        %2383 = vmatprep.mubr.bf16.mxu0 0
        %2384 = vmatmul.mubr.bf16.gmra.mxu0 %v2346
        %v2385 = vpop.f32.mrf.mxu0
        %v2386 = vadd.f32 %v2340, %v2385
        %v2387 = vpop.f32.mrf.mxu0
        %v2388 = vpop.f32.mrf.mxu0
        %v2389 = vpop.f32.mrf.mxu0
        %2390 = vdwg.mxu0
        %2391 = vrot.lane.b32.xlu0 %v2073, 112
        %v2392 = vpop.permute.xlu0 %2391
        %2393 = vrot.lane.b32.xlu0 %v2073, 48
        %v2394 = vpop.permute.xlu0 %2393
        %v2396 = vsel %vm789, %v2392, 0
        %v2399 = vsel %vm789, %v2394, 0
        %2401 = vmatprep.subr.bf16.mxu0 0
        %2402 = vmatpush1.bf16.xpose.msra.mxu0 0
        %2403 = vmatprep.subr.bf16.mxu0 0
        %2404 = vmatpush1.bf16.xpose.msra.mxu0 0
        %2405 = vmatprep.subr.bf16.mxu0 0
        %2406 = vmatpush1.bf16.xpose.msra.mxu0 0
        %2407 = vmatprep.subr.bf16.mxu0 0
        %2408 = vmatpush1.bf16.xpose.msra.mxu0 0
        %2409 = vmatprep.subr.bf16.mxu0 0
        %2410 = vmatpush1.bf16.xpose.msra.mxu0 0
        %2411 = vmatprep.subr.bf16.mxu0 0
        %2412 = vmatpush1.bf16.xpose.msra.mxu0 0
        %2413 = vmatprep.subr.bf16.mxu0 0
        %2414 = vmatpush1.bf16.xpose.msra.mxu0 0
        %2415 = vmatprep.subr.bf16.mxu0 0
        %2416 = vmatpush1.bf16.xpose.msra.mxu0 %v2399
        %2417 = vmatprep.subr.bf16.mxu0 0
        %2418 = vmatpush2.bf16.xpose.msra.mxu0 0
        %2419 = vmatprep.subr.bf16.mxu0 0
        %2420 = vmatpush2.bf16.xpose.msra.mxu0 0
        %2421 = vmatprep.subr.bf16.mxu0 0
        %2422 = vmatpush2.bf16.xpose.msra.mxu0 0
        %2423 = vmatprep.subr.bf16.mxu0 0
        %2424 = vmatpush2.bf16.xpose.msra.mxu0 0
        %2425 = vmatprep.subr.bf16.mxu0 0
        %2426 = vmatpush2.bf16.xpose.msra.mxu0 0
        %2427 = vmatprep.subr.bf16.mxu0 0
        %2428 = vmatpush2.bf16.xpose.msra.mxu0 0
        %2429 = vmatprep.subr.bf16.mxu0 0
        %2430 = vmatpush2.bf16.xpose.msra.mxu0 0
        %2431 = vmatprep.subr.bf16.mxu0 0
        %2432 = vmatpush2.bf16.xpose.msra.mxu0 0
        %2433 = vmatprep.mubr.bf16.mxu0 0
        %2434 = vmatmul.mubr.bf16.gmra.mxu0 %v2396
        %v2435 = vpop.f32.mrf.mxu0
        %v2436 = vadd.f32 0.0, %v2435
        %v2437 = vpop.f32.mrf.mxu0
        %v2438 = vpop.f32.mrf.mxu0
        %v2439 = vpop.f32.mrf.mxu0
        %2440 = vdwg.mxu0
        %v2441 = vmul.f32 %v2436, 0.35355338
        %v2442 = vsel %vm785, %v2441, -1e+30
        %v2443 = vsel %vm789, %v2442, -inf
        %2444 = vmax.xlane.f32.xlu0 %v2443
        %v2445 = vpop.xlane.xlu0 %2444
        %v2446 = vsub.f32 %v2442, %v2445
        %v2447 = vmul.f32 %v2446, 1.442695
        %v2448 = vpow.pop %v2447
        %v2449 = vsel %vm789, %v2448, 0.0
        %2450 = vadd.xlane.f32.xlu0 %v2449
        %v2451 = vpop.xlane.xlu0 %2450
        %v2452 = vrcp.pop %v2451
        %v2453 = vmul.f32 %v2448, %v2452
        %v2454 = vpack.c.bf16 %v2453, %v2453
        %2455 = vrot.lane.b32.xlu0 %v2136, 112
        %v2456 = vpop.permute.xlu0 %2455
        %v2458 = vsel %vm789, %v2454, 0
        %v2461 = vsel %vm853, %v2456, 0
        %2463 = vmatprep.subr.bf16.mxu0 0
        %2464 = vmatpush1.bf16.msra.mxu0 0
        %2465 = vmatprep.subr.bf16.mxu0 0
        %2466 = vmatpush1.bf16.msra.mxu0 0
        %2467 = vmatprep.subr.bf16.mxu0 0
        %2468 = vmatpush1.bf16.msra.mxu0 0
        %2469 = vmatprep.subr.bf16.mxu0 0
        %2470 = vmatpush1.bf16.msra.mxu0 0
        %2471 = vmatprep.subr.bf16.mxu0 0
        %2472 = vmatpush1.bf16.msra.mxu0 0
        %2473 = vmatprep.subr.bf16.mxu0 0
        %2474 = vmatpush1.bf16.msra.mxu0 0
        %2475 = vmatprep.subr.bf16.mxu0 0
        %2476 = vmatpush1.bf16.msra.mxu0 0
        %2477 = vmatprep.subr.bf16.mxu0 0
        %2478 = vmatpush1.bf16.msra.mxu0 %v2461
        %2479 = vmatprep.subr.bf16.mxu0 0
        %2480 = vmatpush2.bf16.msra.mxu0 0
        %2481 = vmatprep.subr.bf16.mxu0 0
        %2482 = vmatpush2.bf16.msra.mxu0 0
        %2483 = vmatprep.subr.bf16.mxu0 0
        %2484 = vmatpush2.bf16.msra.mxu0 0
        %2485 = vmatprep.subr.bf16.mxu0 0
        %2486 = vmatpush2.bf16.msra.mxu0 0
        %2487 = vmatprep.subr.bf16.mxu0 0
        %2488 = vmatpush2.bf16.msra.mxu0 0
        %2489 = vmatprep.subr.bf16.mxu0 0
        %2490 = vmatpush2.bf16.msra.mxu0 0
        %2491 = vmatprep.subr.bf16.mxu0 0
        %2492 = vmatpush2.bf16.msra.mxu0 0
        %2493 = vmatprep.subr.bf16.mxu0 0
        %2494 = vmatpush2.bf16.msra.mxu0 0
        %2495 = vmatprep.mubr.bf16.mxu0 0
        %2496 = vmatmul.mubr.bf16.gmra.mxu0 %v2458
        %v2497 = vpop.f32.mrf.mxu0
        %v2498 = vadd.f32 0.0, %v2497
        %v2499 = vpop.f32.mrf.mxu0
        %v2500 = vpop.f32.mrf.mxu0
        %v2501 = vpop.f32.mrf.mxu0
        %2502 = vdwg.mxu0
        %v2503 = vpack.c.bf16 %v2498, %v2498
        %v2504 = vld [vmem:[%s651 + $0x8] sm:$0xf]
        %v2506 = vsel %vm789, %v2503, 0
        %v2509 = vsel %vm853, %v2504, 0
        %2511 = vmatprep.subr.bf16.mxu0 0
        %2512 = vmatpush1.bf16.msra.mxu0 0
        %2513 = vmatprep.subr.bf16.mxu0 0
        %2514 = vmatpush1.bf16.msra.mxu0 0
        %2515 = vmatprep.subr.bf16.mxu0 0
        %2516 = vmatpush1.bf16.msra.mxu0 0
        %2517 = vmatprep.subr.bf16.mxu0 0
        %2518 = vmatpush1.bf16.msra.mxu0 0
        %2519 = vmatprep.subr.bf16.mxu0 0
        %2520 = vmatpush1.bf16.msra.mxu0 0
        %2521 = vmatprep.subr.bf16.mxu0 0
        %2522 = vmatpush1.bf16.msra.mxu0 0
        %2523 = vmatprep.subr.bf16.mxu0 0
        %2524 = vmatpush1.bf16.msra.mxu0 0
        %2525 = vmatprep.subr.bf16.mxu0 0
        %2526 = vmatpush1.bf16.msra.mxu0 %v2509
        %2527 = vmatprep.subr.bf16.mxu0 0
        %2528 = vmatpush2.bf16.msra.mxu0 0
        %2529 = vmatprep.subr.bf16.mxu0 0
        %2530 = vmatpush2.bf16.msra.mxu0 0
        %2531 = vmatprep.subr.bf16.mxu0 0
        %2532 = vmatpush2.bf16.msra.mxu0 0
        %2533 = vmatprep.subr.bf16.mxu0 0
        %2534 = vmatpush2.bf16.msra.mxu0 0
        %2535 = vmatprep.subr.bf16.mxu0 0
        %2536 = vmatpush2.bf16.msra.mxu0 0
        %2537 = vmatprep.subr.bf16.mxu0 0
        %2538 = vmatpush2.bf16.msra.mxu0 0
        %2539 = vmatprep.subr.bf16.mxu0 0
        %2540 = vmatpush2.bf16.msra.mxu0 0
        %2541 = vmatprep.subr.bf16.mxu0 0
        %2542 = vmatpush2.bf16.msra.mxu0 0
        %2543 = vmatprep.mubr.bf16.mxu0 0
        %2544 = vmatmul.mubr.bf16.gmra.mxu0 %v2506
        %v2545 = vpop.f32.mrf.mxu0
        %v2546 = vadd.f32 0.0, %v2545
        %v2547 = vpop.f32.mrf.mxu0
        %v2548 = vpop.f32.mrf.mxu0
        %v2549 = vpop.f32.mrf.mxu0
        %2550 = vdwg.mxu0
        %v2551 = vadd.f32 %v2386, %v2546
        %2552 = vrot.lane.b32.xlu0 %v2073, 104
        %v2553 = vpop.permute.xlu0 %2552
        %2554 = vrot.lane.b32.xlu0 %v2073, 40
        %v2555 = vpop.permute.xlu0 %2554
        %v2557 = vsel %vm789, %v2553, 0
        %v2560 = vsel %vm789, %v2555, 0
        %2562 = vmatprep.subr.bf16.mxu0 0
        %2563 = vmatpush1.bf16.xpose.msra.mxu0 0
        %2564 = vmatprep.subr.bf16.mxu0 0
        %2565 = vmatpush1.bf16.xpose.msra.mxu0 0
        %2566 = vmatprep.subr.bf16.mxu0 0
        %2567 = vmatpush1.bf16.xpose.msra.mxu0 0
        %2568 = vmatprep.subr.bf16.mxu0 0
        %2569 = vmatpush1.bf16.xpose.msra.mxu0 0
        %2570 = vmatprep.subr.bf16.mxu0 0
        %2571 = vmatpush1.bf16.xpose.msra.mxu0 0
        %2572 = vmatprep.subr.bf16.mxu0 0
        %2573 = vmatpush1.bf16.xpose.msra.mxu0 0
        %2574 = vmatprep.subr.bf16.mxu0 0
        %2575 = vmatpush1.bf16.xpose.msra.mxu0 0
        %2576 = vmatprep.subr.bf16.mxu0 0
        %2577 = vmatpush1.bf16.xpose.msra.mxu0 %v2560
        %2578 = vmatprep.subr.bf16.mxu0 0
        %2579 = vmatpush2.bf16.xpose.msra.mxu0 0
        %2580 = vmatprep.subr.bf16.mxu0 0
        %2581 = vmatpush2.bf16.xpose.msra.mxu0 0
        %2582 = vmatprep.subr.bf16.mxu0 0
        %2583 = vmatpush2.bf16.xpose.msra.mxu0 0
        %2584 = vmatprep.subr.bf16.mxu0 0
        %2585 = vmatpush2.bf16.xpose.msra.mxu0 0
        %2586 = vmatprep.subr.bf16.mxu0 0
        %2587 = vmatpush2.bf16.xpose.msra.mxu0 0
        %2588 = vmatprep.subr.bf16.mxu0 0
        %2589 = vmatpush2.bf16.xpose.msra.mxu0 0
        %2590 = vmatprep.subr.bf16.mxu0 0
        %2591 = vmatpush2.bf16.xpose.msra.mxu0 0
        %2592 = vmatprep.subr.bf16.mxu0 0
        %2593 = vmatpush2.bf16.xpose.msra.mxu0 0
        %2594 = vmatprep.mubr.bf16.mxu0 0
        %2595 = vmatmul.mubr.bf16.gmra.mxu0 %v2557
        %v2596 = vpop.f32.mrf.mxu0
        %v2597 = vadd.f32 0.0, %v2596
        %v2598 = vpop.f32.mrf.mxu0
        %v2599 = vpop.f32.mrf.mxu0
        %v2600 = vpop.f32.mrf.mxu0
        %2601 = vdwg.mxu0
        %v2602 = vmul.f32 %v2597, 0.35355338
        %v2603 = vsel %vm785, %v2602, -1e+30
        %v2604 = vsel %vm789, %v2603, -inf
        %2605 = vmax.xlane.f32.xlu0 %v2604
        %v2606 = vpop.xlane.xlu0 %2605
        %v2607 = vsub.f32 %v2603, %v2606
        %v2608 = vmul.f32 %v2607, 1.442695
        %v2609 = vpow.pop %v2608
        %v2610 = vsel %vm789, %v2609, 0.0
        %2611 = vadd.xlane.f32.xlu0 %v2610
        %v2612 = vpop.xlane.xlu0 %2611
        %v2613 = vrcp.pop %v2612
        %v2614 = vmul.f32 %v2609, %v2613
        %v2615 = vpack.c.bf16 %v2614, %v2614
        %2616 = vrot.lane.b32.xlu0 %v2136, 104
        %v2617 = vpop.permute.xlu0 %2616
        %v2619 = vsel %vm789, %v2615, 0
        %v2622 = vsel %vm853, %v2617, 0
        %2624 = vmatprep.subr.bf16.mxu0 0
        %2625 = vmatpush1.bf16.msra.mxu0 0
        %2626 = vmatprep.subr.bf16.mxu0 0
        %2627 = vmatpush1.bf16.msra.mxu0 0
        %2628 = vmatprep.subr.bf16.mxu0 0
        %2629 = vmatpush1.bf16.msra.mxu0 0
        %2630 = vmatprep.subr.bf16.mxu0 0
        %2631 = vmatpush1.bf16.msra.mxu0 0
        %2632 = vmatprep.subr.bf16.mxu0 0
        %2633 = vmatpush1.bf16.msra.mxu0 0
        %2634 = vmatprep.subr.bf16.mxu0 0
        %2635 = vmatpush1.bf16.msra.mxu0 0
        %2636 = vmatprep.subr.bf16.mxu0 0
        %2637 = vmatpush1.bf16.msra.mxu0 0
        %2638 = vmatprep.subr.bf16.mxu0 0
        %2639 = vmatpush1.bf16.msra.mxu0 %v2622
        %2640 = vmatprep.subr.bf16.mxu0 0
        %2641 = vmatpush2.bf16.msra.mxu0 0
        %2642 = vmatprep.subr.bf16.mxu0 0
        %2643 = vmatpush2.bf16.msra.mxu0 0
        %2644 = vmatprep.subr.bf16.mxu0 0
        %2645 = vmatpush2.bf16.msra.mxu0 0
        %2646 = vmatprep.subr.bf16.mxu0 0
        %2647 = vmatpush2.bf16.msra.mxu0 0
        %2648 = vmatprep.subr.bf16.mxu0 0
        %2649 = vmatpush2.bf16.msra.mxu0 0
        %2650 = vmatprep.subr.bf16.mxu0 0
        %2651 = vmatpush2.bf16.msra.mxu0 0
        %2652 = vmatprep.subr.bf16.mxu0 0
        %2653 = vmatpush2.bf16.msra.mxu0 0
        %2654 = vmatprep.subr.bf16.mxu0 0
        %2655 = vmatpush2.bf16.msra.mxu0 0
        %2656 = vmatprep.mubr.bf16.mxu0 0
        %2657 = vmatmul.mubr.bf16.gmra.mxu0 %v2619
        %v2658 = vpop.f32.mrf.mxu0
        %v2659 = vadd.f32 0.0, %v2658
        %v2660 = vpop.f32.mrf.mxu0
        %v2661 = vpop.f32.mrf.mxu0
        %v2662 = vpop.f32.mrf.mxu0
        %2663 = vdwg.mxu0
        %v2664 = vpack.c.bf16 %v2659, %v2659
        %v2665 = vld [vmem:[%s651 + $0xc] sm:$0xf]
        %v2667 = vsel %vm789, %v2664, 0
        %v2670 = vsel %vm853, %v2665, 0
        %2672 = vmatprep.subr.bf16.mxu0 0
        %2673 = vmatpush1.bf16.msra.mxu0 0
        %2674 = vmatprep.subr.bf16.mxu0 0
        %2675 = vmatpush1.bf16.msra.mxu0 0
        %2676 = vmatprep.subr.bf16.mxu0 0
        %2677 = vmatpush1.bf16.msra.mxu0 0
        %2678 = vmatprep.subr.bf16.mxu0 0
        %2679 = vmatpush1.bf16.msra.mxu0 0
        %2680 = vmatprep.subr.bf16.mxu0 0
        %2681 = vmatpush1.bf16.msra.mxu0 0
        %2682 = vmatprep.subr.bf16.mxu0 0
        %2683 = vmatpush1.bf16.msra.mxu0 0
        %2684 = vmatprep.subr.bf16.mxu0 0
        %2685 = vmatpush1.bf16.msra.mxu0 0
        %2686 = vmatprep.subr.bf16.mxu0 0
        %2687 = vmatpush1.bf16.msra.mxu0 %v2670
        %2688 = vmatprep.subr.bf16.mxu0 0
        %2689 = vmatpush2.bf16.msra.mxu0 0
        %2690 = vmatprep.subr.bf16.mxu0 0
        %2691 = vmatpush2.bf16.msra.mxu0 0
        %2692 = vmatprep.subr.bf16.mxu0 0
        %2693 = vmatpush2.bf16.msra.mxu0 0
        %2694 = vmatprep.subr.bf16.mxu0 0
        %2695 = vmatpush2.bf16.msra.mxu0 0
        %2696 = vmatprep.subr.bf16.mxu0 0
        %2697 = vmatpush2.bf16.msra.mxu0 0
        %2698 = vmatprep.subr.bf16.mxu0 0
        %2699 = vmatpush2.bf16.msra.mxu0 0
        %2700 = vmatprep.subr.bf16.mxu0 0
        %2701 = vmatpush2.bf16.msra.mxu0 0
        %2702 = vmatprep.subr.bf16.mxu0 0
        %2703 = vmatpush2.bf16.msra.mxu0 0
        %2704 = vmatprep.mubr.bf16.mxu0 0
        %2705 = vmatmul.mubr.bf16.gmra.mxu0 %v2667
        %v2706 = vpop.f32.mrf.mxu0
        %v2707 = vadd.f32 0.0, %v2706
        %v2708 = vpop.f32.mrf.mxu0
        %v2709 = vpop.f32.mrf.mxu0
        %v2710 = vpop.f32.mrf.mxu0
        %2711 = vdwg.mxu0
        %v2712 = vadd.f32 %v2551, %v2707
        %2713 = vrot.lane.b32.xlu0 %v2073, 96
        %v2714 = vpop.permute.xlu0 %2713
        %2715 = vrot.lane.b32.xlu0 %v2073, 32
        %v2716 = vpop.permute.xlu0 %2715
        %v2718 = vsel %vm789, %v2714, 0
        %v2721 = vsel %vm789, %v2716, 0
        %2723 = vmatprep.subr.bf16.mxu0 0
        %2724 = vmatpush1.bf16.xpose.msra.mxu0 0
        %2725 = vmatprep.subr.bf16.mxu0 0
        %2726 = vmatpush1.bf16.xpose.msra.mxu0 0
        %2727 = vmatprep.subr.bf16.mxu0 0
        %2728 = vmatpush1.bf16.xpose.msra.mxu0 0
        %2729 = vmatprep.subr.bf16.mxu0 0
        %2730 = vmatpush1.bf16.xpose.msra.mxu0 0
        %2731 = vmatprep.subr.bf16.mxu0 0
        %2732 = vmatpush1.bf16.xpose.msra.mxu0 0
        %2733 = vmatprep.subr.bf16.mxu0 0
        %2734 = vmatpush1.bf16.xpose.msra.mxu0 0
        %2735 = vmatprep.subr.bf16.mxu0 0
        %2736 = vmatpush1.bf16.xpose.msra.mxu0 0
        %2737 = vmatprep.subr.bf16.mxu0 0
        %2738 = vmatpush1.bf16.xpose.msra.mxu0 %v2721
        %2739 = vmatprep.subr.bf16.mxu0 0
        %2740 = vmatpush2.bf16.xpose.msra.mxu0 0
        %2741 = vmatprep.subr.bf16.mxu0 0
        %2742 = vmatpush2.bf16.xpose.msra.mxu0 0
        %2743 = vmatprep.subr.bf16.mxu0 0
        %2744 = vmatpush2.bf16.xpose.msra.mxu0 0
        %2745 = vmatprep.subr.bf16.mxu0 0
        %2746 = vmatpush2.bf16.xpose.msra.mxu0 0
        %2747 = vmatprep.subr.bf16.mxu0 0
        %2748 = vmatpush2.bf16.xpose.msra.mxu0 0
        %2749 = vmatprep.subr.bf16.mxu0 0
        %2750 = vmatpush2.bf16.xpose.msra.mxu0 0
        %2751 = vmatprep.subr.bf16.mxu0 0
        %2752 = vmatpush2.bf16.xpose.msra.mxu0 0
        %2753 = vmatprep.subr.bf16.mxu0 0
        %2754 = vmatpush2.bf16.xpose.msra.mxu0 0
        %2755 = vmatprep.mubr.bf16.mxu0 0
        %2756 = vmatmul.mubr.bf16.gmra.mxu0 %v2718
        %v2757 = vpop.f32.mrf.mxu0
        %v2758 = vadd.f32 0.0, %v2757
        %v2759 = vpop.f32.mrf.mxu0
        %v2760 = vpop.f32.mrf.mxu0
        %v2761 = vpop.f32.mrf.mxu0
        %2762 = vdwg.mxu0
        %v2763 = vmul.f32 %v2758, 0.35355338
        %v2764 = vsel %vm785, %v2763, -1e+30
        %v2765 = vsel %vm789, %v2764, -inf
        %2766 = vmax.xlane.f32.xlu0 %v2765
        %v2767 = vpop.xlane.xlu0 %2766
        %v2768 = vsub.f32 %v2764, %v2767
        %v2769 = vmul.f32 %v2768, 1.442695
        %v2770 = vpow.pop %v2769
        %v2771 = vsel %vm789, %v2770, 0.0
        %2772 = vadd.xlane.f32.xlu0 %v2771
        %v2773 = vpop.xlane.xlu0 %2772
        %v2774 = vrcp.pop %v2773
        %v2775 = vmul.f32 %v2770, %v2774
        %v2776 = vpack.c.bf16 %v2775, %v2775
        %2777 = vrot.lane.b32.xlu0 %v2136, 96
        %v2778 = vpop.permute.xlu0 %2777
        %v2780 = vsel %vm789, %v2776, 0
        %v2783 = vsel %vm853, %v2778, 0
        %2785 = vmatprep.subr.bf16.mxu0 0
        %2786 = vmatpush1.bf16.msra.mxu0 0
        %2787 = vmatprep.subr.bf16.mxu0 0
        %2788 = vmatpush1.bf16.msra.mxu0 0
        %2789 = vmatprep.subr.bf16.mxu0 0
        %2790 = vmatpush1.bf16.msra.mxu0 0
        %2791 = vmatprep.subr.bf16.mxu0 0
        %2792 = vmatpush1.bf16.msra.mxu0 0
        %2793 = vmatprep.subr.bf16.mxu0 0
        %2794 = vmatpush1.bf16.msra.mxu0 0
        %2795 = vmatprep.subr.bf16.mxu0 0
        %2796 = vmatpush1.bf16.msra.mxu0 0
        %2797 = vmatprep.subr.bf16.mxu0 0
        %2798 = vmatpush1.bf16.msra.mxu0 0
        %2799 = vmatprep.subr.bf16.mxu0 0
        %2800 = vmatpush1.bf16.msra.mxu0 %v2783
        %2801 = vmatprep.subr.bf16.mxu0 0
        %2802 = vmatpush2.bf16.msra.mxu0 0
        %2803 = vmatprep.subr.bf16.mxu0 0
        %2804 = vmatpush2.bf16.msra.mxu0 0
        %2805 = vmatprep.subr.bf16.mxu0 0
        %2806 = vmatpush2.bf16.msra.mxu0 0
        %2807 = vmatprep.subr.bf16.mxu0 0
        %2808 = vmatpush2.bf16.msra.mxu0 0
        %2809 = vmatprep.subr.bf16.mxu0 0
        %2810 = vmatpush2.bf16.msra.mxu0 0
        %2811 = vmatprep.subr.bf16.mxu0 0
        %2812 = vmatpush2.bf16.msra.mxu0 0
        %2813 = vmatprep.subr.bf16.mxu0 0
        %2814 = vmatpush2.bf16.msra.mxu0 0
        %2815 = vmatprep.subr.bf16.mxu0 0
        %2816 = vmatpush2.bf16.msra.mxu0 0
        %2817 = vmatprep.mubr.bf16.mxu0 0
        %2818 = vmatmul.mubr.bf16.gmra.mxu0 %v2780
        %v2819 = vpop.f32.mrf.mxu0
        %v2820 = vadd.f32 0.0, %v2819
        %v2821 = vpop.f32.mrf.mxu0
        %v2822 = vpop.f32.mrf.mxu0
        %v2823 = vpop.f32.mrf.mxu0
        %2824 = vdwg.mxu0
        %v2825 = vpack.c.bf16 %v2820, %v2820
        %v2826 = vld [vmem:[%s651 + $0x10] sm:$0xf]
        %v2828 = vsel %vm789, %v2825, 0
        %v2831 = vsel %vm853, %v2826, 0
        %2833 = vmatprep.subr.bf16.mxu0 0
        %2834 = vmatpush1.bf16.msra.mxu0 0
        %2835 = vmatprep.subr.bf16.mxu0 0
        %2836 = vmatpush1.bf16.msra.mxu0 0
        %2837 = vmatprep.subr.bf16.mxu0 0
        %2838 = vmatpush1.bf16.msra.mxu0 0
        %2839 = vmatprep.subr.bf16.mxu0 0
        %2840 = vmatpush1.bf16.msra.mxu0 0
        %2841 = vmatprep.subr.bf16.mxu0 0
        %2842 = vmatpush1.bf16.msra.mxu0 0
        %2843 = vmatprep.subr.bf16.mxu0 0
        %2844 = vmatpush1.bf16.msra.mxu0 0
        %2845 = vmatprep.subr.bf16.mxu0 0
        %2846 = vmatpush1.bf16.msra.mxu0 0
        %2847 = vmatprep.subr.bf16.mxu0 0
        %2848 = vmatpush1.bf16.msra.mxu0 %v2831
        %2849 = vmatprep.subr.bf16.mxu0 0
        %2850 = vmatpush2.bf16.msra.mxu0 0
        %2851 = vmatprep.subr.bf16.mxu0 0
        %2852 = vmatpush2.bf16.msra.mxu0 0
        %2853 = vmatprep.subr.bf16.mxu0 0
        %2854 = vmatpush2.bf16.msra.mxu0 0
        %2855 = vmatprep.subr.bf16.mxu0 0
        %2856 = vmatpush2.bf16.msra.mxu0 0
        %2857 = vmatprep.subr.bf16.mxu0 0
        %2858 = vmatpush2.bf16.msra.mxu0 0
        %2859 = vmatprep.subr.bf16.mxu0 0
        %2860 = vmatpush2.bf16.msra.mxu0 0
        %2861 = vmatprep.subr.bf16.mxu0 0
        %2862 = vmatpush2.bf16.msra.mxu0 0
        %2863 = vmatprep.subr.bf16.mxu0 0
        %2864 = vmatpush2.bf16.msra.mxu0 0
        %2865 = vmatprep.mubr.bf16.mxu0 0
        %2866 = vmatmul.mubr.bf16.gmra.mxu0 %v2828
        %v2867 = vpop.f32.mrf.mxu0
        %v2868 = vadd.f32 0.0, %v2867
        %v2869 = vpop.f32.mrf.mxu0
        %v2870 = vpop.f32.mrf.mxu0
        %v2871 = vpop.f32.mrf.mxu0
        %2872 = vdwg.mxu0
        %v2873 = vadd.f32 %v2712, %v2868
        %2874 = vrot.lane.b32.xlu0 %v2073, 88
        %v2875 = vpop.permute.xlu0 %2874
        %2876 = vrot.lane.b32.xlu0 %v2073, 24
        %v2877 = vpop.permute.xlu0 %2876
        %v2879 = vsel %vm789, %v2875, 0
        %v2882 = vsel %vm789, %v2877, 0
        %2884 = vmatprep.subr.bf16.mxu0 0
        %2885 = vmatpush1.bf16.xpose.msra.mxu0 0
        %2886 = vmatprep.subr.bf16.mxu0 0
        %2887 = vmatpush1.bf16.xpose.msra.mxu0 0
        %2888 = vmatprep.subr.bf16.mxu0 0
        %2889 = vmatpush1.bf16.xpose.msra.mxu0 0
        %2890 = vmatprep.subr.bf16.mxu0 0
        %2891 = vmatpush1.bf16.xpose.msra.mxu0 0
        %2892 = vmatprep.subr.bf16.mxu0 0
        %2893 = vmatpush1.bf16.xpose.msra.mxu0 0
        %2894 = vmatprep.subr.bf16.mxu0 0
        %2895 = vmatpush1.bf16.xpose.msra.mxu0 0
        %2896 = vmatprep.subr.bf16.mxu0 0
        %2897 = vmatpush1.bf16.xpose.msra.mxu0 0
        %2898 = vmatprep.subr.bf16.mxu0 0
        %2899 = vmatpush1.bf16.xpose.msra.mxu0 %v2882
        %2900 = vmatprep.subr.bf16.mxu0 0
        %2901 = vmatpush2.bf16.xpose.msra.mxu0 0
        %2902 = vmatprep.subr.bf16.mxu0 0
        %2903 = vmatpush2.bf16.xpose.msra.mxu0 0
        %2904 = vmatprep.subr.bf16.mxu0 0
        %2905 = vmatpush2.bf16.xpose.msra.mxu0 0
        %2906 = vmatprep.subr.bf16.mxu0 0
        %2907 = vmatpush2.bf16.xpose.msra.mxu0 0
        %2908 = vmatprep.subr.bf16.mxu0 0
        %2909 = vmatpush2.bf16.xpose.msra.mxu0 0
        %2910 = vmatprep.subr.bf16.mxu0 0
        %2911 = vmatpush2.bf16.xpose.msra.mxu0 0
        %2912 = vmatprep.subr.bf16.mxu0 0
        %2913 = vmatpush2.bf16.xpose.msra.mxu0 0
        %2914 = vmatprep.subr.bf16.mxu0 0
        %2915 = vmatpush2.bf16.xpose.msra.mxu0 0
        %2916 = vmatprep.mubr.bf16.mxu0 0
        %2917 = vmatmul.mubr.bf16.gmra.mxu0 %v2879
        %v2918 = vpop.f32.mrf.mxu0
        %v2919 = vadd.f32 0.0, %v2918
        %v2920 = vpop.f32.mrf.mxu0
        %v2921 = vpop.f32.mrf.mxu0
        %v2922 = vpop.f32.mrf.mxu0
        %2923 = vdwg.mxu0
        %v2924 = vmul.f32 %v2919, 0.35355338
        %v2925 = vsel %vm785, %v2924, -1e+30
        %v2926 = vsel %vm789, %v2925, -inf
        %2927 = vmax.xlane.f32.xlu0 %v2926
        %v2928 = vpop.xlane.xlu0 %2927
        %v2929 = vsub.f32 %v2925, %v2928
        %v2930 = vmul.f32 %v2929, 1.442695
        %v2931 = vpow.pop %v2930
        %v2932 = vsel %vm789, %v2931, 0.0
        %2933 = vadd.xlane.f32.xlu0 %v2932
        %v2934 = vpop.xlane.xlu0 %2933
        %v2935 = vrcp.pop %v2934
        %v2936 = vmul.f32 %v2931, %v2935
        %v2937 = vpack.c.bf16 %v2936, %v2936
        %2938 = vrot.lane.b32.xlu0 %v2136, 88
        %v2939 = vpop.permute.xlu0 %2938
        %v2941 = vsel %vm789, %v2937, 0
        %v2944 = vsel %vm853, %v2939, 0
        %2946 = vmatprep.subr.bf16.mxu0 0
        %2947 = vmatpush1.bf16.msra.mxu0 0
        %2948 = vmatprep.subr.bf16.mxu0 0
        %2949 = vmatpush1.bf16.msra.mxu0 0
        %2950 = vmatprep.subr.bf16.mxu0 0
        %2951 = vmatpush1.bf16.msra.mxu0 0
        %2952 = vmatprep.subr.bf16.mxu0 0
        %2953 = vmatpush1.bf16.msra.mxu0 0
        %2954 = vmatprep.subr.bf16.mxu0 0
        %2955 = vmatpush1.bf16.msra.mxu0 0
        %2956 = vmatprep.subr.bf16.mxu0 0
        %2957 = vmatpush1.bf16.msra.mxu0 0
        %2958 = vmatprep.subr.bf16.mxu0 0
        %2959 = vmatpush1.bf16.msra.mxu0 0
        %2960 = vmatprep.subr.bf16.mxu0 0
        %2961 = vmatpush1.bf16.msra.mxu0 %v2944
        %2962 = vmatprep.subr.bf16.mxu0 0
        %2963 = vmatpush2.bf16.msra.mxu0 0
        %2964 = vmatprep.subr.bf16.mxu0 0
        %2965 = vmatpush2.bf16.msra.mxu0 0
        %2966 = vmatprep.subr.bf16.mxu0 0
        %2967 = vmatpush2.bf16.msra.mxu0 0
        %2968 = vmatprep.subr.bf16.mxu0 0
        %2969 = vmatpush2.bf16.msra.mxu0 0
        %2970 = vmatprep.subr.bf16.mxu0 0
        %2971 = vmatpush2.bf16.msra.mxu0 0
        %2972 = vmatprep.subr.bf16.mxu0 0
        %2973 = vmatpush2.bf16.msra.mxu0 0
        %2974 = vmatprep.subr.bf16.mxu0 0
        %2975 = vmatpush2.bf16.msra.mxu0 0
        %2976 = vmatprep.subr.bf16.mxu0 0
        %2977 = vmatpush2.bf16.msra.mxu0 0
        %2978 = vmatprep.mubr.bf16.mxu0 0
        %2979 = vmatmul.mubr.bf16.gmra.mxu0 %v2941
        %v2980 = vpop.f32.mrf.mxu0
        %v2981 = vadd.f32 0.0, %v2980
        %v2982 = vpop.f32.mrf.mxu0
        %v2983 = vpop.f32.mrf.mxu0
        %v2984 = vpop.f32.mrf.mxu0
        %2985 = vdwg.mxu0
        %v2986 = vpack.c.bf16 %v2981, %v2981
        %v2987 = vld [vmem:[%s651 + $0x14] sm:$0xf]
        %v2989 = vsel %vm789, %v2986, 0
        %v2992 = vsel %vm853, %v2987, 0
        %2994 = vmatprep.subr.bf16.mxu0 0
        %2995 = vmatpush1.bf16.msra.mxu0 0
        %2996 = vmatprep.subr.bf16.mxu0 0
        %2997 = vmatpush1.bf16.msra.mxu0 0
        %2998 = vmatprep.subr.bf16.mxu0 0
        %2999 = vmatpush1.bf16.msra.mxu0 0
        %3000 = vmatprep.subr.bf16.mxu0 0
        %3001 = vmatpush1.bf16.msra.mxu0 0
        %3002 = vmatprep.subr.bf16.mxu0 0
        %3003 = vmatpush1.bf16.msra.mxu0 0
        %3004 = vmatprep.subr.bf16.mxu0 0
        %3005 = vmatpush1.bf16.msra.mxu0 0
        %3006 = vmatprep.subr.bf16.mxu0 0
        %3007 = vmatpush1.bf16.msra.mxu0 0
        %3008 = vmatprep.subr.bf16.mxu0 0
        %3009 = vmatpush1.bf16.msra.mxu0 %v2992
        %3010 = vmatprep.subr.bf16.mxu0 0
        %3011 = vmatpush2.bf16.msra.mxu0 0
        %3012 = vmatprep.subr.bf16.mxu0 0
        %3013 = vmatpush2.bf16.msra.mxu0 0
        %3014 = vmatprep.subr.bf16.mxu0 0
        %3015 = vmatpush2.bf16.msra.mxu0 0
        %3016 = vmatprep.subr.bf16.mxu0 0
        %3017 = vmatpush2.bf16.msra.mxu0 0
        %3018 = vmatprep.subr.bf16.mxu0 0
        %3019 = vmatpush2.bf16.msra.mxu0 0
        %3020 = vmatprep.subr.bf16.mxu0 0
        %3021 = vmatpush2.bf16.msra.mxu0 0
        %3022 = vmatprep.subr.bf16.mxu0 0
        %3023 = vmatpush2.bf16.msra.mxu0 0
        %3024 = vmatprep.subr.bf16.mxu0 0
        %3025 = vmatpush2.bf16.msra.mxu0 0
        %3026 = vmatprep.mubr.bf16.mxu0 0
        %3027 = vmatmul.mubr.bf16.gmra.mxu0 %v2989
        %v3028 = vpop.f32.mrf.mxu0
        %v3029 = vadd.f32 0.0, %v3028
        %v3030 = vpop.f32.mrf.mxu0
        %v3031 = vpop.f32.mrf.mxu0
        %v3032 = vpop.f32.mrf.mxu0
        %3033 = vdwg.mxu0
        %v3034 = vadd.f32 %v2873, %v3029
        %3035 = vrot.lane.b32.xlu0 %v2073, 80
        %v3036 = vpop.permute.xlu0 %3035
        %3037 = vrot.lane.b32.xlu0 %v2073, 16
        %v3038 = vpop.permute.xlu0 %3037
        %v3040 = vsel %vm789, %v3036, 0
        %v3043 = vsel %vm789, %v3038, 0
        %3045 = vmatprep.subr.bf16.mxu0 0
        %3046 = vmatpush1.bf16.xpose.msra.mxu0 0
        %3047 = vmatprep.subr.bf16.mxu0 0
        %3048 = vmatpush1.bf16.xpose.msra.mxu0 0
        %3049 = vmatprep.subr.bf16.mxu0 0
        %3050 = vmatpush1.bf16.xpose.msra.mxu0 0
        %3051 = vmatprep.subr.bf16.mxu0 0
        %3052 = vmatpush1.bf16.xpose.msra.mxu0 0
        %3053 = vmatprep.subr.bf16.mxu0 0
        %3054 = vmatpush1.bf16.xpose.msra.mxu0 0
        %3055 = vmatprep.subr.bf16.mxu0 0
        %3056 = vmatpush1.bf16.xpose.msra.mxu0 0
        %3057 = vmatprep.subr.bf16.mxu0 0
        %3058 = vmatpush1.bf16.xpose.msra.mxu0 0
        %3059 = vmatprep.subr.bf16.mxu0 0
        %3060 = vmatpush1.bf16.xpose.msra.mxu0 %v3043
        %3061 = vmatprep.subr.bf16.mxu0 0
        %3062 = vmatpush2.bf16.xpose.msra.mxu0 0
        %3063 = vmatprep.subr.bf16.mxu0 0
        %3064 = vmatpush2.bf16.xpose.msra.mxu0 0
        %3065 = vmatprep.subr.bf16.mxu0 0
        %3066 = vmatpush2.bf16.xpose.msra.mxu0 0
        %3067 = vmatprep.subr.bf16.mxu0 0
        %3068 = vmatpush2.bf16.xpose.msra.mxu0 0
        %3069 = vmatprep.subr.bf16.mxu0 0
        %3070 = vmatpush2.bf16.xpose.msra.mxu0 0
        %3071 = vmatprep.subr.bf16.mxu0 0
        %3072 = vmatpush2.bf16.xpose.msra.mxu0 0
        %3073 = vmatprep.subr.bf16.mxu0 0
        %3074 = vmatpush2.bf16.xpose.msra.mxu0 0
        %3075 = vmatprep.subr.bf16.mxu0 0
        %3076 = vmatpush2.bf16.xpose.msra.mxu0 0
        %3077 = vmatprep.mubr.bf16.mxu0 0
        %3078 = vmatmul.mubr.bf16.gmra.mxu0 %v3040
        %v3079 = vpop.f32.mrf.mxu0
        %v3080 = vadd.f32 0.0, %v3079
        %v3081 = vpop.f32.mrf.mxu0
        %v3082 = vpop.f32.mrf.mxu0
        %v3083 = vpop.f32.mrf.mxu0
        %3084 = vdwg.mxu0
        %v3085 = vmul.f32 %v3080, 0.35355338
        %v3086 = vsel %vm785, %v3085, -1e+30
        %v3087 = vsel %vm789, %v3086, -inf
        %3088 = vmax.xlane.f32.xlu0 %v3087
        %v3089 = vpop.xlane.xlu0 %3088
        %v3090 = vsub.f32 %v3086, %v3089
        %v3091 = vmul.f32 %v3090, 1.442695
        %v3092 = vpow.pop %v3091
        %v3093 = vsel %vm789, %v3092, 0.0
        %3094 = vadd.xlane.f32.xlu0 %v3093
        %v3095 = vpop.xlane.xlu0 %3094
        %v3096 = vrcp.pop %v3095
        %v3097 = vmul.f32 %v3092, %v3096
        %v3098 = vpack.c.bf16 %v3097, %v3097
        %3099 = vrot.lane.b32.xlu0 %v2136, 80
        %v3100 = vpop.permute.xlu0 %3099
        %v3102 = vsel %vm789, %v3098, 0
        %v3105 = vsel %vm853, %v3100, 0
        %3107 = vmatprep.subr.bf16.mxu0 0
        %3108 = vmatpush1.bf16.msra.mxu0 0
        %3109 = vmatprep.subr.bf16.mxu0 0
        %3110 = vmatpush1.bf16.msra.mxu0 0
        %3111 = vmatprep.subr.bf16.mxu0 0
        %3112 = vmatpush1.bf16.msra.mxu0 0
        %3113 = vmatprep.subr.bf16.mxu0 0
        %3114 = vmatpush1.bf16.msra.mxu0 0
        %3115 = vmatprep.subr.bf16.mxu0 0
        %3116 = vmatpush1.bf16.msra.mxu0 0
        %3117 = vmatprep.subr.bf16.mxu0 0
        %3118 = vmatpush1.bf16.msra.mxu0 0
        %3119 = vmatprep.subr.bf16.mxu0 0
        %3120 = vmatpush1.bf16.msra.mxu0 0
        %3121 = vmatprep.subr.bf16.mxu0 0
        %3122 = vmatpush1.bf16.msra.mxu0 %v3105
        %3123 = vmatprep.subr.bf16.mxu0 0
        %3124 = vmatpush2.bf16.msra.mxu0 0
        %3125 = vmatprep.subr.bf16.mxu0 0
        %3126 = vmatpush2.bf16.msra.mxu0 0
        %3127 = vmatprep.subr.bf16.mxu0 0
        %3128 = vmatpush2.bf16.msra.mxu0 0
        %3129 = vmatprep.subr.bf16.mxu0 0
        %3130 = vmatpush2.bf16.msra.mxu0 0
        %3131 = vmatprep.subr.bf16.mxu0 0
        %3132 = vmatpush2.bf16.msra.mxu0 0
        %3133 = vmatprep.subr.bf16.mxu0 0
        %3134 = vmatpush2.bf16.msra.mxu0 0
        %3135 = vmatprep.subr.bf16.mxu0 0
        %3136 = vmatpush2.bf16.msra.mxu0 0
        %3137 = vmatprep.subr.bf16.mxu0 0
        %3138 = vmatpush2.bf16.msra.mxu0 0
        %3139 = vmatprep.mubr.bf16.mxu0 0
        %3140 = vmatmul.mubr.bf16.gmra.mxu0 %v3102
        %v3141 = vpop.f32.mrf.mxu0
        %v3142 = vadd.f32 0.0, %v3141
        %v3143 = vpop.f32.mrf.mxu0
        %v3144 = vpop.f32.mrf.mxu0
        %v3145 = vpop.f32.mrf.mxu0
        %3146 = vdwg.mxu0
        %v3147 = vpack.c.bf16 %v3142, %v3142
        %v3148 = vld [vmem:[%s651 + $0x18] sm:$0xf]
        %v3150 = vsel %vm789, %v3147, 0
        %v3153 = vsel %vm853, %v3148, 0
        %3155 = vmatprep.subr.bf16.mxu0 0
        %3156 = vmatpush1.bf16.msra.mxu0 0
        %3157 = vmatprep.subr.bf16.mxu0 0
        %3158 = vmatpush1.bf16.msra.mxu0 0
        %3159 = vmatprep.subr.bf16.mxu0 0
        %3160 = vmatpush1.bf16.msra.mxu0 0
        %3161 = vmatprep.subr.bf16.mxu0 0
        %3162 = vmatpush1.bf16.msra.mxu0 0
        %3163 = vmatprep.subr.bf16.mxu0 0
        %3164 = vmatpush1.bf16.msra.mxu0 0
        %3165 = vmatprep.subr.bf16.mxu0 0
        %3166 = vmatpush1.bf16.msra.mxu0 0
        %3167 = vmatprep.subr.bf16.mxu0 0
        %3168 = vmatpush1.bf16.msra.mxu0 0
        %3169 = vmatprep.subr.bf16.mxu0 0
        %3170 = vmatpush1.bf16.msra.mxu0 %v3153
        %3171 = vmatprep.subr.bf16.mxu0 0
        %3172 = vmatpush2.bf16.msra.mxu0 0
        %3173 = vmatprep.subr.bf16.mxu0 0
        %3174 = vmatpush2.bf16.msra.mxu0 0
        %3175 = vmatprep.subr.bf16.mxu0 0
        %3176 = vmatpush2.bf16.msra.mxu0 0
        %3177 = vmatprep.subr.bf16.mxu0 0
        %3178 = vmatpush2.bf16.msra.mxu0 0
        %3179 = vmatprep.subr.bf16.mxu0 0
        %3180 = vmatpush2.bf16.msra.mxu0 0
        %3181 = vmatprep.subr.bf16.mxu0 0
        %3182 = vmatpush2.bf16.msra.mxu0 0
        %3183 = vmatprep.subr.bf16.mxu0 0
        %3184 = vmatpush2.bf16.msra.mxu0 0
        %3185 = vmatprep.subr.bf16.mxu0 0
        %3186 = vmatpush2.bf16.msra.mxu0 0
        %3187 = vmatprep.mubr.bf16.mxu0 0
        %3188 = vmatmul.mubr.bf16.gmra.mxu0 %v3150
        %v3189 = vpop.f32.mrf.mxu0
        %v3190 = vadd.f32 0.0, %v3189
        %v3191 = vpop.f32.mrf.mxu0
        %v3192 = vpop.f32.mrf.mxu0
        %v3193 = vpop.f32.mrf.mxu0
        %3194 = vdwg.mxu0
        %v3195 = vadd.f32 %v3034, %v3190
        %3196 = vrot.lane.b32.xlu0 %v2073, 72
        %v3197 = vpop.permute.xlu0 %3196
        %3198 = vrot.lane.b32.xlu0 %v2073, 8
        %v3199 = vpop.permute.xlu0 %3198
        %v3201 = vsel %vm789, %v3197, 0
        %v3204 = vsel %vm789, %v3199, 0
        %3206 = vmatprep.subr.bf16.mxu0 0
        %3207 = vmatpush1.bf16.xpose.msra.mxu0 0
        %3208 = vmatprep.subr.bf16.mxu0 0
        %3209 = vmatpush1.bf16.xpose.msra.mxu0 0
        %3210 = vmatprep.subr.bf16.mxu0 0
        %3211 = vmatpush1.bf16.xpose.msra.mxu0 0
        %3212 = vmatprep.subr.bf16.mxu0 0
        %3213 = vmatpush1.bf16.xpose.msra.mxu0 0
        %3214 = vmatprep.subr.bf16.mxu0 0
        %3215 = vmatpush1.bf16.xpose.msra.mxu0 0
        %3216 = vmatprep.subr.bf16.mxu0 0
        %3217 = vmatpush1.bf16.xpose.msra.mxu0 0
        %3218 = vmatprep.subr.bf16.mxu0 0
        %3219 = vmatpush1.bf16.xpose.msra.mxu0 0
        %3220 = vmatprep.subr.bf16.mxu0 0
        %3221 = vmatpush1.bf16.xpose.msra.mxu0 %v3204
        %3222 = vmatprep.subr.bf16.mxu0 0
        %3223 = vmatpush2.bf16.xpose.msra.mxu0 0
        %3224 = vmatprep.subr.bf16.mxu0 0
        %3225 = vmatpush2.bf16.xpose.msra.mxu0 0
        %3226 = vmatprep.subr.bf16.mxu0 0
        %3227 = vmatpush2.bf16.xpose.msra.mxu0 0
        %3228 = vmatprep.subr.bf16.mxu0 0
        %3229 = vmatpush2.bf16.xpose.msra.mxu0 0
        %3230 = vmatprep.subr.bf16.mxu0 0
        %3231 = vmatpush2.bf16.xpose.msra.mxu0 0
        %3232 = vmatprep.subr.bf16.mxu0 0
        %3233 = vmatpush2.bf16.xpose.msra.mxu0 0
        %3234 = vmatprep.subr.bf16.mxu0 0
        %3235 = vmatpush2.bf16.xpose.msra.mxu0 0
        %3236 = vmatprep.subr.bf16.mxu0 0
        %3237 = vmatpush2.bf16.xpose.msra.mxu0 0
        %3238 = vmatprep.mubr.bf16.mxu0 0
        %3239 = vmatmul.mubr.bf16.gmra.mxu0 %v3201
        %v3240 = vpop.f32.mrf.mxu0
        %v3241 = vadd.f32 0.0, %v3240
        %v3242 = vpop.f32.mrf.mxu0
        %v3243 = vpop.f32.mrf.mxu0
        %v3244 = vpop.f32.mrf.mxu0
        %3245 = vdwg.mxu0
        %v3246 = vmul.f32 %v3241, 0.35355338
        %v3247 = vsel %vm785, %v3246, -1e+30
        %v3248 = vsel %vm789, %v3247, -inf
        %3249 = vmax.xlane.f32.xlu0 %v3248
        %v3250 = vpop.xlane.xlu0 %3249
        %v3251 = vsub.f32 %v3247, %v3250
        %v3252 = vmul.f32 %v3251, 1.442695
        %v3253 = vpow.pop %v3252
        %v3254 = vsel %vm789, %v3253, 0.0
        %3255 = vadd.xlane.f32.xlu0 %v3254
        %v3256 = vpop.xlane.xlu0 %3255
        %v3257 = vrcp.pop %v3256
        %v3258 = vmul.f32 %v3253, %v3257
        %v3259 = vpack.c.bf16 %v3258, %v3258
        %3260 = vrot.lane.b32.xlu0 %v2136, 72
        %v3261 = vpop.permute.xlu0 %3260
        %v3263 = vsel %vm789, %v3259, 0
        %v3266 = vsel %vm853, %v3261, 0
        %3268 = vmatprep.subr.bf16.mxu0 0
        %3269 = vmatpush1.bf16.msra.mxu0 0
        %3270 = vmatprep.subr.bf16.mxu0 0
        %3271 = vmatpush1.bf16.msra.mxu0 0
        %3272 = vmatprep.subr.bf16.mxu0 0
        %3273 = vmatpush1.bf16.msra.mxu0 0
        %3274 = vmatprep.subr.bf16.mxu0 0
        %3275 = vmatpush1.bf16.msra.mxu0 0
        %3276 = vmatprep.subr.bf16.mxu0 0
        %3277 = vmatpush1.bf16.msra.mxu0 0
        %3278 = vmatprep.subr.bf16.mxu0 0
        %3279 = vmatpush1.bf16.msra.mxu0 0
        %3280 = vmatprep.subr.bf16.mxu0 0
        %3281 = vmatpush1.bf16.msra.mxu0 0
        %3282 = vmatprep.subr.bf16.mxu0 0
        %3283 = vmatpush1.bf16.msra.mxu0 %v3266
        %3284 = vmatprep.subr.bf16.mxu0 0
        %3285 = vmatpush2.bf16.msra.mxu0 0
        %3286 = vmatprep.subr.bf16.mxu0 0
        %3287 = vmatpush2.bf16.msra.mxu0 0
        %3288 = vmatprep.subr.bf16.mxu0 0
        %3289 = vmatpush2.bf16.msra.mxu0 0
        %3290 = vmatprep.subr.bf16.mxu0 0
        %3291 = vmatpush2.bf16.msra.mxu0 0
        %3292 = vmatprep.subr.bf16.mxu0 0
        %3293 = vmatpush2.bf16.msra.mxu0 0
        %3294 = vmatprep.subr.bf16.mxu0 0
        %3295 = vmatpush2.bf16.msra.mxu0 0
        %3296 = vmatprep.subr.bf16.mxu0 0
        %3297 = vmatpush2.bf16.msra.mxu0 0
        %3298 = vmatprep.subr.bf16.mxu0 0
        %3299 = vmatpush2.bf16.msra.mxu0 0
        %3300 = vmatprep.mubr.bf16.mxu0 0
        %3301 = vmatmul.mubr.bf16.gmra.mxu0 %v3263
        %v3302 = vpop.f32.mrf.mxu0
        %v3303 = vadd.f32 0.0, %v3302
        %v3304 = vpop.f32.mrf.mxu0
        %v3305 = vpop.f32.mrf.mxu0
        %v3306 = vpop.f32.mrf.mxu0
        %3307 = vdwg.mxu0
        %v3308 = vpack.c.bf16 %v3303, %v3303
        %v3309 = vld [vmem:[%s651 + $0x1c] sm:$0xf]
        %v3311 = vsel %vm789, %v3308, 0
        %v3314 = vsel %vm853, %v3309, 0
        %3316 = vmatprep.subr.bf16.mxu0 0
        %3317 = vmatpush1.bf16.msra.mxu0 0
        %3318 = vmatprep.subr.bf16.mxu0 0
        %3319 = vmatpush1.bf16.msra.mxu0 0
        %3320 = vmatprep.subr.bf16.mxu0 0
        %3321 = vmatpush1.bf16.msra.mxu0 0
        %3322 = vmatprep.subr.bf16.mxu0 0
        %3323 = vmatpush1.bf16.msra.mxu0 0
        %3324 = vmatprep.subr.bf16.mxu0 0
        %3325 = vmatpush1.bf16.msra.mxu0 0
        %3326 = vmatprep.subr.bf16.mxu0 0
        %3327 = vmatpush1.bf16.msra.mxu0 0
        %3328 = vmatprep.subr.bf16.mxu0 0
        %3329 = vmatpush1.bf16.msra.mxu0 0
        %3330 = vmatprep.subr.bf16.mxu0 0
        %3331 = vmatpush1.bf16.msra.mxu0 %v3314
        %3332 = vmatprep.subr.bf16.mxu0 0
        %3333 = vmatpush2.bf16.msra.mxu0 0
        %3334 = vmatprep.subr.bf16.mxu0 0
        %3335 = vmatpush2.bf16.msra.mxu0 0
        %3336 = vmatprep.subr.bf16.mxu0 0
        %3337 = vmatpush2.bf16.msra.mxu0 0
        %3338 = vmatprep.subr.bf16.mxu0 0
        %3339 = vmatpush2.bf16.msra.mxu0 0
        %3340 = vmatprep.subr.bf16.mxu0 0
        %3341 = vmatpush2.bf16.msra.mxu0 0
        %3342 = vmatprep.subr.bf16.mxu0 0
        %3343 = vmatpush2.bf16.msra.mxu0 0
        %3344 = vmatprep.subr.bf16.mxu0 0
        %3345 = vmatpush2.bf16.msra.mxu0 0
        %3346 = vmatprep.subr.bf16.mxu0 0
        %3347 = vmatpush2.bf16.msra.mxu0 0
        %3348 = vmatprep.mubr.bf16.mxu0 0
        %3349 = vmatmul.mubr.bf16.gmra.mxu0 %v3311
        %v3350 = vpop.f32.mrf.mxu0
        %v3351 = vadd.f32 0.0, %v3350
        %v3352 = vpop.f32.mrf.mxu0
        %v3353 = vpop.f32.mrf.mxu0
        %v3354 = vpop.f32.mrf.mxu0
        %3355 = vdwg.mxu0
        %v3356 = vadd.f32 %v3195, %v3351
        %3357 = vst.msk [vmem:[#allocation3 + $0x8] sm:$0xff] %vm732, %v3356
        %v3358 = vld [vmem:[#allocation3] sm:$0xff]
        %v3359 = vld [vmem:[#allocation3 + $0x8] sm:$0xff]
        %v3360 = vld [vmem:[%s654] sm:$0x1]
        %v3362 = vlaneseq
        %v3363 = vshrl.u32 %v3362, 7
        %v3364 = vsub.s32 0, %v3363
        %v3365 = vrot.slane %v3360, %v3364
        %v3367 = vadd.f32 %v3358, %v3365
        %v3368 = vadd.f32 %v3359, %v3365
        %v3369 = vadd.f32 %v3367, %v693
        %v3370 = vadd.f32 %v3368, %v694
        %v3371 = vsel %vm732, %v3369, 0.0
        %3372 = vadd.xlane.f32.xlu0 %v3371
        %v3373 = vpop.xlane.xlu0 %3372
        %v3374 = vsel %vm732, %v3370, 0.0
        %3375 = vadd.xlane.f32.xlu0 %v3374
        %v3376 = vpop.xlane.xlu0 %3375
        %v3377 = vrcp.pop 32.0
        %v3378 = vmul.f32 %v3373, %v3377
        %v3379 = vmul.f32 %v3376, %v3377
        %v3380 = vsub.f32 %v3369, %v3378
        %v3381 = vsub.f32 %v3370, %v3379
        %v3382 = vmul.f32 %v3380, %v3380
        %v3383 = vmul.f32 %v3381, %v3381
        %v3384 = vsel %vm732, %v3382, 0.0
        %3385 = vadd.xlane.f32.xlu0 %v3384
        %v3386 = vpop.xlane.xlu0 %3385
        %v3387 = vsel %vm732, %v3383, 0.0
        %3388 = vadd.xlane.f32.xlu0 %v3387
        %v3389 = vpop.xlane.xlu0 %3388
        %v3390 = vmul.f32 %v3386, %v3377
        %v3391 = vmul.f32 %v3389, %v3377
        %v3392 = vadd.f32 %v3390, 1e-05
        %v3393 = vadd.f32 %v3391, 1e-05
        %v3394 = vrsqrt.pop %v3392
        %v3395 = vrsqrt.pop %v3393
        %v3396 = vmul.f32 %v3380, %v3394
        %v3397 = vmul.f32 %v3381, %v3395
        %v3398 = vld [vmem:[%s657] sm:$0x1]
        %v3400 = vlaneseq
        %v3401 = vshrl.u32 %v3400, 7
        %v3402 = vsub.s32 0, %v3401
        %v3403 = vrot.slane %v3398, %v3402
        %v3405 = vmul.f32 %v3396, %v3403
        %v3406 = vmul.f32 %v3397, %v3403
        %v3407 = vld [vmem:[%s660] sm:$0x1]
        %v3409 = vlaneseq
        %v3410 = vshrl.u32 %v3409, 7
        %v3411 = vsub.s32 0, %v3410
        %v3412 = vrot.slane %v3407, %v3411
        %v3414 = vadd.f32 %v3405, %v3412
        %v3415 = vadd.f32 %v3406, %v3412
        %v3416 = vpack.c.bf16 %v3415, %v3414
        %v3417 = vld [vmem:[%s665] sm:$0xf]
        %v3418 = vld [vmem:[%s665 + $0x4] sm:$0xf]
        %v3419 = vld [vmem:[%s665 + $0x8] sm:$0xf]
        %v3420 = vld [vmem:[%s665 + $0xc] sm:$0xf]
        %v3421 = vld [vmem:[%s668] sm:$0x1]
        %v3423 = vlaneseq
        %v3424 = vshrl.u32 %v3423, 7
        %v3425 = vsub.s32 0, %v3424
        %v3426 = vrot.slane %v3421, %v3425
        %v3432 = vunpack.c.l.b16 %v3417
        %v3433 = vunpack.c.l.b16 %v3418
        %v3434 = vunpack.c.l.b16 %v3419
        %v3435 = vunpack.c.l.b16 %v3420
        %v3436 = vpack.c.b16 %v3433, %v3432
        %v3437 = vpack.c.b16 %v3435, %v3434
        %v3441 = vsel %vm732, %v3416, 0
        %3443 = vmatprep.subr.bf16.mxu0 0
        %3444 = vmatpush1.bf16.msra.mxu0 0
        %3445 = vmatprep.subr.bf16.mxu0 0
        %3446 = vmatpush1.bf16.msra.mxu0 0
        %3447 = vmatprep.subr.bf16.mxu0 0
        %3448 = vmatpush1.bf16.msra.mxu0 0
        %3449 = vmatprep.subr.bf16.mxu0 0
        %3450 = vmatpush1.bf16.msra.mxu0 0
        %3451 = vmatprep.subr.bf16.mxu0 0
        %3452 = vmatpush1.bf16.msra.mxu0 0
        %3453 = vmatprep.subr.bf16.mxu0 0
        %3454 = vmatpush1.bf16.msra.mxu0 0
        %3455 = vmatprep.subr.bf16.mxu0 0
        %3456 = vmatpush1.bf16.msra.mxu0 %v3437
        %3457 = vmatprep.subr.bf16.mxu0 0
        %3458 = vmatpush1.bf16.msra.mxu0 %v3436
        %3459 = vmatprep.subr.bf16.mxu0 0
        %3460 = vmatpush2.bf16.msra.mxu0 0
        %3461 = vmatprep.subr.bf16.mxu0 0
        %3462 = vmatpush2.bf16.msra.mxu0 0
        %3463 = vmatprep.subr.bf16.mxu0 0
        %3464 = vmatpush2.bf16.msra.mxu0 0
        %3465 = vmatprep.subr.bf16.mxu0 0
        %3466 = vmatpush2.bf16.msra.mxu0 0
        %3467 = vmatprep.subr.bf16.mxu0 0
        %3468 = vmatpush2.bf16.msra.mxu0 0
        %3469 = vmatprep.subr.bf16.mxu0 0
        %3470 = vmatpush2.bf16.msra.mxu0 0
        %3471 = vmatprep.subr.bf16.mxu0 0
        %3472 = vmatpush2.bf16.msra.mxu0 0
        %3473 = vmatprep.subr.bf16.mxu0 0
        %3474 = vmatpush2.bf16.msra.mxu0 0
        %3475 = vmatprep.mubr.bf16.mxu0 0
        %3476 = vmatmul.mubr.bf16.gmra.mxu0 %v3441
        %v3477 = vpop.f32.mrf.mxu0
        %v3478 = vadd.f32 %v3426, %v3477
        %v3479 = vpop.f32.mrf.mxu0
        %v3480 = vpop.f32.mrf.mxu0
        %v3481 = vadd.f32 %v3426, %v3480
        %v3482 = vpop.f32.mrf.mxu0
        %3483 = vdwg.mxu0
        %v3484 = vmax.f32 %v3478, 0.0
        %v3485 = vmax.f32 %v3481, 0.0
        %v3486 = vpack.c.bf16 %v3485, %v3484
        %v3487 = vld [vmem:[%s673] sm:$0xf]
        %v3488 = vld [vmem:[%s673 + $0x4] sm:$0xf]
        %v3489 = vld [vmem:[%s673 + $0x8] sm:$0xf]
        %v3490 = vld [vmem:[%s673 + $0xc] sm:$0xf]
        %v3491 = vld [vmem:[%s673 + $0x10] sm:$0xf]
        %v3492 = vld [vmem:[%s673 + $0x14] sm:$0xf]
        %v3493 = vld [vmem:[%s673 + $0x18] sm:$0xf]
        %v3494 = vld [vmem:[%s673 + $0x1c] sm:$0xf]
        %v3495 = vld [vmem:[%s673 + $0x20] sm:$0xf]
        %v3496 = vld [vmem:[%s673 + $0x24] sm:$0xf]
        %v3497 = vld [vmem:[%s673 + $0x28] sm:$0xf]
        %v3498 = vld [vmem:[%s673 + $0x2c] sm:$0xf]
        %v3499 = vld [vmem:[%s673 + $0x30] sm:$0xf]
        %v3500 = vld [vmem:[%s673 + $0x34] sm:$0xf]
        %v3501 = vld [vmem:[%s673 + $0x38] sm:$0xf]
        %v3502 = vld [vmem:[%s673 + $0x3c] sm:$0xf]
        %v3503 = vld [vmem:[%s676] sm:$0x1]
        %v3505 = vlaneseq
        %v3506 = vshrl.u32 %v3505, 7
        %v3507 = vsub.s32 0, %v3506
        %v3508 = vrot.slane %v3503, %v3507
        %v3526 = vunpack.c.l.b16 %v3487
        %v3527 = vunpack.c.l.b16 %v3488
        %v3528 = vunpack.c.l.b16 %v3489
        %v3529 = vunpack.c.l.b16 %v3490
        %v3530 = vunpack.c.l.b16 %v3491
        %v3531 = vunpack.c.l.b16 %v3492
        %v3532 = vunpack.c.l.b16 %v3493
        %v3533 = vunpack.c.l.b16 %v3494
        %v3534 = vunpack.c.l.b16 %v3495
        %v3535 = vunpack.c.l.b16 %v3496
        %v3536 = vunpack.c.l.b16 %v3497
        %v3537 = vunpack.c.l.b16 %v3498
        %v3538 = vunpack.c.l.b16 %v3499
        %v3539 = vunpack.c.l.b16 %v3500
        %v3540 = vunpack.c.l.b16 %v3501
        %v3541 = vunpack.c.l.b16 %v3502
        %v3542 = vpack.c.b16 %v3527, %v3526
        %v3543 = vpack.c.b16 %v3529, %v3528
        %v3544 = vpack.c.b16 %v3531, %v3530
        %v3545 = vpack.c.b16 %v3533, %v3532
        %v3546 = vpack.c.b16 %v3535, %v3534
        %v3547 = vpack.c.b16 %v3537, %v3536
        %v3548 = vpack.c.b16 %v3539, %v3538
        %v3549 = vpack.c.b16 %v3541, %v3540
        %3558 = vmatprep.subr.bf16.mxu0 0
        %3559 = vmatpush1.bf16.msra.mxu0 %v3549
        %3560 = vmatprep.subr.bf16.mxu0 0
        %3561 = vmatpush1.bf16.msra.mxu0 %v3548
        %3562 = vmatprep.subr.bf16.mxu0 0
        %3563 = vmatpush1.bf16.msra.mxu0 %v3547
        %3564 = vmatprep.subr.bf16.mxu0 0
        %3565 = vmatpush1.bf16.msra.mxu0 %v3546
        %3566 = vmatprep.subr.bf16.mxu0 0
        %3567 = vmatpush1.bf16.msra.mxu0 %v3545
        %3568 = vmatprep.subr.bf16.mxu0 0
        %3569 = vmatpush1.bf16.msra.mxu0 %v3544
        %3570 = vmatprep.subr.bf16.mxu0 0
        %3571 = vmatpush1.bf16.msra.mxu0 %v3543
        %3572 = vmatprep.subr.bf16.mxu0 0
        %3573 = vmatpush1.bf16.msra.mxu0 %v3542
        %3574 = vmatprep.subr.bf16.mxu0 0
        %3575 = vmatpush2.bf16.msra.mxu0 0
        %3576 = vmatprep.subr.bf16.mxu0 0
        %3577 = vmatpush2.bf16.msra.mxu0 0
        %3578 = vmatprep.subr.bf16.mxu0 0
        %3579 = vmatpush2.bf16.msra.mxu0 0
        %3580 = vmatprep.subr.bf16.mxu0 0
        %3581 = vmatpush2.bf16.msra.mxu0 0
        %3582 = vmatprep.subr.bf16.mxu0 0
        %3583 = vmatpush2.bf16.msra.mxu0 0
        %3584 = vmatprep.subr.bf16.mxu0 0
        %3585 = vmatpush2.bf16.msra.mxu0 0
        %3586 = vmatprep.subr.bf16.mxu0 0
        %3587 = vmatpush2.bf16.msra.mxu0 0
        %3588 = vmatprep.subr.bf16.mxu0 0
        %3589 = vmatpush2.bf16.msra.mxu0 0
        %3590 = vmatprep.mubr.bf16.mxu0 0
        %3591 = vmatmul.mubr.bf16.gmra.mxu0 %v3486
        %v3592 = vpop.f32.mrf.mxu0
        %v3593 = vadd.f32 %v3508, %v3592
        %v3594 = vpop.f32.mrf.mxu0
        %v3595 = vpop.f32.mrf.mxu0
        %v3596 = vadd.f32 %v3508, %v3595
        %v3597 = vpop.f32.mrf.mxu0
        %3598 = vdwg.mxu0
        %v3599 = vadd.f32 %v3593, %v3414
        %v3600 = vadd.f32 %v3596, %v3415
        %v3601 = vsel %vm732, %v3599, 0.0
        %3602 = vadd.xlane.f32.xlu0 %v3601
        %v3603 = vpop.xlane.xlu0 %3602
        %v3604 = vsel %vm732, %v3600, 0.0
        %3605 = vadd.xlane.f32.xlu0 %v3604
        %v3606 = vpop.xlane.xlu0 %3605
        %v3607 = vmul.f32 %v3603, %v3377
        %v3608 = vmul.f32 %v3606, %v3377
        %v3609 = vsub.f32 %v3599, %v3607
        %v3610 = vsub.f32 %v3600, %v3608
        %v3611 = vmul.f32 %v3609, %v3609
        %v3612 = vmul.f32 %v3610, %v3610
        %v3613 = vsel %vm732, %v3611, 0.0
        %3614 = vadd.xlane.f32.xlu0 %v3613
        %v3615 = vpop.xlane.xlu0 %3614
        %v3616 = vsel %vm732, %v3612, 0.0
        %3617 = vadd.xlane.f32.xlu0 %v3616
        %v3618 = vpop.xlane.xlu0 %3617
        %v3619 = vmul.f32 %v3615, %v3377
        %v3620 = vmul.f32 %v3618, %v3377
        %v3621 = vadd.f32 %v3619, 1e-05
        %v3622 = vadd.f32 %v3620, 1e-05
        %v3623 = vrsqrt.pop %v3621
        %v3624 = vrsqrt.pop %v3622
        %v3625 = vmul.f32 %v3609, %v3623
        %v3626 = vmul.f32 %v3610, %v3624
        %v3627 = vld [vmem:[%s679] sm:$0x1]
        %v3629 = vlaneseq
        %v3630 = vshrl.u32 %v3629, 7
        %v3631 = vsub.s32 0, %v3630
        %v3632 = vrot.slane %v3627, %v3631
        %v3634 = vmul.f32 %v3625, %v3632
        %v3635 = vmul.f32 %v3626, %v3632
        %v3636 = vld [vmem:[%s682] sm:$0x1]
        %v3638 = vlaneseq
        %v3639 = vshrl.u32 %v3638, 7
        %v3640 = vsub.s32 0, %v3639
        %v3641 = vrot.slane %v3636, %v3640
        %v3643 = vadd.f32 %v3634, %v3641
        %v3644 = vadd.f32 %v3635, %v3641
        %3645 = vst.msk [vmem:[#allocation2] sm:$0xff] %vm732, %v3643
        %3646 = vst.msk [vmem:[#allocation2 + $0x8] sm:$0xff] %vm732, %v3644
        %p3647 = scmp.eq.s32.totalorder %s28, 5
        // Predicated region
        $region89: #{model_forward.1} parent=83 // pred_check
          %p3648 = pneg %p3647
        $region90: #{model_forward.1} parent=83 // pred_check_branch
          %3650 = sbr.rel (%p3648) target = $region92
        $region91: #{model_forward.1} parent=83 // pred_region
          %v3651 = vpack.c.bf16 %v3644, %v3643
          %v3652 = vld [vmem:[%s2] sm:$0xf]
          %v3653 = vld [vmem:[%s2 + $0x4] sm:$0xf]
          %v3654 = vld [vmem:[%s2 + $0x8] sm:$0xf]
          %v3655 = vld [vmem:[%s2 + $0xc] sm:$0xf]
          %v3656 = vld [vmem:[%s3] sm:$0x1]
          %v3658 = vlaneseq
          %v3659 = vshrl.u32 %v3658, 7
          %v3660 = vsub.s32 0, %v3659
          %v3661 = vrot.slane %v3656, %v3660
          %v3667 = vunpack.c.l.b16 %v3652
          %v3668 = vunpack.c.l.b16 %v3653
          %v3669 = vunpack.c.l.b16 %v3654
          %v3670 = vunpack.c.l.b16 %v3655
          %v3671 = vpack.c.b16 %v3668, %v3667
          %v3672 = vpack.c.b16 %v3670, %v3669
          %v3676 = vsel %vm732, %v3651, 0
          %3678 = vmatprep.subr.bf16.mxu0 0
          %3679 = vmatpush1.bf16.msra.mxu0 0
          %3680 = vmatprep.subr.bf16.mxu0 0
          %3681 = vmatpush1.bf16.msra.mxu0 0
          %3682 = vmatprep.subr.bf16.mxu0 0
          %3683 = vmatpush1.bf16.msra.mxu0 0
          %3684 = vmatprep.subr.bf16.mxu0 0
          %3685 = vmatpush1.bf16.msra.mxu0 0
          %3686 = vmatprep.subr.bf16.mxu0 0
          %3687 = vmatpush1.bf16.msra.mxu0 0
          %3688 = vmatprep.subr.bf16.mxu0 0
          %3689 = vmatpush1.bf16.msra.mxu0 0
          %3690 = vmatprep.subr.bf16.mxu0 0
          %3691 = vmatpush1.bf16.msra.mxu0 %v3672
          %3692 = vmatprep.subr.bf16.mxu0 0
          %3693 = vmatpush1.bf16.msra.mxu0 %v3671
          %3694 = vmatprep.subr.bf16.mxu0 0
          %3695 = vmatpush2.bf16.msra.mxu0 0
          %3696 = vmatprep.subr.bf16.mxu0 0
          %3697 = vmatpush2.bf16.msra.mxu0 0
          %3698 = vmatprep.subr.bf16.mxu0 0
          %3699 = vmatpush2.bf16.msra.mxu0 0
          %3700 = vmatprep.subr.bf16.mxu0 0
          %3701 = vmatpush2.bf16.msra.mxu0 0
          %3702 = vmatprep.subr.bf16.mxu0 0
          %3703 = vmatpush2.bf16.msra.mxu0 0
          %3704 = vmatprep.subr.bf16.mxu0 0
          %3705 = vmatpush2.bf16.msra.mxu0 0
          %3706 = vmatprep.subr.bf16.mxu0 0
          %3707 = vmatpush2.bf16.msra.mxu0 0
          %3708 = vmatprep.subr.bf16.mxu0 0
          %3709 = vmatpush2.bf16.msra.mxu0 0
          %3710 = vmatprep.mubr.bf16.mxu0 0
          %3711 = vmatmul.mubr.bf16.gmra.mxu0 %v3676
          %v3712 = vpop.f32.mrf.mxu0
          %v3713 = vadd.f32 %v3661, %v3712
          %v3714 = vpop.f32.mrf.mxu0
          %v3715 = vpop.f32.mrf.mxu0
          %v3716 = vadd.f32 %v3661, %v3715
          %v3717 = vpop.f32.mrf.mxu0
          %3718 = vdwg.mxu0
          %vm3719 = vcmask 523264
          %v3720 = vsel %vm3719, %v3713, -inf
          %3721 = vmax.xlane.f32.xlu0 %v3720
          %v3722 = vpop.xlane.xlu0 %3721
          %v3723 = vsel %vm3719, %v3716, -inf
          %3724 = vmax.xlane.f32.xlu0 %v3723
          %v3725 = vpop.xlane.xlu0 %3724
          %v3726 = vsub.f32 %v3713, %v3722
          %v3727 = vsub.f32 %v3716, %v3725
          %v3728 = vmul.f32 %v3726, 1.442695
          %v3729 = vpow.pop %v3728
          %v3730 = vmul.f32 %v3727, 1.442695
          %v3731 = vpow.pop %v3730
          %v3732 = vsel %vm3719, %v3729, 0.0
          %3733 = vadd.xlane.f32.xlu0 %v3732
          %v3734 = vpop.xlane.xlu0 %3733
          %v3735 = vsel %vm3719, %v3731, 0.0
          %3736 = vadd.xlane.f32.xlu0 %v3735
          %v3737 = vpop.xlane.xlu0 %3736
          %v3738 = vlog2.pop %v3734
          %v3739 = vmul.f32 %v3738, 0.6931472
          %v3740 = vlog2.pop %v3737
          %v3741 = vmul.f32 %v3740, 0.6931472
          %v3742 = vadd.f32 %v3722, %v3739
          %v3743 = vadd.f32 %v3725, %v3741
          %v3744 = vld [vmem:[%s1] sm:$0xff]
          %v3745 = vld [vmem:[%s1 + $0x8] sm:$0xff]
          %3746 = vset.pattern.permute.xlu0 0
          %3747 = vperm.xlu0 %3746, %v3744
          %v3748 = vpop.permute.xlu0 %3747
          %3749 = vset.pattern.permute.xlu0 0
          %3750 = vperm.xlu0 %3749, %v3745
          %v3751 = vpop.permute.xlu0 %3750
          %vm3752 = vcmp.eq.s32.totalorder %v784, %v3748
          %vm3753 = vcmp.eq.s32.totalorder %v784, %v3751
          %v3754 = vsel %vm3752, %v3713, 0.0
          %v3755 = vsel %vm3753, %v3716, 0.0
          %v3756 = vsel %vm3719, %v3754, 0.0
          %3757 = vadd.xlane.f32.xlu0 %v3756
          %v3758 = vpop.xlane.xlu0 %3757
          %v3759 = vsel %vm3719, %v3755, 0.0
          %3760 = vadd.xlane.f32.xlu0 %v3759
          %v3761 = vpop.xlane.xlu0 %3760
          %vm3762 = vcmp.ne.s32.totalorder %v3744, 0
          %vm3763 = vcmp.ne.s32.totalorder %v3745, 0
          %v3764 = vsel %vm3762, 1, 0
          %v3765 = vsel %vm3763, 1, 0
          %v3766 = vcvt.s32.f32 %v3764
          %v3767 = vcvt.s32.f32 %v3765
          %v3768 = vsub.f32 %v3742, %v3758
          %v3769 = vsub.f32 %v3743, %v3761
          %v3770 = vmul.f32 %v3768, %v3766
          %v3771 = vmul.f32 %v3769, %v3767
          %vm3772 = vcmask 7168
          %v3773 = vsel %vm3772, %v3770, 0.0
          %v3774 = vsel %vm3772, %v3771, 0.0
          %v3775 = vadd.f32 %v3773, %v3774
          %v3776 = vrot.slane %v3775, 4
          %v3777 = vadd.f32 %v3775, %v3776
          %v3778 = vrot.slane %v3777, 2
          %v3779 = vadd.f32 %v3777, %v3778
          %v3780 = vrot.slane %v3779, 1
          %v3781 = vadd.f32 %v3779, %v3780
          %v3782 = vsel %vm3772, %v3766, 0.0
          %v3783 = vsel %vm3772, %v3767, 0.0
          %v3784 = vadd.f32 %v3782, %v3783
          %v3785 = vrot.slane %v3784, 4
          %v3786 = vadd.f32 %v3784, %v3785
          %v3787 = vrot.slane %v3786, 2
          %v3788 = vadd.f32 %v3786, %v3787
          %v3789 = vrot.slane %v3788, 1
          %v3790 = vadd.f32 %v3788, %v3789
          %v3791 = vrcp.pop %v3790
          %v3792 = vmul.f32 %v3781, %v3791
          %vm3793 = vcmask 0
          %3794 = vst.msk [vmem:[#allocation4] sm:$0x1] %vm3793, %v3792
        $region92: #{model_forward.1} parent=83 // pred_fallthru
          _
        // Predicated region
        $region93: #{model_forward.1} parent=83 // pred_check
          %p3795 = pneg %p437
        $region94: #{model_forward.1} parent=83 // pred_check_branch
          %3797 = sbr.rel (%p3795) target = $region96
        $region95: #{model_forward.1} parent=83 // pred_region
          %s3799 = ssub.s32 16, 16
          %3800 = vsyncadd [#allocation5], %s3799
          %s3802 = sshll.u32 [#allocation4], 4
          %s3803 = int_to_ptr.vmem [resolvable:$true] %s3802
          %3805 = dma.vmem_to_hbm [thread:$0]  %s3803, 16, %s16, [#allocation5]
        $region96: #{model_forward.1} parent=83 // pred_fallthru
          _
        // Predicated region
        $region97: #{model_forward.1} parent=83 // pred_check
          %p3806 = pneg %p437
        $region98: #{model_forward.1} parent=83 // pred_check_branch
          %3808 = sbr.rel (%p3806) target = $region100
        $region99: #{model_forward.1} parent=83 // pred_region
          %3809 = dma.done [#allocation5], 16
        $region100: #{model_forward.1} parent=83 // pred_fallthru
          _
      $region84: #{model_forward.1} parent=5 // pred_fallthru
        _
      %p3810 = scmp.le.s32.totalorder 2, %s23
      // Predicated region
      $region101: #{model_forward.1} parent=5 // pred_check
        %p3811 = pneg %p3810
      $region102: #{model_forward.1} parent=5 // pred_check_branch
        %3813 = sbr.rel (%p3811) target = $region104
      $region103: #{model_forward.1} parent=5 // pred_region
        %s3814 = ssub.s32 %s23, 2
      $region104: #{model_forward.1} parent=5 // pred_fallthru
        _
    $region6: #{model_forward.1} parent=1 // loop_footer
      %s27 = sadd.s32 1, %s23
    $region7: #{model_forward.1} parent=1 // loop_footer_branch
      %22 = sbr.rel target = $region3
    $region8: #{model_forward.1} parent=1 // loop_exit
      _
    %3815 = vsyncpa [#allocation5], 1
    %s3816 = scalar_lea.sflag [#allocation5], 1
    %3817 = vsyncpa %s3816, 1

</llo_original>
